<compile_context>
chip_gen: v6e
topology: v6e:2x2x1
jax: 0.10.0
libtpu: 0.0.40
codegen_flags: <defaults>
</compile_context>

<pallas_src>
import functools

import jax
import jax.numpy as jnp
from jax.experimental import pallas as pl
from jax.experimental.pallas import tpu as pltpu

BN_EPS = 1e-5


# ---------------------------------------------------------------------------
# Pallas kernel: fused 3x3 "valid" conv + folded BatchNorm bias + ReLU.
# ---------------------------------------------------------------------------
def _conv3x3_kernel(x_ref, w_ref, b_ref, o_ref, *, img_w, cin, m_out, relu):
    """One (batch, cout-tile) grid block.

    x_ref : (1, S, Cin)   bf16  flattened NHWC image, S = H*W
    w_ref : (9*Cin, TN)   bf16  taps in (dy, dx, ci) order, BN folded in
    b_ref : (1, TN)       f32   BN-folded bias
    o_ref : (1, S, TN)    bf16  "input-width indexed" output: row m = i*W + j
                                holds the valid-conv output at (i, j); rows /
                                cols outside the valid region are zero or
                                don't-care and are never read by the next
                                layer's valid outputs.
    """
    s = x_ref.shape[1]
    tn = o_ref.shape[-1]

    # 9 accumulating matmuls over statically shifted VMEM views (no im2col).
    acc = jnp.zeros((m_out, tn), jnp.float32)
    for dy in range(3):
        for dx in range(3):
            off = dy * img_w + dx
            a = x_ref[0, pl.ds(off, m_out), :]                  # (m_out, Cin) bf16
            wk = w_ref[pl.ds((dy * 3 + dx) * cin, cin), :]      # (Cin, TN)   bf16
            acc = acc + jnp.dot(a, wk, preferred_element_type=jnp.float32)

    out = acc + b_ref[...]                 # fused bias/BN epilogue (f32)
    if relu:
        out = jnp.maximum(out, 0.0)
    o_ref[0, pl.ds(0, m_out), :] = out.astype(o_ref.dtype)
    # Zero the few tail rows this block never computes (kept deterministic).
    o_ref[0, pl.ds(m_out, s - m_out), :] = jnp.zeros((s - m_out, tn), o_ref.dtype)


def conv3x3_bn_relu(x, w9, bias, *, relu=True):
    """x: (N, H, W, Cin) bf16 whose top-left region is semantically valid.
    Returns (N, H, W, Cout) bf16 whose top-left (valid-2, valid-2) region is
    the conv+BN+ReLU output (same layout, so convs chain without HBM copies).
    """
    n, h, w, cin = x.shape
    cout = w9.shape[1]
    s = h * w
    m_out = (h - 2) * w - 2         # rows computable without reading past row S-1

    # Lane-dense Cout tiling: 256 fills the v6e/v7x 256-wide MXU, 128 suits the
    # v5e 128-wide MXU; small channel counts take the full Cout (no padding).
    if cout % 256 == 0:
        tn = 256
    elif cout % 128 == 0:
        tn = 128
    else:
        tn = cout

    x_flat = x.reshape(n, s, cin)   # metadata-only reshape, no HBM copy

    kernel = functools.partial(_conv3x3_kernel, img_w=w, cin=cin,
                               m_out=m_out, relu=relu)
    y_flat = pl.pallas_call(
        kernel,
        out_shape=jax.ShapeDtypeStruct((n, s, cout), jnp.bfloat16),
        grid_spec=pltpu.PrefetchScalarGridSpec(
            num_scalar_prefetch=0,
            grid=(n, cout // tn),
            in_specs=[
                pl.BlockSpec((1, s, cin), lambda b, c: (b, 0, 0)),
                pl.BlockSpec((9 * cin, tn), lambda b, c: (0, c)),
                pl.BlockSpec((1, tn), lambda b, c: (0, c)),
            ],
            out_specs=pl.BlockSpec((1, s, tn), lambda b, c: (b, 0, c)),
        ),
        compiler_params=pltpu.CompilerParams(
            dimension_semantics=("parallel", "parallel"),
            # Whole-image VMEM blocks; budget fits v7x's 64 MiB at UNet-scale
            # layers (~2x4.5 MiB in + 2x4.5 MiB out double-buffered + ~9 MiB
            # f32 accumulator for the largest 186x186x64 layer).
            # TODO(synk): for much larger images, tile M with halo DMA
            # (manual make_async_copy) instead of whole-image blocks.
            vmem_limit_bytes=64 * 1024 * 1024),
    )(x_flat, w9, bias)
    return y_flat.reshape(n, h, w, cout)


# ---------------------------------------------------------------------------
# EncoderBlock forward (eval mode) and one-time parameter preparation.
# ---------------------------------------------------------------------------
def prepare_params(raw):
    """One-time weight prep hoisted out of the forward pass: fold eval-mode
    BatchNorm into the conv, flatten taps to (9*Cin, Cout) in (dy,dx,ci)
    order, cast weights to bf16 (bias stays f32 for the f32 epilogue)."""
    def fold(wkey, bkey, bnkey):
        w, b = raw[wkey], raw[bkey]
        gamma, beta, mean, var = raw[bnkey]
        scale = gamma * jax.lax.rsqrt(var + BN_EPS)
        cout, cin = w.shape[0], w.shape[1]
        wm = jnp.transpose(w, (2, 3, 1, 0)).reshape(9 * cin, cout) * scale[None, :]
        bias = (b * scale + beta - mean * scale).reshape(1, cout)
        return wm.astype(jnp.bfloat16), bias.astype(jnp.float32)

    w1, b1 = fold("conv1_w", "conv1_b", "bn1")
    w2, b2 = fold("conv2_w", "conv2_b", "bn2")
    return {"w1": w1, "b1": b1, "w2": w2, "b2": b2}


def encoder_block_fwd(params, x_nchw, dropout=False):
    """Matches EncoderBlock.forward in eval mode. Input/output are NCHW f32."""
    x = jnp.transpose(x_nchw, (0, 2, 3, 1)).astype(jnp.bfloat16)   # NCHW -> NHWC
    n, h, w, _ = x.shape

    y = conv3x3_bn_relu(x, params["w1"], params["b1"], relu=True)
    y = conv3x3_bn_relu(y, params["w2"], params["b2"], relu=True)

    # TODO(synk): training-mode BatchNorm (batch stats) and stochastic Dropout
    # are not implemented; eval-mode BN is folded and Dropout is the identity.
    del dropout

    # Crop to the valid region of the two chained 'valid' convs, then
    # MaxPool2d(kernel_size=2, stride=2).  Glue: <1% of FLOPs.
    vh, vw = h - 4, w - 4
    y = y[:, :vh, :vw, :]
    ph, pw = vh // 2, vw // 2
    y = y[:, :2 * ph, :2 * pw, :].reshape(n, ph, 2, pw, 2, y.shape[-1])
    y = jnp.max(y, axis=(2, 4))
    return jnp.transpose(y, (0, 3, 1, 2)).astype(jnp.float32)      # NHWC -> NCHW


# ---------------------------------------------------------------------------
# Deterministic raw parameters (shapes per the PyTorch __init__) + reference.
# ---------------------------------------------------------------------------
def init_raw_params(key, in_channel, out_channel):
    ks = list(jax.random.split(key, 12))

    def conv(co, ci):
        fan_in = ci * 9
        w = jax.random.normal(ks.pop(), (co, ci, 3, 3), jnp.float32) * (2.0 / fan_in) ** 0.5
        b = 0.05 * jax.random.normal(ks.pop(), (co,), jnp.float32)
        return w, b

    def bn(c):
        gamma = 1.0 + 0.1 * jax.random.normal(ks.pop(), (c,), jnp.float32)
        beta = 0.1 * jax.random.normal(ks.pop(), (c,), jnp.float32)
        mean = 0.2 * jax.random.normal(ks.pop(), (c,), jnp.float32)
        var = 1.0 + 0.2 * jnp.abs(jax.random.normal(ks.pop(), (c,), jnp.float32))
        return (gamma, beta, mean, var)

    w1, b1 = conv(out_channel, in_channel)
    bn1 = bn(out_channel)
    w2, b2 = conv(out_channel, out_channel)
    bn2 = bn(out_channel)
    return {"conv1_w": w1, "conv1_b": b1, "bn1": bn1,
            "conv2_w": w2, "conv2_b": b2, "bn2": bn2}


def reference_encoder_block(raw, x_nchw):
    """Pure-XLA eval-mode reference (f32 math on bf16-rounded operands)."""
    def conv_bn_relu(x, w, b, bn):
        xq = x.astype(jnp.bfloat16).astype(jnp.float32)
        wq = w.astype(jnp.bfloat16).astype(jnp.float32)
        y = jax.lax.conv_general_dilated(
            xq, wq, window_strides=(1, 1), padding="VALID",
            dimension_numbers=("NCHW", "OIHW", "NCHW"))
        gamma, beta, mean, var = bn
        scale = gamma / jnp.sqrt(var + BN_EPS)
        y = y * scale[None, :, None, None] \
            + (b * scale + beta - mean * scale)[None, :, None, None]
        return jnp.maximum(y, 0.0)

    y = conv_bn_relu(x_nchw, raw["conv1_w"], raw["conv1_b"], raw["bn1"])
    y = conv_bn_relu(y, raw["conv2_w"], raw["conv2_b"], raw["bn2"])
    n, c, h, w = y.shape
    y = y[:, :, : h // 2 * 2, : w // 2 * 2].reshape(n, c, h // 2, 2, w // 2, 2)
    return jnp.max(y, axis=(3, 5))


if __name__ == "__main__":
    # Small, module-consistent shapes: EncoderBlock(in_channel=8, out_channel=16)
    # on a (2, 8, 16, 16) NCHW input -> (2, 16, 6, 6)   (16 ->14 ->12 ->pool 6).
    N, CIN, COUT, H, W = 2, 8, 16, 16, 16
    key = jax.random.PRNGKey(0)
    kx, kp = jax.random.split(key)

    x = jax.random.normal(kx, (N, CIN, H, W), jnp.float32)
    raw = init_raw_params(kp, CIN, COUT)
    params = prepare_params(raw)            # one-time weight prep (hoisted)

    fwd = jax.jit(encoder_block_fwd)
    y = jax.block_until_ready(fwd(params, x))

    assert y.shape == (N, COUT, (H - 4) // 2, (W - 4) // 2), y.shape
    assert bool(jnp.all(jnp.isfinite(y)))

    # Validate against a pure-XLA reference (bf16 MXU operands, f32 accum ->
    # small, tolerance-bounded deviation from the f32 reference).
    y_ref = jax.block_until_ready(jax.jit(reference_encoder_block)(raw, x))
    assert bool(jnp.allclose(y, y_ref, rtol=5e-2, atol=5e-2)), (
        "max |diff| = %f" % float(jnp.max(jnp.abs(y - y_ref))))

    print("KERNEL_OK")
</pallas_src>

<mosaic_0001>
module attributes {stable_mosaic.version = 11 : i64} {
  func.func @_conv3x3_kernel(%arg0: i32, %arg1: i32, %arg2: memref<1x256x8xbf16, #tpu.memory_space<vmem>>, %arg3: memref<72x16xbf16, #tpu.memory_space<vmem>>, %arg4: memref<1x16xf32, #tpu.memory_space<vmem>>, %arg5: memref<1x256x16xbf16, #tpu.memory_space<vmem>>) attributes {dimension_semantics = [#tpu.dimension_semantics<parallel>, #tpu.dimension_semantics<parallel>], iteration_bounds = array<i64: 2, 1>, scalar_prefetch = 0 : i64, scratch_operands = 0 : i64, tpu.core_type = #tpu.core_type<tc>, window_params = [{transform_indices = @transform_0, window_bounds = array<i64: 1, 256, 8>}, {transform_indices = @transform_1, window_bounds = array<i64: 72, 16>}, {transform_indices = @transform_2, window_bounds = array<i64: 1, 16>}, {transform_indices = @transform_3, window_bounds = array<i64: 1, 256, 16>}]} {
    %cst = arith.constant 0.000000e+00 : f32
    %0 = vector.broadcast %cst : f32 to vector<222x16xf32>
    %c0 = arith.constant 0 : index
    %c0_0 = arith.constant 0 : index
    %c0_1 = arith.constant 0 : index
    %1 = vector.load %arg2[%c0, %c0_0, %c0_1] : memref<1x256x8xbf16, #tpu.memory_space<vmem>>, vector<1x222x8xbf16>
    %2 = vector.shape_cast %1 : vector<1x222x8xbf16> to vector<222x8xbf16>
    %c0_2 = arith.constant 0 : index
    %c0_3 = arith.constant 0 : index
    %3 = vector.load %arg3[%c0_2, %c0_3] : memref<72x16xbf16, #tpu.memory_space<vmem>>, vector<8x16xbf16>
    %cst_4 = arith.constant dense<0.000000e+00> : vector<222x16xf32>
    %4 = tpu.matmul %2, %3, %cst_4 {dimension_numbers = #tpu.dot_dimension_numbers<[1], [0], [0], [1], [0, 0, 1, 1], [], []>} : vector<222x8xbf16>, vector<8x16xbf16>, vector<222x16xf32> -> vector<222x16xf32>
    %5 = arith.addf %0, %4 : vector<222x16xf32>
    %c0_5 = arith.constant 0 : index
    %c1 = arith.constant 1 : index
    %c0_6 = arith.constant 0 : index
    %6 = vector.load %arg2[%c0_5, %c1, %c0_6] : memref<1x256x8xbf16, #tpu.memory_space<vmem>>, vector<1x222x8xbf16>
    %7 = vector.shape_cast %6 : vector<1x222x8xbf16> to vector<222x8xbf16>
    %c8 = arith.constant 8 : index
    %c0_7 = arith.constant 0 : index
    %8 = vector.load %arg3[%c8, %c0_7] : memref<72x16xbf16, #tpu.memory_space<vmem>>, vector<8x16xbf16>
    %cst_8 = arith.constant dense<0.000000e+00> : vector<222x16xf32>
    %9 = tpu.matmul %7, %8, %cst_8 {dimension_numbers = #tpu.dot_dimension_numbers<[1], [0], [0], [1], [0, 0, 1, 1], [], []>} : vector<222x8xbf16>, vector<8x16xbf16>, vector<222x16xf32> -> vector<222x16xf32>
    %10 = arith.addf %5, %9 : vector<222x16xf32>
    %c0_9 = arith.constant 0 : index
    %c2 = arith.constant 2 : index
    %c0_10 = arith.constant 0 : index
    %11 = vector.load %arg2[%c0_9, %c2, %c0_10] : memref<1x256x8xbf16, #tpu.memory_space<vmem>>, vector<1x222x8xbf16>
    %12 = vector.shape_cast %11 : vector<1x222x8xbf16> to vector<222x8xbf16>
    %c16 = arith.constant 16 : index
    %c0_11 = arith.constant 0 : index
    %13 = vector.load %arg3[%c16, %c0_11] : memref<72x16xbf16, #tpu.memory_space<vmem>>, vector<8x16xbf16>
    %cst_12 = arith.constant dense<0.000000e+00> : vector<222x16xf32>
    %14 = tpu.matmul %12, %13, %cst_12 {dimension_numbers = #tpu.dot_dimension_numbers<[1], [0], [0], [1], [0, 0, 1, 1], [], []>} : vector<222x8xbf16>, vector<8x16xbf16>, vector<222x16xf32> -> vector<222x16xf32>
    %15 = arith.addf %10, %14 : vector<222x16xf32>
    %c0_13 = arith.constant 0 : index
    %c16_14 = arith.constant 16 : index
    %c0_15 = arith.constant 0 : index
    %16 = vector.load %arg2[%c0_13, %c16_14, %c0_15] : memref<1x256x8xbf16, #tpu.memory_space<vmem>>, vector<1x222x8xbf16>
    %17 = vector.shape_cast %16 : vector<1x222x8xbf16> to vector<222x8xbf16>
    %c24 = arith.constant 24 : index
    %c0_16 = arith.constant 0 : index
    %18 = vector.load %arg3[%c24, %c0_16] : memref<72x16xbf16, #tpu.memory_space<vmem>>, vector<8x16xbf16>
    %cst_17 = arith.constant dense<0.000000e+00> : vector<222x16xf32>
    %19 = tpu.matmul %17, %18, %cst_17 {dimension_numbers = #tpu.dot_dimension_numbers<[1], [0], [0], [1], [0, 0, 1, 1], [], []>} : vector<222x8xbf16>, vector<8x16xbf16>, vector<222x16xf32> -> vector<222x16xf32>
    %20 = arith.addf %15, %19 : vector<222x16xf32>
    %c0_18 = arith.constant 0 : index
    %c17 = arith.constant 17 : index
    %c0_19 = arith.constant 0 : index
    %21 = vector.load %arg2[%c0_18, %c17, %c0_19] : memref<1x256x8xbf16, #tpu.memory_space<vmem>>, vector<1x222x8xbf16>
    %22 = vector.shape_cast %21 : vector<1x222x8xbf16> to vector<222x8xbf16>
    %c32 = arith.constant 32 : index
    %c0_20 = arith.constant 0 : index
    %23 = vector.load %arg3[%c32, %c0_20] : memref<72x16xbf16, #tpu.memory_space<vmem>>, vector<8x16xbf16>
    %cst_21 = arith.constant dense<0.000000e+00> : vector<222x16xf32>
    %24 = tpu.matmul %22, %23, %cst_21 {dimension_numbers = #tpu.dot_dimension_numbers<[1], [0], [0], [1], [0, 0, 1, 1], [], []>} : vector<222x8xbf16>, vector<8x16xbf16>, vector<222x16xf32> -> vector<222x16xf32>
    %25 = arith.addf %20, %24 : vector<222x16xf32>
    %c0_22 = arith.constant 0 : index
    %c18 = arith.constant 18 : index
    %c0_23 = arith.constant 0 : index
    %26 = vector.load %arg2[%c0_22, %c18, %c0_23] : memref<1x256x8xbf16, #tpu.memory_space<vmem>>, vector<1x222x8xbf16>
    %27 = vector.shape_cast %26 : vector<1x222x8xbf16> to vector<222x8xbf16>
    %c40 = arith.constant 40 : index
    %c0_24 = arith.constant 0 : index
    %28 = vector.load %arg3[%c40, %c0_24] : memref<72x16xbf16, #tpu.memory_space<vmem>>, vector<8x16xbf16>
    %cst_25 = arith.constant dense<0.000000e+00> : vector<222x16xf32>
    %29 = tpu.matmul %27, %28, %cst_25 {dimension_numbers = #tpu.dot_dimension_numbers<[1], [0], [0], [1], [0, 0, 1, 1], [], []>} : vector<222x8xbf16>, vector<8x16xbf16>, vector<222x16xf32> -> vector<222x16xf32>
    %30 = arith.addf %25, %29 : vector<222x16xf32>
    %c0_26 = arith.constant 0 : index
    %c32_27 = arith.constant 32 : index
    %c0_28 = arith.constant 0 : index
    %31 = vector.load %arg2[%c0_26, %c32_27, %c0_28] : memref<1x256x8xbf16, #tpu.memory_space<vmem>>, vector<1x222x8xbf16>
    %32 = vector.shape_cast %31 : vector<1x222x8xbf16> to vector<222x8xbf16>
    %c48 = arith.constant 48 : index
    %c0_29 = arith.constant 0 : index
    %33 = vector.load %arg3[%c48, %c0_29] : memref<72x16xbf16, #tpu.memory_space<vmem>>, vector<8x16xbf16>
    %cst_30 = arith.constant dense<0.000000e+00> : vector<222x16xf32>
    %34 = tpu.matmul %32, %33, %cst_30 {dimension_numbers = #tpu.dot_dimension_numbers<[1], [0], [0], [1], [0, 0, 1, 1], [], []>} : vector<222x8xbf16>, vector<8x16xbf16>, vector<222x16xf32> -> vector<222x16xf32>
    %35 = arith.addf %30, %34 : vector<222x16xf32>
    %c0_31 = arith.constant 0 : index
    %c33 = arith.constant 33 : index
    %c0_32 = arith.constant 0 : index
    %36 = vector.load %arg2[%c0_31, %c33, %c0_32] : memref<1x256x8xbf16, #tpu.memory_space<vmem>>, vector<1x222x8xbf16>
    %37 = vector.shape_cast %36 : vector<1x222x8xbf16> to vector<222x8xbf16>
    %c56 = arith.constant 56 : index
    %c0_33 = arith.constant 0 : index
    %38 = vector.load %arg3[%c56, %c0_33] : memref<72x16xbf16, #tpu.memory_space<vmem>>, vector<8x16xbf16>
    %cst_34 = arith.constant dense<0.000000e+00> : vector<222x16xf32>
    %39 = tpu.matmul %37, %38, %cst_34 {dimension_numbers = #tpu.dot_dimension_numbers<[1], [0], [0], [1], [0, 0, 1, 1], [], []>} : vector<222x8xbf16>, vector<8x16xbf16>, vector<222x16xf32> -> vector<222x16xf32>
    %40 = arith.addf %35, %39 : vector<222x16xf32>
    %c0_35 = arith.constant 0 : index
    %c34 = arith.constant 34 : index
    %c0_36 = arith.constant 0 : index
    %41 = vector.load %arg2[%c0_35, %c34, %c0_36] : memref<1x256x8xbf16, #tpu.memory_space<vmem>>, vector<1x222x8xbf16>
    %42 = vector.shape_cast %41 : vector<1x222x8xbf16> to vector<222x8xbf16>
    %c64 = arith.constant 64 : index
    %c0_37 = arith.constant 0 : index
    %43 = vector.load %arg3[%c64, %c0_37] : memref<72x16xbf16, #tpu.memory_space<vmem>>, vector<8x16xbf16>
    %cst_38 = arith.constant dense<0.000000e+00> : vector<222x16xf32>
    %44 = tpu.matmul %42, %43, %cst_38 {dimension_numbers = #tpu.dot_dimension_numbers<[1], [0], [0], [1], [0, 0, 1, 1], [], []>} : vector<222x8xbf16>, vector<8x16xbf16>, vector<222x16xf32> -> vector<222x16xf32>
    %45 = arith.addf %40, %44 : vector<222x16xf32>
    %c0_39 = arith.constant 0 : index
    %c0_40 = arith.constant 0 : index
    %46 = vector.load %arg4[%c0_39, %c0_40] : memref<1x16xf32, #tpu.memory_space<vmem>>, vector<1x16xf32>
    %47 = vector.broadcast %46 : vector<1x16xf32> to vector<222x16xf32>
    %48 = arith.addf %45, %47 : vector<222x16xf32>
    %cst_41 = arith.constant 0.000000e+00 : f32
    %49 = vector.broadcast %cst_41 : f32 to vector<222x16xf32>
    %50 = arith.maximumf %48, %49 : vector<222x16xf32>
    %51 = arith.truncf %50 : vector<222x16xf32> to vector<222x16xbf16>
    %c0_42 = arith.constant 0 : index
    %c0_43 = arith.constant 0 : index
    %c0_44 = arith.constant 0 : index
    %52 = vector.load %arg5[%c0_42, %c0_43, %c0_44] : memref<1x256x16xbf16, #tpu.memory_space<vmem>>, vector<1x222x16xbf16>
    %53 = vector.shape_cast %52 : vector<1x222x16xbf16> to vector<222x16xbf16>
    %54 = vector.shape_cast %51 : vector<222x16xbf16> to vector<1x222x16xbf16>
    tpu.vector_store %arg5[%c0_42, %c0_43, %c0_44], %54 {strides = array<i32>} : memref<1x256x16xbf16, #tpu.memory_space<vmem>>, vector<1x222x16xbf16>,
    %cst_45 = arith.constant 0.000000e+00 : bf16
    %55 = vector.broadcast %cst_45 : bf16 to vector<34x16xbf16>
    %c0_46 = arith.constant 0 : index
    %c222 = arith.constant 222 : index
    %c0_47 = arith.constant 0 : index
    %56 = vector.load %arg5[%c0_46, %c222, %c0_47] : memref<1x256x16xbf16, #tpu.memory_space<vmem>>, vector<1x34x16xbf16>
    %57 = vector.shape_cast %56 : vector<1x34x16xbf16> to vector<34x16xbf16>
    %58 = vector.shape_cast %55 : vector<34x16xbf16> to vector<1x34x16xbf16>
    tpu.vector_store %arg5[%c0_46, %c222, %c0_47], %58 {strides = array<i32>} : memref<1x256x16xbf16, #tpu.memory_space<vmem>>, vector<1x34x16xbf16>,
    return
  }
  func.func @transform_0(%arg0: i32, %arg1: i32) -> (i32, i32, i32) {
    %c0_i32 = arith.constant 0 : i32
    %c0_i32_0 = arith.constant 0 : i32
    %c0_i32_1 = arith.constant 0 : i32
    return %arg0, %c0_i32, %c0_i32_0 : i32, i32, i32
  }
  func.func @transform_1(%arg0: i32, %arg1: i32) -> (i32, i32) {
    %c0_i32 = arith.constant 0 : i32
    %c0_i32_0 = arith.constant 0 : i32
    return %c0_i32, %arg1 : i32, i32
  }
  func.func @transform_2(%arg0: i32, %arg1: i32) -> (i32, i32) {
    %c0_i32 = arith.constant 0 : i32
    %c0_i32_0 = arith.constant 0 : i32
    return %c0_i32, %arg1 : i32, i32
  }
  func.func @transform_3(%arg0: i32, %arg1: i32) -> (i32, i32, i32) {
    %c0_i32 = arith.constant 0 : i32
    %c0_i32_0 = arith.constant 0 : i32
    return %arg0, %c0_i32, %arg1 : i32, i32, i32
  }
}

module attributes {stable_mosaic.version = 11 : i64} {
  func.func @_conv3x3_kernel(%arg0: i32, %arg1: i32, %arg2: memref<1x256x16xbf16, #tpu.memory_space<vmem>>, %arg3: memref<144x16xbf16, #tpu.memory_space<vmem>>, %arg4: memref<1x16xf32, #tpu.memory_space<vmem>>, %arg5: memref<1x256x16xbf16, #tpu.memory_space<vmem>>) attributes {dimension_semantics = [#tpu.dimension_semantics<parallel>, #tpu.dimension_semantics<parallel>], iteration_bounds = array<i64: 2, 1>, scalar_prefetch = 0 : i64, scratch_operands = 0 : i64, tpu.core_type = #tpu.core_type<tc>, window_params = [{transform_indices = @transform_0, window_bounds = array<i64: 1, 256, 16>}, {transform_indices = @transform_1, window_bounds = array<i64: 144, 16>}, {transform_indices = @transform_2, window_bounds = array<i64: 1, 16>}, {transform_indices = @transform_3, window_bounds = array<i64: 1, 256, 16>}]} {
    %cst = arith.constant 0.000000e+00 : f32
    %0 = vector.broadcast %cst : f32 to vector<222x16xf32>
    %c0 = arith.constant 0 : index
    %c0_0 = arith.constant 0 : index
    %c0_1 = arith.constant 0 : index
    %1 = vector.load %arg2[%c0, %c0_0, %c0_1] : memref<1x256x16xbf16, #tpu.memory_space<vmem>>, vector<1x222x16xbf16>
    %2 = vector.shape_cast %1 : vector<1x222x16xbf16> to vector<222x16xbf16>
    %c0_2 = arith.constant 0 : index
    %c0_3 = arith.constant 0 : index
    %3 = vector.load %arg3[%c0_2, %c0_3] : memref<144x16xbf16, #tpu.memory_space<vmem>>, vector<16x16xbf16>
    %cst_4 = arith.constant dense<0.000000e+00> : vector<222x16xf32>
    %4 = tpu.matmul %2, %3, %cst_4 {dimension_numbers = #tpu.dot_dimension_numbers<[1], [0], [0], [1], [0, 0, 1, 1], [], []>} : vector<222x16xbf16>, vector<16x16xbf16>, vector<222x16xf32> -> vector<222x16xf32>
    %5 = arith.addf %0, %4 : vector<222x16xf32>
    %c0_5 = arith.constant 0 : index
    %c1 = arith.constant 1 : index
    %c0_6 = arith.constant 0 : index
    %6 = vector.load %arg2[%c0_5, %c1, %c0_6] : memref<1x256x16xbf16, #tpu.memory_space<vmem>>, vector<1x222x16xbf16>
    %7 = vector.shape_cast %6 : vector<1x222x16xbf16> to vector<222x16xbf16>
    %c16 = arith.constant 16 : index
    %c0_7 = arith.constant 0 : index
    %8 = vector.load %arg3[%c16, %c0_7] : memref<144x16xbf16, #tpu.memory_space<vmem>>, vector<16x16xbf16>
    %cst_8 = arith.constant dense<0.000000e+00> : vector<222x16xf32>
    %9 = tpu.matmul %7, %8, %cst_8 {dimension_numbers = #tpu.dot_dimension_numbers<[1], [0], [0], [1], [0, 0, 1, 1], [], []>} : vector<222x16xbf16>, vector<16x16xbf16>, vector<222x16xf32> -> vector<222x16xf32>
    %10 = arith.addf %5, %9 : vector<222x16xf32>
    %c0_9 = arith.constant 0 : index
    %c2 = arith.constant 2 : index
    %c0_10 = arith.constant 0 : index
    %11 = vector.load %arg2[%c0_9, %c2, %c0_10] : memref<1x256x16xbf16, #tpu.memory_space<vmem>>, vector<1x222x16xbf16>
    %12 = vector.shape_cast %11 : vector<1x222x16xbf16> to vector<222x16xbf16>
    %c32 = arith.constant 32 : index
    %c0_11 = arith.constant 0 : index
    %13 = vector.load %arg3[%c32, %c0_11] : memref<144x16xbf16, #tpu.memory_space<vmem>>, vector<16x16xbf16>
    %cst_12 = arith.constant dense<0.000000e+00> : vector<222x16xf32>
    %14 = tpu.matmul %12, %13, %cst_12 {dimension_numbers = #tpu.dot_dimension_numbers<[1], [0], [0], [1], [0, 0, 1, 1], [], []>} : vector<222x16xbf16>, vector<16x16xbf16>, vector<222x16xf32> -> vector<222x16xf32>
    %15 = arith.addf %10, %14 : vector<222x16xf32>
    %c0_13 = arith.constant 0 : index
    %c16_14 = arith.constant 16 : index
    %c0_15 = arith.constant 0 : index
    %16 = vector.load %arg2[%c0_13, %c16_14, %c0_15] : memref<1x256x16xbf16, #tpu.memory_space<vmem>>, vector<1x222x16xbf16>
    %17 = vector.shape_cast %16 : vector<1x222x16xbf16> to vector<222x16xbf16>
    %c48 = arith.constant 48 : index
    %c0_16 = arith.constant 0 : index
    %18 = vector.load %arg3[%c48, %c0_16] : memref<144x16xbf16, #tpu.memory_space<vmem>>, vector<16x16xbf16>
    %cst_17 = arith.constant dense<0.000000e+00> : vector<222x16xf32>
    %19 = tpu.matmul %17, %18, %cst_17 {dimension_numbers = #tpu.dot_dimension_numbers<[1], [0], [0], [1], [0, 0, 1, 1], [], []>} : vector<222x16xbf16>, vector<16x16xbf16>, vector<222x16xf32> -> vector<222x16xf32>
    %20 = arith.addf %15, %19 : vector<222x16xf32>
    %c0_18 = arith.constant 0 : index
    %c17 = arith.constant 17 : index
    %c0_19 = arith.constant 0 : index
    %21 = vector.load %arg2[%c0_18, %c17, %c0_19] : memref<1x256x16xbf16, #tpu.memory_space<vmem>>, vector<1x222x16xbf16>
    %22 = vector.shape_cast %21 : vector<1x222x16xbf16> to vector<222x16xbf16>
    %c64 = arith.constant 64 : index
    %c0_20 = arith.constant 0 : index
    %23 = vector.load %arg3[%c64, %c0_20] : memref<144x16xbf16, #tpu.memory_space<vmem>>, vector<16x16xbf16>
    %cst_21 = arith.constant dense<0.000000e+00> : vector<222x16xf32>
    %24 = tpu.matmul %22, %23, %cst_21 {dimension_numbers = #tpu.dot_dimension_numbers<[1], [0], [0], [1], [0, 0, 1, 1], [], []>} : vector<222x16xbf16>, vector<16x16xbf16>, vector<222x16xf32> -> vector<222x16xf32>
    %25 = arith.addf %20, %24 : vector<222x16xf32>
    %c0_22 = arith.constant 0 : index
    %c18 = arith.constant 18 : index
    %c0_23 = arith.constant 0 : index
    %26 = vector.load %arg2[%c0_22, %c18, %c0_23] : memref<1x256x16xbf16, #tpu.memory_space<vmem>>, vector<1x222x16xbf16>
    %27 = vector.shape_cast %26 : vector<1x222x16xbf16> to vector<222x16xbf16>
    %c80 = arith.constant 80 : index
    %c0_24 = arith.constant 0 : index
    %28 = vector.load %arg3[%c80, %c0_24] : memref<144x16xbf16, #tpu.memory_space<vmem>>, vector<16x16xbf16>
    %cst_25 = arith.constant dense<0.000000e+00> : vector<222x16xf32>
    %29 = tpu.matmul %27, %28, %cst_25 {dimension_numbers = #tpu.dot_dimension_numbers<[1], [0], [0], [1], [0, 0, 1, 1], [], []>} : vector<222x16xbf16>, vector<16x16xbf16>, vector<222x16xf32> -> vector<222x16xf32>
    %30 = arith.addf %25, %29 : vector<222x16xf32>
    %c0_26 = arith.constant 0 : index
    %c32_27 = arith.constant 32 : index
    %c0_28 = arith.constant 0 : index
    %31 = vector.load %arg2[%c0_26, %c32_27, %c0_28] : memref<1x256x16xbf16, #tpu.memory_space<vmem>>, vector<1x222x16xbf16>
    %32 = vector.shape_cast %31 : vector<1x222x16xbf16> to vector<222x16xbf16>
    %c96 = arith.constant 96 : index
    %c0_29 = arith.constant 0 : index
    %33 = vector.load %arg3[%c96, %c0_29] : memref<144x16xbf16, #tpu.memory_space<vmem>>, vector<16x16xbf16>
    %cst_30 = arith.constant dense<0.000000e+00> : vector<222x16xf32>
    %34 = tpu.matmul %32, %33, %cst_30 {dimension_numbers = #tpu.dot_dimension_numbers<[1], [0], [0], [1], [0, 0, 1, 1], [], []>} : vector<222x16xbf16>, vector<16x16xbf16>, vector<222x16xf32> -> vector<222x16xf32>
    %35 = arith.addf %30, %34 : vector<222x16xf32>
    %c0_31 = arith.constant 0 : index
    %c33 = arith.constant 33 : index
    %c0_32 = arith.constant 0 : index
    %36 = vector.load %arg2[%c0_31, %c33, %c0_32] : memref<1x256x16xbf16, #tpu.memory_space<vmem>>, vector<1x222x16xbf16>
    %37 = vector.shape_cast %36 : vector<1x222x16xbf16> to vector<222x16xbf16>
    %c112 = arith.constant 112 : index
    %c0_33 = arith.constant 0 : index
    %38 = vector.load %arg3[%c112, %c0_33] : memref<144x16xbf16, #tpu.memory_space<vmem>>, vector<16x16xbf16>
    %cst_34 = arith.constant dense<0.000000e+00> : vector<222x16xf32>
    %39 = tpu.matmul %37, %38, %cst_34 {dimension_numbers = #tpu.dot_dimension_numbers<[1], [0], [0], [1], [0, 0, 1, 1], [], []>} : vector<222x16xbf16>, vector<16x16xbf16>, vector<222x16xf32> -> vector<222x16xf32>
    %40 = arith.addf %35, %39 : vector<222x16xf32>
    %c0_35 = arith.constant 0 : index
    %c34 = arith.constant 34 : index
    %c0_36 = arith.constant 0 : index
    %41 = vector.load %arg2[%c0_35, %c34, %c0_36] : memref<1x256x16xbf16, #tpu.memory_space<vmem>>, vector<1x222x16xbf16>
    %42 = vector.shape_cast %41 : vector<1x222x16xbf16> to vector<222x16xbf16>
    %c128 = arith.constant 128 : index
    %c0_37 = arith.constant 0 : index
    %43 = vector.load %arg3[%c128, %c0_37] : memref<144x16xbf16, #tpu.memory_space<vmem>>, vector<16x16xbf16>
    %cst_38 = arith.constant dense<0.000000e+00> : vector<222x16xf32>
    %44 = tpu.matmul %42, %43, %cst_38 {dimension_numbers = #tpu.dot_dimension_numbers<[1], [0], [0], [1], [0, 0, 1, 1], [], []>} : vector<222x16xbf16>, vector<16x16xbf16>, vector<222x16xf32> -> vector<222x16xf32>
    %45 = arith.addf %40, %44 : vector<222x16xf32>
    %c0_39 = arith.constant 0 : index
    %c0_40 = arith.constant 0 : index
    %46 = vector.load %arg4[%c0_39, %c0_40] : memref<1x16xf32, #tpu.memory_space<vmem>>, vector<1x16xf32>
    %47 = vector.broadcast %46 : vector<1x16xf32> to vector<222x16xf32>
    %48 = arith.addf %45, %47 : vector<222x16xf32>
    %cst_41 = arith.constant 0.000000e+00 : f32
    %49 = vector.broadcast %cst_41 : f32 to vector<222x16xf32>
    %50 = arith.maximumf %48, %49 : vector<222x16xf32>
    %51 = arith.truncf %50 : vector<222x16xf32> to vector<222x16xbf16>
    %c0_42 = arith.constant 0 : index
    %c0_43 = arith.constant 0 : index
    %c0_44 = arith.constant 0 : index
    %52 = vector.load %arg5[%c0_42, %c0_43, %c0_44] : memref<1x256x16xbf16, #tpu.memory_space<vmem>>, vector<1x222x16xbf16>
    %53 = vector.shape_cast %52 : vector<1x222x16xbf16> to vector<222x16xbf16>
    %54 = vector.shape_cast %51 : vector<222x16xbf16> to vector<1x222x16xbf16>
    tpu.vector_store %arg5[%c0_42, %c0_43, %c0_44], %54 {strides = array<i32>} : memref<1x256x16xbf16, #tpu.memory_space<vmem>>, vector<1x222x16xbf16>,
    %cst_45 = arith.constant 0.000000e+00 : bf16
    %55 = vector.broadcast %cst_45 : bf16 to vector<34x16xbf16>
    %c0_46 = arith.constant 0 : index
    %c222 = arith.constant 222 : index
    %c0_47 = arith.constant 0 : index
    %56 = vector.load %arg5[%c0_46, %c222, %c0_47] : memref<1x256x16xbf16, #tpu.memory_space<vmem>>, vector<1x34x16xbf16>
    %57 = vector.shape_cast %56 : vector<1x34x16xbf16> to vector<34x16xbf16>
    %58 = vector.shape_cast %55 : vector<34x16xbf16> to vector<1x34x16xbf16>
    tpu.vector_store %arg5[%c0_46, %c222, %c0_47], %58 {strides = array<i32>} : memref<1x256x16xbf16, #tpu.memory_space<vmem>>, vector<1x34x16xbf16>,
    return
  }
  func.func @transform_0(%arg0: i32, %arg1: i32) -> (i32, i32, i32) {
    %c0_i32 = arith.constant 0 : i32
    %c0_i32_0 = arith.constant 0 : i32
    %c0_i32_1 = arith.constant 0 : i32
    return %arg0, %c0_i32, %c0_i32_0 : i32, i32, i32
  }
  func.func @transform_1(%arg0: i32, %arg1: i32) -> (i32, i32) {
    %c0_i32 = arith.constant 0 : i32
    %c0_i32_0 = arith.constant 0 : i32
    return %c0_i32, %arg1 : i32, i32
  }
  func.func @transform_2(%arg0: i32, %arg1: i32) -> (i32, i32) {
    %c0_i32 = arith.constant 0 : i32
    %c0_i32_0 = arith.constant 0 : i32
    return %c0_i32, %arg1 : i32, i32
  }
  func.func @transform_3(%arg0: i32, %arg1: i32) -> (i32, i32, i32) {
    %c0_i32 = arith.constant 0 : i32
    %c0_i32_0 = arith.constant 0 : i32
    return %arg0, %c0_i32, %arg1 : i32, i32, i32
  }
}

</mosaic_0001>

<llo_original>
// kernel: encoder_block_fwd.2
$region0: #{encoder_block_fwd.2}
  #allocation0 [shape = 'u32[]', space=smem, size = 0x4, offset = 0x4, fixed_abs, tag = 'smem constant byte address 0x4 - core index']
  #allocation1 [shape = 'u32[144,128]{1,0:T(1,128)}', space=vmem, size = 0x12000, scoped, tag = 'internal scratch']
  %s0 = inlined_call_operand.vmem [shape: bf16[2,256,8], index: 0, kind: input, shape index: {}]
  %s1 = inlined_call_operand.vmem [shape: bf16[72,16], index: 1, kind: input, shape index: {}]
  %s2 = inlined_call_operand.vmem [shape: f32[1,16], index: 2, kind: input, shape index: {}]
  %s3 = inlined_call_operand.vmem [shape: bf16[2,256,16], index: 3, kind: output, shape index: {}]
  %s4 = sld [smem:[#allocation0]]
  $region45: #{encoder_block_fwd.2} parent=0
    _
  %s6 = ssub.s32 1, %s4
  %s7 = scalar_select 0, %s6, %s4
  loop: start=0, step=1, limit=4
  $region2: #{encoder_block_fwd.2} parent=0 // loop_pre_header
    _
  $region3: #{encoder_block_fwd.2} parent=0 // loop_header
    %s9 = sphi 0, %s13
    %p10 = scmp.ge.s32.totalorder %s9, 4
    %s16 = sphi 0, %s28
    %s17 = sphi 0, %s24
    %s18 = sphi 0, %s16
    %s19 = sphi 0, %s17
    %s20 = sphi 0, %s18
    %s21 = sphi 0, %s19
    %s31 = sphi 0, %s33
    %s34 = sphi 0, %s31
    %s35 = sphi 0, %s34
    %s51 = sphi 0, %s35
    %s57 = sphi 0, %s59
    %s60 = sphi 0, %s57
    %s61 = sphi 0, %s60
    %s77 = sphi 0, %s61
    %s83 = sphi 0, %s85
    %s86 = sphi 0, %s83
    %s87 = sphi 0, %s86
    %s103 = sphi 0, %s87
    %s111 = sphi 0, %s113
    %s114 = sphi 0, %s111
    %s115 = sphi 0, %s114
    %s131 = sphi 0, %s115
  $region4: #{encoder_block_fwd.2} parent=0 // loop_header_branch
    %12 = sbr.rel (%p10) target = $region8
  $region5: #{encoder_block_fwd.2} parent=0 // loop_body
    %s14 = ssub.s32 %s9, 1
    %s15 = ssub.s32 %s9, 2
    %s22 = sadd.s32 1, %s17
    %p23 = scmp.ge.s32.totalorder %s22, 1
    %s24 = scalar_select %p23, 0, %s22
    %s25 = sadd.s32 1, %s16
    %s26 = scalar_select %p23, %s25, %s16
    %p27 = scmp.ge.s32.totalorder %s26, 2
    %s28 = scalar_select %p27, 0, %s26
    %s29 = ssub.s32 %s16, %s28
    %p30 = scmp.eq.s32.totalorder %s29, 0
    %s32 = sadd.s32 %s31, 1
    %s33 = scalar_select %p30, %s31, %s32
    %p36 = pneg %p30
    %p37 = scmp.eq.s32.totalorder %s9, 1
    %p38 = por %p36, %p37
    %p39 = scmp.ne.s32.totalorder %s31, %s34
    %p40 = scmp.eq.s32.totalorder %s9, 0
    %p41 = por %p39, %p40
    %p42 = scmp.ne.s32.totalorder %s31, %s34
    %p43 = scmp.eq.s32.totalorder %s14, 1
    %p44 = por %p42, %p43
    %p45 = scmp.ne.s32.totalorder %s34, %s35
    %p46 = scmp.eq.s32.totalorder %s14, 0
    %p47 = por %p45, %p46
    %p48 = scmp.ne.s32.totalorder %s34, %s35
    %p49 = scmp.eq.s32.totalorder %s15, 1
    %p50 = por %p48, %p49
    %p52 = scmp.ne.s32.totalorder %s35, %s51
    %p53 = scmp.eq.s32.totalorder %s15, 0
    %p54 = por %p52, %p53
    %s55 = ssub.s32 %s17, %s24
    %p56 = scmp.eq.s32.totalorder %s55, 0
    %s58 = sadd.s32 %s57, 1
    %s59 = scalar_select %p56, %s57, %s58
    %p62 = pneg %p56
    %p63 = scmp.eq.s32.totalorder %s9, 1
    %p64 = por %p62, %p63
    %p65 = scmp.ne.s32.totalorder %s57, %s60
    %p66 = scmp.eq.s32.totalorder %s9, 0
    %p67 = por %p65, %p66
    %p68 = scmp.ne.s32.totalorder %s57, %s60
    %p69 = scmp.eq.s32.totalorder %s14, 1
    %p70 = por %p68, %p69
    %p71 = scmp.ne.s32.totalorder %s60, %s61
    %p72 = scmp.eq.s32.totalorder %s14, 0
    %p73 = por %p71, %p72
    %p74 = scmp.ne.s32.totalorder %s60, %s61
    %p75 = scmp.eq.s32.totalorder %s15, 1
    %p76 = por %p74, %p75
    %p78 = scmp.ne.s32.totalorder %s61, %s77
    %p79 = scmp.eq.s32.totalorder %s15, 0
    %p80 = por %p78, %p79
    %s81 = ssub.s32 %s17, %s24
    %p82 = scmp.eq.s32.totalorder %s81, 0
    %s84 = sadd.s32 %s83, 1
    %s85 = scalar_select %p82, %s83, %s84
    %p88 = pneg %p82
    %p89 = scmp.eq.s32.totalorder %s9, 1
    %p90 = por %p88, %p89
    %p91 = scmp.ne.s32.totalorder %s83, %s86
    %p92 = scmp.eq.s32.totalorder %s9, 0
    %p93 = por %p91, %p92
    %p94 = scmp.ne.s32.totalorder %s83, %s86
    %p95 = scmp.eq.s32.totalorder %s14, 1
    %p96 = por %p94, %p95
    %p97 = scmp.ne.s32.totalorder %s86, %s87
    %p98 = scmp.eq.s32.totalorder %s14, 0
    %p99 = por %p97, %p98
    %p100 = scmp.ne.s32.totalorder %s86, %s87
    %p101 = scmp.eq.s32.totalorder %s15, 1
    %p102 = por %p100, %p101
    %p104 = scmp.ne.s32.totalorder %s87, %s103
    %p105 = scmp.eq.s32.totalorder %s15, 0
    %p106 = por %p104, %p105
    %s107 = ssub.s32 %s16, %s28
    %s108 = ssub.s32 %s17, %s24
    %s109 = sor.u32 %s107, %s108
    %p110 = scmp.eq.s32.totalorder %s109, 0
    %s112 = sadd.s32 %s111, 1
    %s113 = scalar_select %p110, %s111, %s112
    %p116 = pneg %p110
    %p117 = scmp.eq.s32.totalorder %s9, 1
    %p118 = por %p116, %p117
    %p119 = scmp.ne.s32.totalorder %s111, %s114
    %p120 = scmp.eq.s32.totalorder %s9, 0
    %p121 = por %p119, %p120
    %p122 = scmp.ne.s32.totalorder %s111, %s114
    %p123 = scmp.eq.s32.totalorder %s14, 1
    %p124 = por %p122, %p123
    %p125 = scmp.ne.s32.totalorder %s114, %s115
    %p126 = scmp.eq.s32.totalorder %s14, 0
    %p127 = por %p125, %p126
    %p128 = scmp.ne.s32.totalorder %s114, %s115
    %p129 = scmp.eq.s32.totalorder %s15, 1
    %p130 = por %p128, %p129
    %p132 = scmp.ne.s32.totalorder %s115, %s131
    %p133 = scmp.eq.s32.totalorder %s15, 0
    %p134 = por %p132, %p133
    %p135 = scmp.le.s32.totalorder 1, %s9
    %p136 = scmp.lt.s32.totalorder %s9, 3
    %p137 = pnand %p135, %p136
    %p138 = pneg %p137
    // Predicated region
    $region9: #{encoder_block_fwd.2} parent=5 // pred_check
      _
    $region10: #{encoder_block_fwd.2} parent=5 // pred_check_branch
      %140 = sbr.rel (%p137) target = $region12
    $region11: #{encoder_block_fwd.2} parent=5 // pred_region
      %s141 = ssub.s32 %s9, 1
      // Predicated region
      $region13: #{encoder_block_fwd.2} parent=11 // pred_check
        %p142 = pneg %p73
      $region14: #{encoder_block_fwd.2} parent=11 // pred_check_branch
        %144 = sbr.rel (%p142) target = $region16
      $region15: #{encoder_block_fwd.2} parent=11 // pred_region
        %p145 = scmp.lt.s32.totalorder %s19, 0
        %s146 = scalar_select %p145, %s19, 0
        %s147 = smul.addr %s146, 4
        %s148 = scalar_lea.vmem %s1, %s147
      $region16: #{encoder_block_fwd.2} parent=11 // pred_fallthru
        _
      // Predicated region
      $region17: #{encoder_block_fwd.2} parent=11 // pred_check
        %p149 = pneg %p99
      $region18: #{encoder_block_fwd.2} parent=11 // pred_check_branch
        %151 = sbr.rel (%p149) target = $region20
      $region19: #{encoder_block_fwd.2} parent=11 // pred_region
        %p152 = scmp.lt.s32.totalorder %s19, 0
        %s153 = scalar_select %p152, %s19, 0
        %s154 = scalar_lea.vmem %s2, %s153
      $region20: #{encoder_block_fwd.2} parent=11 // pred_fallthru
        _
    $region12: #{encoder_block_fwd.2} parent=5 // pred_fallthru
      _
    %p155 = scmp.lt.s32.totalorder %s9, 2
    // Predicated region
    $region21: #{encoder_block_fwd.2} parent=5 // pred_check
      %p156 = pneg %p155
    $region22: #{encoder_block_fwd.2} parent=5 // pred_check_branch
      %158 = sbr.rel (%p156) target = $region24
    $region23: #{encoder_block_fwd.2} parent=5 // pred_region
      // Predicated region
      $region25: #{encoder_block_fwd.2} parent=23 // pred_check
        %p159 = pneg %p41
      $region26: #{encoder_block_fwd.2} parent=23 // pred_check_branch
        %161 = sbr.rel (%p159) target = $region28
      $region27: #{encoder_block_fwd.2} parent=23 // pred_region
        %p162 = scmp.lt.s32.totalorder %s16, 1
        %s163 = scalar_select %p162, %s16, 1
        %s164 = smul.addr %s163, 32
        %s165 = smul.addr %s164, 4
        %s166 = scalar_lea.vmem %s0, %s165
      $region28: #{encoder_block_fwd.2} parent=23 // pred_fallthru
        _
    $region24: #{encoder_block_fwd.2} parent=5 // pred_fallthru
      _
    %p167 = scmp.le.s32.totalorder 1, %s9
    %p168 = scmp.lt.s32.totalorder %s9, 3
    %p169 = pnand %p167, %p168
    %p170 = pneg %p169
    // Predicated region
    $region29: #{encoder_block_fwd.2} parent=5 // pred_check
      _
    $region30: #{encoder_block_fwd.2} parent=5 // pred_check_branch
      %172 = sbr.rel (%p169) target = $region32
    $region31: #{encoder_block_fwd.2} parent=5 // pred_region
      %s173 = ssub.s32 %s9, 1
      %p174 = scmp.lt.s32.totalorder %s18, 1
      %s175 = scalar_select %p174, %s18, 1
      %s176 = smul.addr %s175, 32
      %s177 = smul.addr %s176, 4
      %s178 = scalar_lea.vmem %s0, %s177
      %p179 = pneg %p47
      %p180 = pneg %p44
      %p181 = scmp.lt.s32.totalorder %s19, 0
      %s182 = scalar_select %p181, %s19, 0
      %s183 = smul.addr %s182, 4
      %s184 = scalar_lea.vmem %s1, %s183
      %p185 = pneg %p73
      %p186 = pneg %p70
      %p187 = scmp.lt.s32.totalorder %s19, 0
      %s188 = scalar_select %p187, %s19, 0
      %s189 = scalar_lea.vmem %s2, %s188
      %p190 = pneg %p99
      %p191 = pneg %p96
      %p192 = pneg %p127
      %p193 = pneg %p124
      %p194 = scmp.lt.s32.totalorder %s18, 1
      %s195 = scalar_select %p194, %s18, 1
      %p196 = scmp.lt.s32.totalorder %s19, 0
      %s197 = scalar_select %p196, %s19, 0
      %s198 = smul.addr %s195, 32
      %s199 = sadd.s32 %s197, %s198
      %s200 = smul.addr %s199, 4
      %s201 = scalar_lea.vmem %s3, %s200
      %p202 = scmp.lt.s32.totalorder %s18, 1
      %s203 = scalar_select %p202, %s18, 1
      %s204 = smul.addr %s203, 32
      %s205 = smul.addr %s204, 4
      %s206 = scalar_lea.vmem %s0, %s205
      %p207 = scmp.lt.s32.totalorder %s19, 0
      %s208 = scalar_select %p207, %s19, 0
      %s209 = smul.addr %s208, 4
      %s210 = scalar_lea.vmem %s1, %s209
      %p211 = scmp.lt.s32.totalorder %s19, 0
      %s212 = scalar_select %p211, %s19, 0
      %s213 = scalar_lea.vmem %s2, %s212
      %p214 = scmp.lt.s32.totalorder %s18, 1
      %s215 = scalar_select %p214, %s18, 1
      %p216 = scmp.lt.s32.totalorder %s19, 0
      %s217 = scalar_select %p216, %s19, 0
      %s218 = smul.addr %s215, 32
      %s219 = sadd.s32 %s217, %s218
      %s220 = smul.addr %s219, 4
      %s221 = scalar_lea.vmem %s3, %s220
      %v223 = vld [vmem:[%s206] sm:$0xf]
      %v224 = vld [vmem:[%s206 + $0x4] sm:$0xf]
      %v225 = vld [vmem:[%s206 + $0x8] sm:$0xf]
      %v226 = vld [vmem:[%s206 + $0xc] sm:$0xf]
      %v227 = vld [vmem:[%s206 + $0x10] sm:$0xf]
      %v228 = vld [vmem:[%s206 + $0x14] sm:$0xf]
      %v229 = vld [vmem:[%s206 + $0x18] sm:$0xf]
      %v230 = vld [vmem:[%s206 + $0x1c] sm:$0xf]
      %v231 = vld [vmem:[%s206 + $0x20] sm:$0xf]
      %v232 = vld [vmem:[%s206 + $0x24] sm:$0xf]
      %v233 = vld [vmem:[%s206 + $0x28] sm:$0xf]
      %v234 = vld [vmem:[%s206 + $0x2c] sm:$0xf]
      %v235 = vld [vmem:[%s206 + $0x30] sm:$0xf]
      %v236 = vld [vmem:[%s206 + $0x34] sm:$0xf]
      %v237 = vld [vmem:[%s206 + $0x38] sm:$0xf]
      %v238 = vld [vmem:[%s206 + $0x3c] sm:$0xf]
      %v239 = vld [vmem:[%s206 + $0x40] sm:$0xf]
      %v240 = vld [vmem:[%s206 + $0x44] sm:$0xf]
      %v241 = vld [vmem:[%s206 + $0x48] sm:$0xf]
      %v242 = vld [vmem:[%s206 + $0x4c] sm:$0xf]
      %v243 = vld [vmem:[%s206 + $0x50] sm:$0xf]
      %v244 = vld [vmem:[%s206 + $0x54] sm:$0xf]
      %v245 = vld [vmem:[%s206 + $0x58] sm:$0xf]
      %v246 = vld [vmem:[%s206 + $0x5c] sm:$0xf]
      %v247 = vld [vmem:[%s206 + $0x60] sm:$0xf]
      %v248 = vld [vmem:[%s206 + $0x64] sm:$0xf]
      %v249 = vld [vmem:[%s206 + $0x68] sm:$0xf]
      %v250 = vld [vmem:[%s206 + $0x6c] sm:$0x7]
      %v251 = vld [vmem:[%s210] sm:$0xf]
      %v252 = vld [vmem:[%s206 + $0x6c] sm:$0xf]
      %v253 = vld [vmem:[%s210 + $0x4] sm:$0xf]
      %v282 = vunpack.c.l.b16 %v223
      %v283 = vunpack.c.l.b16 %v224
      %v284 = vunpack.c.l.b16 %v225
      %v285 = vunpack.c.l.b16 %v226
      %v286 = vunpack.c.l.b16 %v227
      %v287 = vunpack.c.l.b16 %v228
      %v288 = vunpack.c.l.b16 %v229
      %v289 = vunpack.c.l.b16 %v230
      %v290 = vunpack.c.l.b16 %v231
      %v291 = vunpack.c.l.b16 %v232
      %v292 = vunpack.c.l.b16 %v233
      %v293 = vunpack.c.l.b16 %v234
      %v294 = vunpack.c.l.b16 %v235
      %v295 = vunpack.c.l.b16 %v236
      %v296 = vunpack.c.l.b16 %v237
      %v297 = vunpack.c.l.b16 %v238
      %v298 = vunpack.c.l.b16 %v239
      %v299 = vunpack.c.l.b16 %v240
      %v300 = vunpack.c.l.b16 %v241
      %v301 = vunpack.c.l.b16 %v242
      %v302 = vunpack.c.l.b16 %v243
      %v303 = vunpack.c.l.b16 %v244
      %v304 = vunpack.c.l.b16 %v245
      %v305 = vunpack.c.l.b16 %v246
      %v306 = vunpack.c.l.b16 %v247
      %v307 = vunpack.c.l.b16 %v248
      %v308 = vunpack.c.l.b16 %v249
      %v309 = vunpack.c.l.b16 %v252
      %v310 = vpack.c.b16 %v283, %v282
      %v311 = vpack.c.b16 %v285, %v284
      %v312 = vpack.c.b16 %v287, %v286
      %v313 = vpack.c.b16 %v289, %v288
      %v314 = vpack.c.b16 %v291, %v290
      %v315 = vpack.c.b16 %v293, %v292
      %v316 = vpack.c.b16 %v295, %v294
      %v317 = vpack.c.b16 %v297, %v296
      %v318 = vpack.c.b16 %v299, %v298
      %v319 = vpack.c.b16 %v301, %v300
      %v320 = vpack.c.b16 %v303, %v302
      %v321 = vpack.c.b16 %v305, %v304
      %v322 = vpack.c.b16 %v307, %v306
      %v323 = vpack.c.b16 %v309, %v308
      %vm324 = vsmask.f32 7424
      %v326 = vshrl.u32 %v310, 16
      %v328 = vshll.u32 %v310, 16
      %v330 = vrot.slane %v328, 1
      %v331 = vor.u32 %v326, %v330
      %v333 = vshll.u32 %v311, 16
      %v335 = vrot.slane %v333, 1
      %v336 = vsel %vm324, %v331, %v335
      %v337 = vshrl.u32 %v311, 16
      %v339 = vor.u32 %v337, %v335
      %v341 = vshll.u32 %v312, 16
      %v343 = vrot.slane %v341, 1
      %v344 = vsel %vm324, %v339, %v343
      %v345 = vshrl.u32 %v312, 16
      %v347 = vor.u32 %v345, %v343
      %v349 = vshll.u32 %v313, 16
      %v351 = vrot.slane %v349, 1
      %v352 = vsel %vm324, %v347, %v351
      %v353 = vshrl.u32 %v313, 16
      %v355 = vor.u32 %v353, %v351
      %v357 = vshll.u32 %v314, 16
      %v359 = vrot.slane %v357, 1
      %v360 = vsel %vm324, %v355, %v359
      %v361 = vshrl.u32 %v314, 16
      %v363 = vor.u32 %v361, %v359
      %v365 = vshll.u32 %v315, 16
      %v367 = vrot.slane %v365, 1
      %v368 = vsel %vm324, %v363, %v367
      %v369 = vshrl.u32 %v315, 16
      %v371 = vor.u32 %v369, %v367
      %v373 = vshll.u32 %v316, 16
      %v375 = vrot.slane %v373, 1
      %v376 = vsel %vm324, %v371, %v375
      %v377 = vshrl.u32 %v316, 16
      %v379 = vor.u32 %v377, %v375
      %v381 = vshll.u32 %v317, 16
      %v383 = vrot.slane %v381, 1
      %v384 = vsel %vm324, %v379, %v383
      %v385 = vshrl.u32 %v317, 16
      %v387 = vor.u32 %v385, %v383
      %v389 = vshll.u32 %v318, 16
      %v391 = vrot.slane %v389, 1
      %v392 = vsel %vm324, %v387, %v391
      %v393 = vshrl.u32 %v318, 16
      %v395 = vor.u32 %v393, %v391
      %v397 = vshll.u32 %v319, 16
      %v399 = vrot.slane %v397, 1
      %v400 = vsel %vm324, %v395, %v399
      %v401 = vshrl.u32 %v319, 16
      %v403 = vor.u32 %v401, %v399
      %v405 = vshll.u32 %v320, 16
      %v407 = vrot.slane %v405, 1
      %v408 = vsel %vm324, %v403, %v407
      %v409 = vshrl.u32 %v320, 16
      %v411 = vor.u32 %v409, %v407
      %v413 = vshll.u32 %v321, 16
      %v415 = vrot.slane %v413, 1
      %v416 = vsel %vm324, %v411, %v415
      %v417 = vshrl.u32 %v321, 16
      %v419 = vor.u32 %v417, %v415
      %v421 = vshll.u32 %v322, 16
      %v423 = vrot.slane %v421, 1
      %v424 = vsel %vm324, %v419, %v423
      %v425 = vshrl.u32 %v322, 16
      %v427 = vor.u32 %v425, %v423
      %v429 = vshll.u32 %v323, 16
      %v431 = vrot.slane %v429, 1
      %v432 = vsel %vm324, %v427, %v431
      %v433 = vshrl.u32 %v323, 16
      %v435 = vor.u32 %v433, %v431
      %vm436 = vcmask 64512
      %v438 = vsel %vm436, %v336, 0
      %v441 = vsel %vm436, %v344, 0
      %v444 = vsel %vm436, %v352, 0
      %v447 = vsel %vm436, %v360, 0
      %v450 = vsel %vm436, %v368, 0
      %v453 = vsel %vm436, %v376, 0
      %v456 = vsel %vm436, %v384, 0
      %v459 = vsel %vm436, %v392, 0
      %v462 = vsel %vm436, %v400, 0
      %v465 = vsel %vm436, %v408, 0
      %v468 = vsel %vm436, %v416, 0
      %v471 = vsel %vm436, %v424, 0
      %v474 = vsel %vm436, %v432, 0
      %v477 = vsel %vm436, %v435, 0
      %vm479 = vcmask 1043456
      %v481 = vsel %vm479, %v253, 0
      %483 = vmatprep.subr.bf16.mxu0 0
      %484 = vmatpush1.bf16.msra.mxu0 0
      %485 = vmatprep.subr.bf16.mxu0 0
      %486 = vmatpush1.bf16.msra.mxu0 0
      %487 = vmatprep.subr.bf16.mxu0 0
      %488 = vmatpush1.bf16.msra.mxu0 0
      %489 = vmatprep.subr.bf16.mxu0 0
      %490 = vmatpush1.bf16.msra.mxu0 0
      %491 = vmatprep.subr.bf16.mxu0 0
      %492 = vmatpush1.bf16.msra.mxu0 0
      %493 = vmatprep.subr.bf16.mxu0 0
      %494 = vmatpush1.bf16.msra.mxu0 0
      %495 = vmatprep.subr.bf16.mxu0 0
      %496 = vmatpush1.bf16.msra.mxu0 0
      %497 = vmatprep.subr.bf16.mxu0 0
      %498 = vmatpush1.bf16.msra.mxu0 %v481
      %499 = vmatprep.subr.bf16.mxu0 0
      %500 = vmatpush2.bf16.msra.mxu0 0
      %501 = vmatprep.subr.bf16.mxu0 0
      %502 = vmatpush2.bf16.msra.mxu0 0
      %503 = vmatprep.subr.bf16.mxu0 0
      %504 = vmatpush2.bf16.msra.mxu0 0
      %505 = vmatprep.subr.bf16.mxu0 0
      %506 = vmatpush2.bf16.msra.mxu0 0
      %507 = vmatprep.subr.bf16.mxu0 0
      %508 = vmatpush2.bf16.msra.mxu0 0
      %509 = vmatprep.subr.bf16.mxu0 0
      %510 = vmatpush2.bf16.msra.mxu0 0
      %511 = vmatprep.subr.bf16.mxu0 0
      %512 = vmatpush2.bf16.msra.mxu0 0
      %513 = vmatprep.subr.bf16.mxu0 0
      %514 = vmatpush2.bf16.msra.mxu0 0
      %515 = vmatprep.mubr.bf16.mxu0 0
      %516 = vmatmul.mubr.bf16.gmra.mxu0 %v438
      %v517 = vpop.f32.mrf.mxu0
      %v518 = vadd.f32 0.0, %v517
      %v519 = vpop.f32.mrf.mxu0
      %v520 = vpop.f32.mrf.mxu0
      %v521 = vadd.f32 0.0, %v520
      %v522 = vpop.f32.mrf.mxu0
      %523 = vmatprep.mubr.bf16.mxu0 0
      %524 = vmatmul.mubr.bf16.gmra.mxu0 %v441
      %v525 = vpop.f32.mrf.mxu0
      %v526 = vadd.f32 0.0, %v525
      %v527 = vpop.f32.mrf.mxu0
      %v528 = vpop.f32.mrf.mxu0
      %v529 = vadd.f32 0.0, %v528
      %v530 = vpop.f32.mrf.mxu0
      %531 = vmatprep.mubr.bf16.mxu0 0
      %532 = vmatmul.mubr.bf16.gmra.mxu0 %v444
      %v533 = vpop.f32.mrf.mxu0
      %v534 = vadd.f32 0.0, %v533
      %v535 = vpop.f32.mrf.mxu0
      %v536 = vpop.f32.mrf.mxu0
      %v537 = vadd.f32 0.0, %v536
      %v538 = vpop.f32.mrf.mxu0
      %539 = vmatprep.mubr.bf16.mxu0 0
      %540 = vmatmul.mubr.bf16.gmra.mxu0 %v447
      %v541 = vpop.f32.mrf.mxu0
      %v542 = vadd.f32 0.0, %v541
      %v543 = vpop.f32.mrf.mxu0
      %v544 = vpop.f32.mrf.mxu0
      %v545 = vadd.f32 0.0, %v544
      %v546 = vpop.f32.mrf.mxu0
      %547 = vmatprep.mubr.bf16.mxu0 0
      %548 = vmatmul.mubr.bf16.gmra.mxu0 %v450
      %v549 = vpop.f32.mrf.mxu0
      %v550 = vadd.f32 0.0, %v549
      %v551 = vpop.f32.mrf.mxu0
      %v552 = vpop.f32.mrf.mxu0
      %v553 = vadd.f32 0.0, %v552
      %v554 = vpop.f32.mrf.mxu0
      %555 = vmatprep.mubr.bf16.mxu0 0
      %556 = vmatmul.mubr.bf16.gmra.mxu0 %v453
      %v557 = vpop.f32.mrf.mxu0
      %v558 = vadd.f32 0.0, %v557
      %v559 = vpop.f32.mrf.mxu0
      %v560 = vpop.f32.mrf.mxu0
      %v561 = vadd.f32 0.0, %v560
      %v562 = vpop.f32.mrf.mxu0
      %563 = vmatprep.mubr.bf16.mxu0 0
      %564 = vmatmul.mubr.bf16.gmra.mxu0 %v456
      %v565 = vpop.f32.mrf.mxu0
      %v566 = vadd.f32 0.0, %v565
      %v567 = vpop.f32.mrf.mxu0
      %v568 = vpop.f32.mrf.mxu0
      %v569 = vadd.f32 0.0, %v568
      %v570 = vpop.f32.mrf.mxu0
      %571 = vmatprep.mubr.bf16.mxu0 0
      %572 = vmatmul.mubr.bf16.gmra.mxu0 %v459
      %v573 = vpop.f32.mrf.mxu0
      %v574 = vadd.f32 0.0, %v573
      %v575 = vpop.f32.mrf.mxu0
      %v576 = vpop.f32.mrf.mxu0
      %v577 = vadd.f32 0.0, %v576
      %v578 = vpop.f32.mrf.mxu0
      %579 = vmatprep.mubr.bf16.mxu0 0
      %580 = vmatmul.mubr.bf16.gmra.mxu0 %v462
      %v581 = vpop.f32.mrf.mxu0
      %v582 = vadd.f32 0.0, %v581
      %v583 = vpop.f32.mrf.mxu0
      %v584 = vpop.f32.mrf.mxu0
      %v585 = vadd.f32 0.0, %v584
      %v586 = vpop.f32.mrf.mxu0
      %587 = vmatprep.mubr.bf16.mxu0 0
      %588 = vmatmul.mubr.bf16.gmra.mxu0 %v465
      %v589 = vpop.f32.mrf.mxu0
      %v590 = vadd.f32 0.0, %v589
      %v591 = vpop.f32.mrf.mxu0
      %v592 = vpop.f32.mrf.mxu0
      %v593 = vadd.f32 0.0, %v592
      %v594 = vpop.f32.mrf.mxu0
      %595 = vmatprep.mubr.bf16.mxu0 0
      %596 = vmatmul.mubr.bf16.gmra.mxu0 %v468
      %v597 = vpop.f32.mrf.mxu0
      %v598 = vadd.f32 0.0, %v597
      %v599 = vpop.f32.mrf.mxu0
      %v600 = vpop.f32.mrf.mxu0
      %v601 = vadd.f32 0.0, %v600
      %v602 = vpop.f32.mrf.mxu0
      %603 = vmatprep.mubr.bf16.mxu0 0
      %604 = vmatmul.mubr.bf16.gmra.mxu0 %v471
      %v605 = vpop.f32.mrf.mxu0
      %v606 = vadd.f32 0.0, %v605
      %v607 = vpop.f32.mrf.mxu0
      %v608 = vpop.f32.mrf.mxu0
      %v609 = vadd.f32 0.0, %v608
      %v610 = vpop.f32.mrf.mxu0
      %611 = vmatprep.mubr.bf16.mxu0 0
      %612 = vmatmul.mubr.bf16.gmra.mxu0 %v474
      %v613 = vpop.f32.mrf.mxu0
      %v614 = vadd.f32 0.0, %v613
      %v615 = vpop.f32.mrf.mxu0
      %v616 = vpop.f32.mrf.mxu0
      %v617 = vadd.f32 0.0, %v616
      %v618 = vpop.f32.mrf.mxu0
      %619 = vmatprep.mubr.bf16.mxu0 0
      %620 = vmatmul.mubr.bf16.gmra.mxu0 %v477
      %v621 = vpop.f32.mrf.mxu0
      %v622 = vadd.f32 0.0, %v621
      %v623 = vpop.f32.mrf.mxu0
      %v624 = vpop.f32.mrf.mxu0
      %v625 = vadd.f32 0.0, %v624
      %v626 = vpop.f32.mrf.mxu0
      %627 = vdwg.mxu0
      %v629 = vunpack.c.l.b16 %v250
      %v630 = vpack.c.b16 %v629, %v308
      %v631 = vsel %vm436, %v310, 0
      %v633 = vsel %vm436, %v311, 0
      %v635 = vsel %vm436, %v312, 0
      %v637 = vsel %vm436, %v313, 0
      %v639 = vsel %vm436, %v314, 0
      %v641 = vsel %vm436, %v315, 0
      %v643 = vsel %vm436, %v316, 0
      %v645 = vsel %vm436, %v317, 0
      %v647 = vsel %vm436, %v318, 0
      %v649 = vsel %vm436, %v319, 0
      %v651 = vsel %vm436, %v320, 0
      %v653 = vsel %vm436, %v321, 0
      %v655 = vsel %vm436, %v322, 0
      %v658 = vsel %vm436, %v630, 0
      %v661 = vsel %vm479, %v251, 0
      %663 = vmatprep.subr.bf16.mxu0 0
      %664 = vmatpush1.bf16.msra.mxu0 0
      %665 = vmatprep.subr.bf16.mxu0 0
      %666 = vmatpush1.bf16.msra.mxu0 0
      %667 = vmatprep.subr.bf16.mxu0 0
      %668 = vmatpush1.bf16.msra.mxu0 0
      %669 = vmatprep.subr.bf16.mxu0 0
      %670 = vmatpush1.bf16.msra.mxu0 0
      %671 = vmatprep.subr.bf16.mxu0 0
      %672 = vmatpush1.bf16.msra.mxu0 0
      %673 = vmatprep.subr.bf16.mxu0 0
      %674 = vmatpush1.bf16.msra.mxu0 0
      %675 = vmatprep.subr.bf16.mxu0 0
      %676 = vmatpush1.bf16.msra.mxu0 0
      %677 = vmatprep.subr.bf16.mxu0 0
      %678 = vmatpush1.bf16.msra.mxu0 %v661
      %679 = vmatprep.subr.bf16.mxu0 0
      %680 = vmatpush2.bf16.msra.mxu0 0
      %681 = vmatprep.subr.bf16.mxu0 0
      %682 = vmatpush2.bf16.msra.mxu0 0
      %683 = vmatprep.subr.bf16.mxu0 0
      %684 = vmatpush2.bf16.msra.mxu0 0
      %685 = vmatprep.subr.bf16.mxu0 0
      %686 = vmatpush2.bf16.msra.mxu0 0
      %687 = vmatprep.subr.bf16.mxu0 0
      %688 = vmatpush2.bf16.msra.mxu0 0
      %689 = vmatprep.subr.bf16.mxu0 0
      %690 = vmatpush2.bf16.msra.mxu0 0
      %691 = vmatprep.subr.bf16.mxu0 0
      %692 = vmatpush2.bf16.msra.mxu0 0
      %693 = vmatprep.subr.bf16.mxu0 0
      %694 = vmatpush2.bf16.msra.mxu0 0
      %695 = vmatprep.mubr.bf16.mxu0 0
      %696 = vmatmul.mubr.bf16.gmra.mxu0 %v631
      %v697 = vpop.f32.mrf.mxu0
      %v698 = vadd.f32 %v518, %v697
      %v699 = vpop.f32.mrf.mxu0
      %v700 = vpop.f32.mrf.mxu0
      %v701 = vadd.f32 %v521, %v700
      %v702 = vpop.f32.mrf.mxu0
      %703 = vmatprep.mubr.bf16.mxu0 0
      %704 = vmatmul.mubr.bf16.gmra.mxu0 %v633
      %v705 = vpop.f32.mrf.mxu0
      %v706 = vadd.f32 %v526, %v705
      %v707 = vpop.f32.mrf.mxu0
      %v708 = vpop.f32.mrf.mxu0
      %v709 = vadd.f32 %v529, %v708
      %v710 = vpop.f32.mrf.mxu0
      %711 = vmatprep.mubr.bf16.mxu0 0
      %712 = vmatmul.mubr.bf16.gmra.mxu0 %v635
      %v713 = vpop.f32.mrf.mxu0
      %v714 = vadd.f32 %v534, %v713
      %v715 = vpop.f32.mrf.mxu0
      %v716 = vpop.f32.mrf.mxu0
      %v717 = vadd.f32 %v537, %v716
      %v718 = vpop.f32.mrf.mxu0
      %719 = vmatprep.mubr.bf16.mxu0 0
      %720 = vmatmul.mubr.bf16.gmra.mxu0 %v637
      %v721 = vpop.f32.mrf.mxu0
      %v722 = vadd.f32 %v542, %v721
      %v723 = vpop.f32.mrf.mxu0
      %v724 = vpop.f32.mrf.mxu0
      %v725 = vadd.f32 %v545, %v724
      %v726 = vpop.f32.mrf.mxu0
      %727 = vmatprep.mubr.bf16.mxu0 0
      %728 = vmatmul.mubr.bf16.gmra.mxu0 %v639
      %v729 = vpop.f32.mrf.mxu0
      %v730 = vadd.f32 %v550, %v729
      %v731 = vpop.f32.mrf.mxu0
      %v732 = vpop.f32.mrf.mxu0
      %v733 = vadd.f32 %v553, %v732
      %v734 = vpop.f32.mrf.mxu0
      %735 = vmatprep.mubr.bf16.mxu0 0
      %736 = vmatmul.mubr.bf16.gmra.mxu0 %v641
      %v737 = vpop.f32.mrf.mxu0
      %v738 = vadd.f32 %v558, %v737
      %v739 = vpop.f32.mrf.mxu0
      %v740 = vpop.f32.mrf.mxu0
      %v741 = vadd.f32 %v561, %v740
      %v742 = vpop.f32.mrf.mxu0
      %743 = vmatprep.mubr.bf16.mxu0 0
      %744 = vmatmul.mubr.bf16.gmra.mxu0 %v643
      %v745 = vpop.f32.mrf.mxu0
      %v746 = vadd.f32 %v566, %v745
      %v747 = vpop.f32.mrf.mxu0
      %v748 = vpop.f32.mrf.mxu0
      %v749 = vadd.f32 %v569, %v748
      %v750 = vpop.f32.mrf.mxu0
      %751 = vmatprep.mubr.bf16.mxu0 0
      %752 = vmatmul.mubr.bf16.gmra.mxu0 %v645
      %v753 = vpop.f32.mrf.mxu0
      %v754 = vadd.f32 %v574, %v753
      %v755 = vpop.f32.mrf.mxu0
      %v756 = vpop.f32.mrf.mxu0
      %v757 = vadd.f32 %v577, %v756
      %v758 = vpop.f32.mrf.mxu0
      %759 = vmatprep.mubr.bf16.mxu0 0
      %760 = vmatmul.mubr.bf16.gmra.mxu0 %v647
      %v761 = vpop.f32.mrf.mxu0
      %v762 = vadd.f32 %v582, %v761
      %v763 = vpop.f32.mrf.mxu0
      %v764 = vpop.f32.mrf.mxu0
      %v765 = vadd.f32 %v585, %v764
      %v766 = vpop.f32.mrf.mxu0
      %767 = vmatprep.mubr.bf16.mxu0 0
      %768 = vmatmul.mubr.bf16.gmra.mxu0 %v649
      %v769 = vpop.f32.mrf.mxu0
      %v770 = vadd.f32 %v590, %v769
      %v771 = vpop.f32.mrf.mxu0
      %v772 = vpop.f32.mrf.mxu0
      %v773 = vadd.f32 %v593, %v772
      %v774 = vpop.f32.mrf.mxu0
      %775 = vmatprep.mubr.bf16.mxu0 0
      %776 = vmatmul.mubr.bf16.gmra.mxu0 %v651
      %v777 = vpop.f32.mrf.mxu0
      %v778 = vadd.f32 %v598, %v777
      %v779 = vpop.f32.mrf.mxu0
      %v780 = vpop.f32.mrf.mxu0
      %v781 = vadd.f32 %v601, %v780
      %v782 = vpop.f32.mrf.mxu0
      %783 = vmatprep.mubr.bf16.mxu0 0
      %784 = vmatmul.mubr.bf16.gmra.mxu0 %v653
      %v785 = vpop.f32.mrf.mxu0
      %v786 = vadd.f32 %v606, %v785
      %v787 = vpop.f32.mrf.mxu0
      %v788 = vpop.f32.mrf.mxu0
      %v789 = vadd.f32 %v609, %v788
      %v790 = vpop.f32.mrf.mxu0
      %791 = vmatprep.mubr.bf16.mxu0 0
      %792 = vmatmul.mubr.bf16.gmra.mxu0 %v655
      %v793 = vpop.f32.mrf.mxu0
      %v794 = vadd.f32 %v614, %v793
      %v795 = vpop.f32.mrf.mxu0
      %v796 = vpop.f32.mrf.mxu0
      %v797 = vadd.f32 %v617, %v796
      %v798 = vpop.f32.mrf.mxu0
      %799 = vmatprep.mubr.bf16.mxu0 0
      %800 = vmatmul.mubr.bf16.gmra.mxu0 %v658
      %v801 = vpop.f32.mrf.mxu0
      %v802 = vadd.f32 %v622, %v801
      %v803 = vpop.f32.mrf.mxu0
      %v804 = vpop.f32.mrf.mxu0
      %v805 = vadd.f32 %v625, %v804
      %v806 = vpop.f32.mrf.mxu0
      %807 = vdwg.mxu0
      %v808 = vld [vmem:[%s206] sm:$0xe]
      %v809 = vld [vmem:[%s210 + $0x8] sm:$0xf]
      %v811 = vunpack.c.l.b16 %v808
      %v812 = vpack.c.b16 %v283, %v811
      %vm813 = vcmask 1046528
      %v814 = vrot.slane %v812, 1
      %v815 = vrot.slane %v311, 1
      %v816 = vsel %vm813, %v814, %v815
      %v817 = vrot.slane %v312, 1
      %v818 = vsel %vm813, %v815, %v817
      %v819 = vrot.slane %v313, 1
      %v820 = vsel %vm813, %v817, %v819
      %v821 = vrot.slane %v314, 1
      %v822 = vsel %vm813, %v819, %v821
      %v823 = vrot.slane %v315, 1
      %v824 = vsel %vm813, %v821, %v823
      %v825 = vrot.slane %v316, 1
      %v826 = vsel %vm813, %v823, %v825
      %v827 = vrot.slane %v317, 1
      %v828 = vsel %vm813, %v825, %v827
      %v829 = vrot.slane %v318, 1
      %v830 = vsel %vm813, %v827, %v829
      %v831 = vrot.slane %v319, 1
      %v832 = vsel %vm813, %v829, %v831
      %v833 = vrot.slane %v320, 1
      %v834 = vsel %vm813, %v831, %v833
      %v835 = vrot.slane %v321, 1
      %v836 = vsel %vm813, %v833, %v835
      %v837 = vrot.slane %v322, 1
      %v838 = vsel %vm813, %v835, %v837
      %v839 = vrot.slane %v323, 1
      %v840 = vsel %vm813, %v837, %v839
      %v842 = vsel %vm436, %v816, 0
      %v845 = vsel %vm436, %v818, 0
      %v848 = vsel %vm436, %v820, 0
      %v851 = vsel %vm436, %v822, 0
      %v854 = vsel %vm436, %v824, 0
      %v857 = vsel %vm436, %v826, 0
      %v860 = vsel %vm436, %v828, 0
      %v863 = vsel %vm436, %v830, 0
      %v866 = vsel %vm436, %v832, 0
      %v869 = vsel %vm436, %v834, 0
      %v872 = vsel %vm436, %v836, 0
      %v875 = vsel %vm436, %v838, 0
      %v878 = vsel %vm436, %v840, 0
      %v881 = vsel %vm436, %v839, 0
      %v884 = vsel %vm479, %v809, 0
      %886 = vmatprep.subr.bf16.mxu0 0
      %887 = vmatpush1.bf16.msra.mxu0 0
      %888 = vmatprep.subr.bf16.mxu0 0
      %889 = vmatpush1.bf16.msra.mxu0 0
      %890 = vmatprep.subr.bf16.mxu0 0
      %891 = vmatpush1.bf16.msra.mxu0 0
      %892 = vmatprep.subr.bf16.mxu0 0
      %893 = vmatpush1.bf16.msra.mxu0 0
      %894 = vmatprep.subr.bf16.mxu0 0
      %895 = vmatpush1.bf16.msra.mxu0 0
      %896 = vmatprep.subr.bf16.mxu0 0
      %897 = vmatpush1.bf16.msra.mxu0 0
      %898 = vmatprep.subr.bf16.mxu0 0
      %899 = vmatpush1.bf16.msra.mxu0 0
      %900 = vmatprep.subr.bf16.mxu0 0
      %901 = vmatpush1.bf16.msra.mxu0 %v884
      %902 = vmatprep.subr.bf16.mxu0 0
      %903 = vmatpush2.bf16.msra.mxu0 0
      %904 = vmatprep.subr.bf16.mxu0 0
      %905 = vmatpush2.bf16.msra.mxu0 0
      %906 = vmatprep.subr.bf16.mxu0 0
      %907 = vmatpush2.bf16.msra.mxu0 0
      %908 = vmatprep.subr.bf16.mxu0 0
      %909 = vmatpush2.bf16.msra.mxu0 0
      %910 = vmatprep.subr.bf16.mxu0 0
      %911 = vmatpush2.bf16.msra.mxu0 0
      %912 = vmatprep.subr.bf16.mxu0 0
      %913 = vmatpush2.bf16.msra.mxu0 0
      %914 = vmatprep.subr.bf16.mxu0 0
      %915 = vmatpush2.bf16.msra.mxu0 0
      %916 = vmatprep.subr.bf16.mxu0 0
      %917 = vmatpush2.bf16.msra.mxu0 0
      %918 = vmatprep.mubr.bf16.mxu0 0
      %919 = vmatmul.mubr.bf16.gmra.mxu0 %v842
      %v920 = vpop.f32.mrf.mxu0
      %v921 = vadd.f32 0.0, %v920
      %v922 = vpop.f32.mrf.mxu0
      %v923 = vpop.f32.mrf.mxu0
      %v924 = vadd.f32 0.0, %v923
      %v925 = vpop.f32.mrf.mxu0
      %926 = vmatprep.mubr.bf16.mxu0 0
      %927 = vmatmul.mubr.bf16.gmra.mxu0 %v845
      %v928 = vpop.f32.mrf.mxu0
      %v929 = vadd.f32 0.0, %v928
      %v930 = vpop.f32.mrf.mxu0
      %v931 = vpop.f32.mrf.mxu0
      %v932 = vadd.f32 0.0, %v931
      %v933 = vpop.f32.mrf.mxu0
      %934 = vmatprep.mubr.bf16.mxu0 0
      %935 = vmatmul.mubr.bf16.gmra.mxu0 %v848
      %v936 = vpop.f32.mrf.mxu0
      %v937 = vadd.f32 0.0, %v936
      %v938 = vpop.f32.mrf.mxu0
      %v939 = vpop.f32.mrf.mxu0
      %v940 = vadd.f32 0.0, %v939
      %v941 = vpop.f32.mrf.mxu0
      %942 = vmatprep.mubr.bf16.mxu0 0
      %943 = vmatmul.mubr.bf16.gmra.mxu0 %v851
      %v944 = vpop.f32.mrf.mxu0
      %v945 = vadd.f32 0.0, %v944
      %v946 = vpop.f32.mrf.mxu0
      %v947 = vpop.f32.mrf.mxu0
      %v948 = vadd.f32 0.0, %v947
      %v949 = vpop.f32.mrf.mxu0
      %950 = vmatprep.mubr.bf16.mxu0 0
      %951 = vmatmul.mubr.bf16.gmra.mxu0 %v854
      %v952 = vpop.f32.mrf.mxu0
      %v953 = vadd.f32 0.0, %v952
      %v954 = vpop.f32.mrf.mxu0
      %v955 = vpop.f32.mrf.mxu0
      %v956 = vadd.f32 0.0, %v955
      %v957 = vpop.f32.mrf.mxu0
      %958 = vmatprep.mubr.bf16.mxu0 0
      %959 = vmatmul.mubr.bf16.gmra.mxu0 %v857
      %v960 = vpop.f32.mrf.mxu0
      %v961 = vadd.f32 0.0, %v960
      %v962 = vpop.f32.mrf.mxu0
      %v963 = vpop.f32.mrf.mxu0
      %v964 = vadd.f32 0.0, %v963
      %v965 = vpop.f32.mrf.mxu0
      %966 = vmatprep.mubr.bf16.mxu0 0
      %967 = vmatmul.mubr.bf16.gmra.mxu0 %v860
      %v968 = vpop.f32.mrf.mxu0
      %v969 = vadd.f32 0.0, %v968
      %v970 = vpop.f32.mrf.mxu0
      %v971 = vpop.f32.mrf.mxu0
      %v972 = vadd.f32 0.0, %v971
      %v973 = vpop.f32.mrf.mxu0
      %974 = vmatprep.mubr.bf16.mxu0 0
      %975 = vmatmul.mubr.bf16.gmra.mxu0 %v863
      %v976 = vpop.f32.mrf.mxu0
      %v977 = vadd.f32 0.0, %v976
      %v978 = vpop.f32.mrf.mxu0
      %v979 = vpop.f32.mrf.mxu0
      %v980 = vadd.f32 0.0, %v979
      %v981 = vpop.f32.mrf.mxu0
      %982 = vmatprep.mubr.bf16.mxu0 0
      %983 = vmatmul.mubr.bf16.gmra.mxu0 %v866
      %v984 = vpop.f32.mrf.mxu0
      %v985 = vadd.f32 0.0, %v984
      %v986 = vpop.f32.mrf.mxu0
      %v987 = vpop.f32.mrf.mxu0
      %v988 = vadd.f32 0.0, %v987
      %v989 = vpop.f32.mrf.mxu0
      %990 = vmatprep.mubr.bf16.mxu0 0
      %991 = vmatmul.mubr.bf16.gmra.mxu0 %v869
      %v992 = vpop.f32.mrf.mxu0
      %v993 = vadd.f32 0.0, %v992
      %v994 = vpop.f32.mrf.mxu0
      %v995 = vpop.f32.mrf.mxu0
      %v996 = vadd.f32 0.0, %v995
      %v997 = vpop.f32.mrf.mxu0
      %998 = vmatprep.mubr.bf16.mxu0 0
      %999 = vmatmul.mubr.bf16.gmra.mxu0 %v872
      %v1000 = vpop.f32.mrf.mxu0
      %v1001 = vadd.f32 0.0, %v1000
      %v1002 = vpop.f32.mrf.mxu0
      %v1003 = vpop.f32.mrf.mxu0
      %v1004 = vadd.f32 0.0, %v1003
      %v1005 = vpop.f32.mrf.mxu0
      %1006 = vmatprep.mubr.bf16.mxu0 0
      %1007 = vmatmul.mubr.bf16.gmra.mxu0 %v875
      %v1008 = vpop.f32.mrf.mxu0
      %v1009 = vadd.f32 0.0, %v1008
      %v1010 = vpop.f32.mrf.mxu0
      %v1011 = vpop.f32.mrf.mxu0
      %v1012 = vadd.f32 0.0, %v1011
      %v1013 = vpop.f32.mrf.mxu0
      %1014 = vmatprep.mubr.bf16.mxu0 0
      %1015 = vmatmul.mubr.bf16.gmra.mxu0 %v878
      %v1016 = vpop.f32.mrf.mxu0
      %v1017 = vadd.f32 0.0, %v1016
      %v1018 = vpop.f32.mrf.mxu0
      %v1019 = vpop.f32.mrf.mxu0
      %v1020 = vadd.f32 0.0, %v1019
      %v1021 = vpop.f32.mrf.mxu0
      %1022 = vmatprep.mubr.bf16.mxu0 0
      %1023 = vmatmul.mubr.bf16.gmra.mxu0 %v881
      %v1024 = vpop.f32.mrf.mxu0
      %v1025 = vadd.f32 0.0, %v1024
      %v1026 = vpop.f32.mrf.mxu0
      %v1027 = vpop.f32.mrf.mxu0
      %v1028 = vadd.f32 0.0, %v1027
      %v1029 = vpop.f32.mrf.mxu0
      %1030 = vdwg.mxu0
      %v1031 = vadd.f32 %v698, %v921
      %v1032 = vadd.f32 %v701, %v924
      %v1033 = vadd.f32 %v706, %v929
      %v1034 = vadd.f32 %v709, %v932
      %v1035 = vadd.f32 %v714, %v937
      %v1036 = vadd.f32 %v717, %v940
      %v1037 = vadd.f32 %v722, %v945
      %v1038 = vadd.f32 %v725, %v948
      %v1039 = vadd.f32 %v730, %v953
      %v1040 = vadd.f32 %v733, %v956
      %v1041 = vadd.f32 %v738, %v961
      %v1042 = vadd.f32 %v741, %v964
      %v1043 = vadd.f32 %v746, %v969
      %v1044 = vadd.f32 %v749, %v972
      %v1045 = vadd.f32 %v754, %v977
      %v1046 = vadd.f32 %v757, %v980
      %v1047 = vadd.f32 %v762, %v985
      %v1048 = vadd.f32 %v765, %v988
      %v1049 = vadd.f32 %v770, %v993
      %v1050 = vadd.f32 %v773, %v996
      %v1051 = vadd.f32 %v778, %v1001
      %v1052 = vadd.f32 %v781, %v1004
      %v1053 = vadd.f32 %v786, %v1009
      %v1054 = vadd.f32 %v789, %v1012
      %v1055 = vadd.f32 %v794, %v1017
      %v1056 = vadd.f32 %v797, %v1020
      %v1057 = vadd.f32 %v802, %v1025
      %v1058 = vadd.f32 %v805, %v1028
      %v1059 = vld [vmem:[%s206 + $0x8] sm:$0xf]
      %v1060 = vld [vmem:[%s206 + $0xc] sm:$0xf]
      %v1061 = vld [vmem:[%s206 + $0x10] sm:$0xf]
      %v1062 = vld [vmem:[%s206 + $0x14] sm:$0xf]
      %v1063 = vld [vmem:[%s206 + $0x18] sm:$0xf]
      %v1064 = vld [vmem:[%s206 + $0x1c] sm:$0xf]
      %v1065 = vld [vmem:[%s206 + $0x20] sm:$0xf]
      %v1066 = vld [vmem:[%s206 + $0x24] sm:$0xf]
      %v1067 = vld [vmem:[%s206 + $0x28] sm:$0xf]
      %v1068 = vld [vmem:[%s206 + $0x2c] sm:$0xf]
      %v1069 = vld [vmem:[%s206 + $0x30] sm:$0xf]
      %v1070 = vld [vmem:[%s206 + $0x34] sm:$0xf]
      %v1071 = vld [vmem:[%s206 + $0x38] sm:$0xf]
      %v1072 = vld [vmem:[%s206 + $0x3c] sm:$0xf]
      %v1073 = vld [vmem:[%s206 + $0x40] sm:$0xf]
      %v1074 = vld [vmem:[%s206 + $0x44] sm:$0xf]
      %v1075 = vld [vmem:[%s206 + $0x48] sm:$0xf]
      %v1076 = vld [vmem:[%s206 + $0x4c] sm:$0xf]
      %v1077 = vld [vmem:[%s206 + $0x50] sm:$0xf]
      %v1078 = vld [vmem:[%s206 + $0x54] sm:$0xf]
      %v1079 = vld [vmem:[%s206 + $0x58] sm:$0xf]
      %v1080 = vld [vmem:[%s206 + $0x5c] sm:$0xf]
      %v1081 = vld [vmem:[%s206 + $0x60] sm:$0xf]
      %v1082 = vld [vmem:[%s206 + $0x64] sm:$0xf]
      %v1083 = vld [vmem:[%s206 + $0x68] sm:$0xf]
      %v1084 = vld [vmem:[%s206 + $0x6c] sm:$0xf]
      %v1085 = vld [vmem:[%s206 + $0x70] sm:$0xf]
      %v1086 = vld [vmem:[%s206 + $0x74] sm:$0x7]
      %v1087 = vld [vmem:[%s210 + $0xc] sm:$0xf]
      %v1116 = vunpack.c.l.b16 %v1059
      %v1117 = vunpack.c.l.b16 %v1060
      %v1118 = vunpack.c.l.b16 %v1061
      %v1119 = vunpack.c.l.b16 %v1062
      %v1120 = vunpack.c.l.b16 %v1063
      %v1121 = vunpack.c.l.b16 %v1064
      %v1122 = vunpack.c.l.b16 %v1065
      %v1123 = vunpack.c.l.b16 %v1066
      %v1124 = vunpack.c.l.b16 %v1067
      %v1125 = vunpack.c.l.b16 %v1068
      %v1126 = vunpack.c.l.b16 %v1069
      %v1127 = vunpack.c.l.b16 %v1070
      %v1128 = vunpack.c.l.b16 %v1071
      %v1129 = vunpack.c.l.b16 %v1072
      %v1130 = vunpack.c.l.b16 %v1073
      %v1131 = vunpack.c.l.b16 %v1074
      %v1132 = vunpack.c.l.b16 %v1075
      %v1133 = vunpack.c.l.b16 %v1076
      %v1134 = vunpack.c.l.b16 %v1077
      %v1135 = vunpack.c.l.b16 %v1078
      %v1136 = vunpack.c.l.b16 %v1079
      %v1137 = vunpack.c.l.b16 %v1080
      %v1138 = vunpack.c.l.b16 %v1081
      %v1139 = vunpack.c.l.b16 %v1082
      %v1140 = vunpack.c.l.b16 %v1083
      %v1141 = vunpack.c.l.b16 %v1084
      %v1142 = vunpack.c.l.b16 %v1085
      %v1143 = vunpack.c.l.b16 %v1086
      %v1144 = vpack.c.b16 %v1117, %v1116
      %v1145 = vpack.c.b16 %v1119, %v1118
      %v1146 = vpack.c.b16 %v1121, %v1120
      %v1147 = vpack.c.b16 %v1123, %v1122
      %v1148 = vpack.c.b16 %v1125, %v1124
      %v1149 = vpack.c.b16 %v1127, %v1126
      %v1150 = vpack.c.b16 %v1129, %v1128
      %v1151 = vpack.c.b16 %v1131, %v1130
      %v1152 = vpack.c.b16 %v1133, %v1132
      %v1153 = vpack.c.b16 %v1135, %v1134
      %v1154 = vpack.c.b16 %v1137, %v1136
      %v1155 = vpack.c.b16 %v1139, %v1138
      %v1156 = vpack.c.b16 %v1141, %v1140
      %v1157 = vpack.c.b16 %v1143, %v1142
      %v1159 = vsel %vm436, %v1144, 0
      %v1162 = vsel %vm436, %v1145, 0
      %v1165 = vsel %vm436, %v1146, 0
      %v1168 = vsel %vm436, %v1147, 0
      %v1171 = vsel %vm436, %v1148, 0
      %v1174 = vsel %vm436, %v1149, 0
      %v1177 = vsel %vm436, %v1150, 0
      %v1180 = vsel %vm436, %v1151, 0
      %v1183 = vsel %vm436, %v1152, 0
      %v1186 = vsel %vm436, %v1153, 0
      %v1189 = vsel %vm436, %v1154, 0
      %v1192 = vsel %vm436, %v1155, 0
      %v1195 = vsel %vm436, %v1156, 0
      %v1198 = vsel %vm436, %v1157, 0
      %v1201 = vsel %vm479, %v1087, 0
      %1203 = vmatprep.subr.bf16.mxu0 0
      %1204 = vmatpush1.bf16.msra.mxu0 0
      %1205 = vmatprep.subr.bf16.mxu0 0
      %1206 = vmatpush1.bf16.msra.mxu0 0
      %1207 = vmatprep.subr.bf16.mxu0 0
      %1208 = vmatpush1.bf16.msra.mxu0 0
      %1209 = vmatprep.subr.bf16.mxu0 0
      %1210 = vmatpush1.bf16.msra.mxu0 0
      %1211 = vmatprep.subr.bf16.mxu0 0
      %1212 = vmatpush1.bf16.msra.mxu0 0
      %1213 = vmatprep.subr.bf16.mxu0 0
      %1214 = vmatpush1.bf16.msra.mxu0 0
      %1215 = vmatprep.subr.bf16.mxu0 0
      %1216 = vmatpush1.bf16.msra.mxu0 0
      %1217 = vmatprep.subr.bf16.mxu0 0
      %1218 = vmatpush1.bf16.msra.mxu0 %v1201
      %1219 = vmatprep.subr.bf16.mxu0 0
      %1220 = vmatpush2.bf16.msra.mxu0 0
      %1221 = vmatprep.subr.bf16.mxu0 0
      %1222 = vmatpush2.bf16.msra.mxu0 0
      %1223 = vmatprep.subr.bf16.mxu0 0
      %1224 = vmatpush2.bf16.msra.mxu0 0
      %1225 = vmatprep.subr.bf16.mxu0 0
      %1226 = vmatpush2.bf16.msra.mxu0 0
      %1227 = vmatprep.subr.bf16.mxu0 0
      %1228 = vmatpush2.bf16.msra.mxu0 0
      %1229 = vmatprep.subr.bf16.mxu0 0
      %1230 = vmatpush2.bf16.msra.mxu0 0
      %1231 = vmatprep.subr.bf16.mxu0 0
      %1232 = vmatpush2.bf16.msra.mxu0 0
      %1233 = vmatprep.subr.bf16.mxu0 0
      %1234 = vmatpush2.bf16.msra.mxu0 0
      %1235 = vmatprep.mubr.bf16.mxu0 0
      %1236 = vmatmul.mubr.bf16.gmra.mxu0 %v1159
      %v1237 = vpop.f32.mrf.mxu0
      %v1238 = vadd.f32 0.0, %v1237
      %v1239 = vpop.f32.mrf.mxu0
      %v1240 = vpop.f32.mrf.mxu0
      %v1241 = vadd.f32 0.0, %v1240
      %v1242 = vpop.f32.mrf.mxu0
      %1243 = vmatprep.mubr.bf16.mxu0 0
      %1244 = vmatmul.mubr.bf16.gmra.mxu0 %v1162
      %v1245 = vpop.f32.mrf.mxu0
      %v1246 = vadd.f32 0.0, %v1245
      %v1247 = vpop.f32.mrf.mxu0
      %v1248 = vpop.f32.mrf.mxu0
      %v1249 = vadd.f32 0.0, %v1248
      %v1250 = vpop.f32.mrf.mxu0
      %1251 = vmatprep.mubr.bf16.mxu0 0
      %1252 = vmatmul.mubr.bf16.gmra.mxu0 %v1165
      %v1253 = vpop.f32.mrf.mxu0
      %v1254 = vadd.f32 0.0, %v1253
      %v1255 = vpop.f32.mrf.mxu0
      %v1256 = vpop.f32.mrf.mxu0
      %v1257 = vadd.f32 0.0, %v1256
      %v1258 = vpop.f32.mrf.mxu0
      %1259 = vmatprep.mubr.bf16.mxu0 0
      %1260 = vmatmul.mubr.bf16.gmra.mxu0 %v1168
      %v1261 = vpop.f32.mrf.mxu0
      %v1262 = vadd.f32 0.0, %v1261
      %v1263 = vpop.f32.mrf.mxu0
      %v1264 = vpop.f32.mrf.mxu0
      %v1265 = vadd.f32 0.0, %v1264
      %v1266 = vpop.f32.mrf.mxu0
      %1267 = vmatprep.mubr.bf16.mxu0 0
      %1268 = vmatmul.mubr.bf16.gmra.mxu0 %v1171
      %v1269 = vpop.f32.mrf.mxu0
      %v1270 = vadd.f32 0.0, %v1269
      %v1271 = vpop.f32.mrf.mxu0
      %v1272 = vpop.f32.mrf.mxu0
      %v1273 = vadd.f32 0.0, %v1272
      %v1274 = vpop.f32.mrf.mxu0
      %1275 = vmatprep.mubr.bf16.mxu0 0
      %1276 = vmatmul.mubr.bf16.gmra.mxu0 %v1174
      %v1277 = vpop.f32.mrf.mxu0
      %v1278 = vadd.f32 0.0, %v1277
      %v1279 = vpop.f32.mrf.mxu0
      %v1280 = vpop.f32.mrf.mxu0
      %v1281 = vadd.f32 0.0, %v1280
      %v1282 = vpop.f32.mrf.mxu0
      %1283 = vmatprep.mubr.bf16.mxu0 0
      %1284 = vmatmul.mubr.bf16.gmra.mxu0 %v1177
      %v1285 = vpop.f32.mrf.mxu0
      %v1286 = vadd.f32 0.0, %v1285
      %v1287 = vpop.f32.mrf.mxu0
      %v1288 = vpop.f32.mrf.mxu0
      %v1289 = vadd.f32 0.0, %v1288
      %v1290 = vpop.f32.mrf.mxu0
      %1291 = vmatprep.mubr.bf16.mxu0 0
      %1292 = vmatmul.mubr.bf16.gmra.mxu0 %v1180
      %v1293 = vpop.f32.mrf.mxu0
      %v1294 = vadd.f32 0.0, %v1293
      %v1295 = vpop.f32.mrf.mxu0
      %v1296 = vpop.f32.mrf.mxu0
      %v1297 = vadd.f32 0.0, %v1296
      %v1298 = vpop.f32.mrf.mxu0
      %1299 = vmatprep.mubr.bf16.mxu0 0
      %1300 = vmatmul.mubr.bf16.gmra.mxu0 %v1183
      %v1301 = vpop.f32.mrf.mxu0
      %v1302 = vadd.f32 0.0, %v1301
      %v1303 = vpop.f32.mrf.mxu0
      %v1304 = vpop.f32.mrf.mxu0
      %v1305 = vadd.f32 0.0, %v1304
      %v1306 = vpop.f32.mrf.mxu0
      %1307 = vmatprep.mubr.bf16.mxu0 0
      %1308 = vmatmul.mubr.bf16.gmra.mxu0 %v1186
      %v1309 = vpop.f32.mrf.mxu0
      %v1310 = vadd.f32 0.0, %v1309
      %v1311 = vpop.f32.mrf.mxu0
      %v1312 = vpop.f32.mrf.mxu0
      %v1313 = vadd.f32 0.0, %v1312
      %v1314 = vpop.f32.mrf.mxu0
      %1315 = vmatprep.mubr.bf16.mxu0 0
      %1316 = vmatmul.mubr.bf16.gmra.mxu0 %v1189
      %v1317 = vpop.f32.mrf.mxu0
      %v1318 = vadd.f32 0.0, %v1317
      %v1319 = vpop.f32.mrf.mxu0
      %v1320 = vpop.f32.mrf.mxu0
      %v1321 = vadd.f32 0.0, %v1320
      %v1322 = vpop.f32.mrf.mxu0
      %1323 = vmatprep.mubr.bf16.mxu0 0
      %1324 = vmatmul.mubr.bf16.gmra.mxu0 %v1192
      %v1325 = vpop.f32.mrf.mxu0
      %v1326 = vadd.f32 0.0, %v1325
      %v1327 = vpop.f32.mrf.mxu0
      %v1328 = vpop.f32.mrf.mxu0
      %v1329 = vadd.f32 0.0, %v1328
      %v1330 = vpop.f32.mrf.mxu0
      %1331 = vmatprep.mubr.bf16.mxu0 0
      %1332 = vmatmul.mubr.bf16.gmra.mxu0 %v1195
      %v1333 = vpop.f32.mrf.mxu0
      %v1334 = vadd.f32 0.0, %v1333
      %v1335 = vpop.f32.mrf.mxu0
      %v1336 = vpop.f32.mrf.mxu0
      %v1337 = vadd.f32 0.0, %v1336
      %v1338 = vpop.f32.mrf.mxu0
      %1339 = vmatprep.mubr.bf16.mxu0 0
      %1340 = vmatmul.mubr.bf16.gmra.mxu0 %v1198
      %v1341 = vpop.f32.mrf.mxu0
      %v1342 = vadd.f32 0.0, %v1341
      %v1343 = vpop.f32.mrf.mxu0
      %v1344 = vpop.f32.mrf.mxu0
      %v1345 = vadd.f32 0.0, %v1344
      %v1346 = vpop.f32.mrf.mxu0
      %1347 = vdwg.mxu0
      %v1348 = vadd.f32 %v1031, %v1238
      %v1349 = vadd.f32 %v1032, %v1241
      %v1350 = vadd.f32 %v1033, %v1246
      %v1351 = vadd.f32 %v1034, %v1249
      %v1352 = vadd.f32 %v1035, %v1254
      %v1353 = vadd.f32 %v1036, %v1257
      %v1354 = vadd.f32 %v1037, %v1262
      %v1355 = vadd.f32 %v1038, %v1265
      %v1356 = vadd.f32 %v1039, %v1270
      %v1357 = vadd.f32 %v1040, %v1273
      %v1358 = vadd.f32 %v1041, %v1278
      %v1359 = vadd.f32 %v1042, %v1281
      %v1360 = vadd.f32 %v1043, %v1286
      %v1361 = vadd.f32 %v1044, %v1289
      %v1362 = vadd.f32 %v1045, %v1294
      %v1363 = vadd.f32 %v1046, %v1297
      %v1364 = vadd.f32 %v1047, %v1302
      %v1365 = vadd.f32 %v1048, %v1305
      %v1366 = vadd.f32 %v1049, %v1310
      %v1367 = vadd.f32 %v1050, %v1313
      %v1368 = vadd.f32 %v1051, %v1318
      %v1369 = vadd.f32 %v1052, %v1321
      %v1370 = vadd.f32 %v1053, %v1326
      %v1371 = vadd.f32 %v1054, %v1329
      %v1372 = vadd.f32 %v1055, %v1334
      %v1373 = vadd.f32 %v1056, %v1337
      %v1374 = vadd.f32 %v1057, %v1342
      %v1375 = vadd.f32 %v1058, %v1345
      %v1376 = vld [vmem:[%s206 + $0x74] sm:$0xf]
      %v1377 = vld [vmem:[%s210 + $0x10] sm:$0xf]
      %v1379 = vunpack.c.l.b16 %v1376
      %v1380 = vpack.c.b16 %v1379, %v1142
      %v1381 = vshrl.u32 %v1144, 16
      %v1383 = vshll.u32 %v1144, 16
      %v1385 = vrot.slane %v1383, 1
      %v1386 = vor.u32 %v1381, %v1385
      %v1387 = vshll.u32 %v1145, 16
      %v1389 = vrot.slane %v1387, 1
      %v1390 = vsel %vm324, %v1386, %v1389
      %v1391 = vshrl.u32 %v1145, 16
      %v1393 = vor.u32 %v1391, %v1389
      %v1394 = vshll.u32 %v1146, 16
      %v1396 = vrot.slane %v1394, 1
      %v1397 = vsel %vm324, %v1393, %v1396
      %v1398 = vshrl.u32 %v1146, 16
      %v1400 = vor.u32 %v1398, %v1396
      %v1401 = vshll.u32 %v1147, 16
      %v1403 = vrot.slane %v1401, 1
      %v1404 = vsel %vm324, %v1400, %v1403
      %v1405 = vshrl.u32 %v1147, 16
      %v1407 = vor.u32 %v1405, %v1403
      %v1408 = vshll.u32 %v1148, 16
      %v1410 = vrot.slane %v1408, 1
      %v1411 = vsel %vm324, %v1407, %v1410
      %v1412 = vshrl.u32 %v1148, 16
      %v1414 = vor.u32 %v1412, %v1410
      %v1415 = vshll.u32 %v1149, 16
      %v1417 = vrot.slane %v1415, 1
      %v1418 = vsel %vm324, %v1414, %v1417
      %v1419 = vshrl.u32 %v1149, 16
      %v1421 = vor.u32 %v1419, %v1417
      %v1422 = vshll.u32 %v1150, 16
      %v1424 = vrot.slane %v1422, 1
      %v1425 = vsel %vm324, %v1421, %v1424
      %v1426 = vshrl.u32 %v1150, 16
      %v1428 = vor.u32 %v1426, %v1424
      %v1429 = vshll.u32 %v1151, 16
      %v1431 = vrot.slane %v1429, 1
      %v1432 = vsel %vm324, %v1428, %v1431
      %v1433 = vshrl.u32 %v1151, 16
      %v1435 = vor.u32 %v1433, %v1431
      %v1436 = vshll.u32 %v1152, 16
      %v1438 = vrot.slane %v1436, 1
      %v1439 = vsel %vm324, %v1435, %v1438
      %v1440 = vshrl.u32 %v1152, 16
      %v1442 = vor.u32 %v1440, %v1438
      %v1443 = vshll.u32 %v1153, 16
      %v1445 = vrot.slane %v1443, 1
      %v1446 = vsel %vm324, %v1442, %v1445
      %v1447 = vshrl.u32 %v1153, 16
      %v1449 = vor.u32 %v1447, %v1445
      %v1450 = vshll.u32 %v1154, 16
      %v1452 = vrot.slane %v1450, 1
      %v1453 = vsel %vm324, %v1449, %v1452
      %v1454 = vshrl.u32 %v1154, 16
      %v1456 = vor.u32 %v1454, %v1452
      %v1457 = vshll.u32 %v1155, 16
      %v1459 = vrot.slane %v1457, 1
      %v1460 = vsel %vm324, %v1456, %v1459
      %v1461 = vshrl.u32 %v1155, 16
      %v1463 = vor.u32 %v1461, %v1459
      %v1464 = vshll.u32 %v1156, 16
      %v1466 = vrot.slane %v1464, 1
      %v1467 = vsel %vm324, %v1463, %v1466
      %v1468 = vshrl.u32 %v1156, 16
      %v1470 = vor.u32 %v1468, %v1466
      %v1472 = vshll.u32 %v1380, 16
      %v1474 = vrot.slane %v1472, 1
      %v1475 = vsel %vm324, %v1470, %v1474
      %v1476 = vshrl.u32 %v1380, 16
      %v1478 = vor.u32 %v1476, %v1474
      %v1480 = vsel %vm436, %v1390, 0
      %v1483 = vsel %vm436, %v1397, 0
      %v1486 = vsel %vm436, %v1404, 0
      %v1489 = vsel %vm436, %v1411, 0
      %v1492 = vsel %vm436, %v1418, 0
      %v1495 = vsel %vm436, %v1425, 0
      %v1498 = vsel %vm436, %v1432, 0
      %v1501 = vsel %vm436, %v1439, 0
      %v1504 = vsel %vm436, %v1446, 0
      %v1507 = vsel %vm436, %v1453, 0
      %v1510 = vsel %vm436, %v1460, 0
      %v1513 = vsel %vm436, %v1467, 0
      %v1516 = vsel %vm436, %v1475, 0
      %v1519 = vsel %vm436, %v1478, 0
      %v1522 = vsel %vm479, %v1377, 0
      %1524 = vmatprep.subr.bf16.mxu0 0
      %1525 = vmatpush1.bf16.msra.mxu0 0
      %1526 = vmatprep.subr.bf16.mxu0 0
      %1527 = vmatpush1.bf16.msra.mxu0 0
      %1528 = vmatprep.subr.bf16.mxu0 0
      %1529 = vmatpush1.bf16.msra.mxu0 0
      %1530 = vmatprep.subr.bf16.mxu0 0
      %1531 = vmatpush1.bf16.msra.mxu0 0
      %1532 = vmatprep.subr.bf16.mxu0 0
      %1533 = vmatpush1.bf16.msra.mxu0 0
      %1534 = vmatprep.subr.bf16.mxu0 0
      %1535 = vmatpush1.bf16.msra.mxu0 0
      %1536 = vmatprep.subr.bf16.mxu0 0
      %1537 = vmatpush1.bf16.msra.mxu0 0
      %1538 = vmatprep.subr.bf16.mxu0 0
      %1539 = vmatpush1.bf16.msra.mxu0 %v1522
      %1540 = vmatprep.subr.bf16.mxu0 0
      %1541 = vmatpush2.bf16.msra.mxu0 0
      %1542 = vmatprep.subr.bf16.mxu0 0
      %1543 = vmatpush2.bf16.msra.mxu0 0
      %1544 = vmatprep.subr.bf16.mxu0 0
      %1545 = vmatpush2.bf16.msra.mxu0 0
      %1546 = vmatprep.subr.bf16.mxu0 0
      %1547 = vmatpush2.bf16.msra.mxu0 0
      %1548 = vmatprep.subr.bf16.mxu0 0
      %1549 = vmatpush2.bf16.msra.mxu0 0
      %1550 = vmatprep.subr.bf16.mxu0 0
      %1551 = vmatpush2.bf16.msra.mxu0 0
      %1552 = vmatprep.subr.bf16.mxu0 0
      %1553 = vmatpush2.bf16.msra.mxu0 0
      %1554 = vmatprep.subr.bf16.mxu0 0
      %1555 = vmatpush2.bf16.msra.mxu0 0
      %1556 = vmatprep.mubr.bf16.mxu0 0
      %1557 = vmatmul.mubr.bf16.gmra.mxu0 %v1480
      %v1558 = vpop.f32.mrf.mxu0
      %v1559 = vadd.f32 0.0, %v1558
      %v1560 = vpop.f32.mrf.mxu0
      %v1561 = vpop.f32.mrf.mxu0
      %v1562 = vadd.f32 0.0, %v1561
      %v1563 = vpop.f32.mrf.mxu0
      %1564 = vmatprep.mubr.bf16.mxu0 0
      %1565 = vmatmul.mubr.bf16.gmra.mxu0 %v1483
      %v1566 = vpop.f32.mrf.mxu0
      %v1567 = vadd.f32 0.0, %v1566
      %v1568 = vpop.f32.mrf.mxu0
      %v1569 = vpop.f32.mrf.mxu0
      %v1570 = vadd.f32 0.0, %v1569
      %v1571 = vpop.f32.mrf.mxu0
      %1572 = vmatprep.mubr.bf16.mxu0 0
      %1573 = vmatmul.mubr.bf16.gmra.mxu0 %v1486
      %v1574 = vpop.f32.mrf.mxu0
      %v1575 = vadd.f32 0.0, %v1574
      %v1576 = vpop.f32.mrf.mxu0
      %v1577 = vpop.f32.mrf.mxu0
      %v1578 = vadd.f32 0.0, %v1577
      %v1579 = vpop.f32.mrf.mxu0
      %1580 = vmatprep.mubr.bf16.mxu0 0
      %1581 = vmatmul.mubr.bf16.gmra.mxu0 %v1489
      %v1582 = vpop.f32.mrf.mxu0
      %v1583 = vadd.f32 0.0, %v1582
      %v1584 = vpop.f32.mrf.mxu0
      %v1585 = vpop.f32.mrf.mxu0
      %v1586 = vadd.f32 0.0, %v1585
      %v1587 = vpop.f32.mrf.mxu0
      %1588 = vmatprep.mubr.bf16.mxu0 0
      %1589 = vmatmul.mubr.bf16.gmra.mxu0 %v1492
      %v1590 = vpop.f32.mrf.mxu0
      %v1591 = vadd.f32 0.0, %v1590
      %v1592 = vpop.f32.mrf.mxu0
      %v1593 = vpop.f32.mrf.mxu0
      %v1594 = vadd.f32 0.0, %v1593
      %v1595 = vpop.f32.mrf.mxu0
      %1596 = vmatprep.mubr.bf16.mxu0 0
      %1597 = vmatmul.mubr.bf16.gmra.mxu0 %v1495
      %v1598 = vpop.f32.mrf.mxu0
      %v1599 = vadd.f32 0.0, %v1598
      %v1600 = vpop.f32.mrf.mxu0
      %v1601 = vpop.f32.mrf.mxu0
      %v1602 = vadd.f32 0.0, %v1601
      %v1603 = vpop.f32.mrf.mxu0
      %1604 = vmatprep.mubr.bf16.mxu0 0
      %1605 = vmatmul.mubr.bf16.gmra.mxu0 %v1498
      %v1606 = vpop.f32.mrf.mxu0
      %v1607 = vadd.f32 0.0, %v1606
      %v1608 = vpop.f32.mrf.mxu0
      %v1609 = vpop.f32.mrf.mxu0
      %v1610 = vadd.f32 0.0, %v1609
      %v1611 = vpop.f32.mrf.mxu0
      %1612 = vmatprep.mubr.bf16.mxu0 0
      %1613 = vmatmul.mubr.bf16.gmra.mxu0 %v1501
      %v1614 = vpop.f32.mrf.mxu0
      %v1615 = vadd.f32 0.0, %v1614
      %v1616 = vpop.f32.mrf.mxu0
      %v1617 = vpop.f32.mrf.mxu0
      %v1618 = vadd.f32 0.0, %v1617
      %v1619 = vpop.f32.mrf.mxu0
      %1620 = vmatprep.mubr.bf16.mxu0 0
      %1621 = vmatmul.mubr.bf16.gmra.mxu0 %v1504
      %v1622 = vpop.f32.mrf.mxu0
      %v1623 = vadd.f32 0.0, %v1622
      %v1624 = vpop.f32.mrf.mxu0
      %v1625 = vpop.f32.mrf.mxu0
      %v1626 = vadd.f32 0.0, %v1625
      %v1627 = vpop.f32.mrf.mxu0
      %1628 = vmatprep.mubr.bf16.mxu0 0
      %1629 = vmatmul.mubr.bf16.gmra.mxu0 %v1507
      %v1630 = vpop.f32.mrf.mxu0
      %v1631 = vadd.f32 0.0, %v1630
      %v1632 = vpop.f32.mrf.mxu0
      %v1633 = vpop.f32.mrf.mxu0
      %v1634 = vadd.f32 0.0, %v1633
      %v1635 = vpop.f32.mrf.mxu0
      %1636 = vmatprep.mubr.bf16.mxu0 0
      %1637 = vmatmul.mubr.bf16.gmra.mxu0 %v1510
      %v1638 = vpop.f32.mrf.mxu0
      %v1639 = vadd.f32 0.0, %v1638
      %v1640 = vpop.f32.mrf.mxu0
      %v1641 = vpop.f32.mrf.mxu0
      %v1642 = vadd.f32 0.0, %v1641
      %v1643 = vpop.f32.mrf.mxu0
      %1644 = vmatprep.mubr.bf16.mxu0 0
      %1645 = vmatmul.mubr.bf16.gmra.mxu0 %v1513
      %v1646 = vpop.f32.mrf.mxu0
      %v1647 = vadd.f32 0.0, %v1646
      %v1648 = vpop.f32.mrf.mxu0
      %v1649 = vpop.f32.mrf.mxu0
      %v1650 = vadd.f32 0.0, %v1649
      %v1651 = vpop.f32.mrf.mxu0
      %1652 = vmatprep.mubr.bf16.mxu0 0
      %1653 = vmatmul.mubr.bf16.gmra.mxu0 %v1516
      %v1654 = vpop.f32.mrf.mxu0
      %v1655 = vadd.f32 0.0, %v1654
      %v1656 = vpop.f32.mrf.mxu0
      %v1657 = vpop.f32.mrf.mxu0
      %v1658 = vadd.f32 0.0, %v1657
      %v1659 = vpop.f32.mrf.mxu0
      %1660 = vmatprep.mubr.bf16.mxu0 0
      %1661 = vmatmul.mubr.bf16.gmra.mxu0 %v1519
      %v1662 = vpop.f32.mrf.mxu0
      %v1663 = vadd.f32 0.0, %v1662
      %v1664 = vpop.f32.mrf.mxu0
      %v1665 = vpop.f32.mrf.mxu0
      %v1666 = vadd.f32 0.0, %v1665
      %v1667 = vpop.f32.mrf.mxu0
      %1668 = vdwg.mxu0
      %v1669 = vadd.f32 %v1348, %v1559
      %v1670 = vadd.f32 %v1349, %v1562
      %v1671 = vadd.f32 %v1350, %v1567
      %v1672 = vadd.f32 %v1351, %v1570
      %v1673 = vadd.f32 %v1352, %v1575
      %v1674 = vadd.f32 %v1353, %v1578
      %v1675 = vadd.f32 %v1354, %v1583
      %v1676 = vadd.f32 %v1355, %v1586
      %v1677 = vadd.f32 %v1356, %v1591
      %v1678 = vadd.f32 %v1357, %v1594
      %v1679 = vadd.f32 %v1358, %v1599
      %v1680 = vadd.f32 %v1359, %v1602
      %v1681 = vadd.f32 %v1360, %v1607
      %v1682 = vadd.f32 %v1361, %v1610
      %v1683 = vadd.f32 %v1362, %v1615
      %v1684 = vadd.f32 %v1363, %v1618
      %v1685 = vadd.f32 %v1364, %v1623
      %v1686 = vadd.f32 %v1365, %v1626
      %v1687 = vadd.f32 %v1366, %v1631
      %v1688 = vadd.f32 %v1367, %v1634
      %v1689 = vadd.f32 %v1368, %v1639
      %v1690 = vadd.f32 %v1369, %v1642
      %v1691 = vadd.f32 %v1370, %v1647
      %v1692 = vadd.f32 %v1371, %v1650
      %v1693 = vadd.f32 %v1372, %v1655
      %v1694 = vadd.f32 %v1373, %v1658
      %v1695 = vadd.f32 %v1374, %v1663
      %v1696 = vadd.f32 %v1375, %v1666
      %v1697 = vld [vmem:[%s206 + $0x8] sm:$0xe]
      %v1698 = vld [vmem:[%s210 + $0x14] sm:$0xf]
      %v1700 = vunpack.c.l.b16 %v1697
      %v1701 = vpack.c.b16 %v1117, %v1700
      %v1702 = vrot.slane %v1701, 1
      %v1703 = vrot.slane %v1145, 1
      %v1704 = vsel %vm813, %v1702, %v1703
      %v1705 = vrot.slane %v1146, 1
      %v1706 = vsel %vm813, %v1703, %v1705
      %v1707 = vrot.slane %v1147, 1
      %v1708 = vsel %vm813, %v1705, %v1707
      %v1709 = vrot.slane %v1148, 1
      %v1710 = vsel %vm813, %v1707, %v1709
      %v1711 = vrot.slane %v1149, 1
      %v1712 = vsel %vm813, %v1709, %v1711
      %v1713 = vrot.slane %v1150, 1
      %v1714 = vsel %vm813, %v1711, %v1713
      %v1715 = vrot.slane %v1151, 1
      %v1716 = vsel %vm813, %v1713, %v1715
      %v1717 = vrot.slane %v1152, 1
      %v1718 = vsel %vm813, %v1715, %v1717
      %v1719 = vrot.slane %v1153, 1
      %v1720 = vsel %vm813, %v1717, %v1719
      %v1721 = vrot.slane %v1154, 1
      %v1722 = vsel %vm813, %v1719, %v1721
      %v1723 = vrot.slane %v1155, 1
      %v1724 = vsel %vm813, %v1721, %v1723
      %v1725 = vrot.slane %v1156, 1
      %v1726 = vsel %vm813, %v1723, %v1725
      %v1727 = vrot.slane %v1380, 1
      %v1728 = vsel %vm813, %v1725, %v1727
      %v1730 = vsel %vm436, %v1704, 0
      %v1733 = vsel %vm436, %v1706, 0
      %v1736 = vsel %vm436, %v1708, 0
      %v1739 = vsel %vm436, %v1710, 0
      %v1742 = vsel %vm436, %v1712, 0
      %v1745 = vsel %vm436, %v1714, 0
      %v1748 = vsel %vm436, %v1716, 0
      %v1751 = vsel %vm436, %v1718, 0
      %v1754 = vsel %vm436, %v1720, 0
      %v1757 = vsel %vm436, %v1722, 0
      %v1760 = vsel %vm436, %v1724, 0
      %v1763 = vsel %vm436, %v1726, 0
      %v1766 = vsel %vm436, %v1728, 0
      %v1769 = vsel %vm436, %v1727, 0
      %v1772 = vsel %vm479, %v1698, 0
      %1774 = vmatprep.subr.bf16.mxu0 0
      %1775 = vmatpush1.bf16.msra.mxu0 0
      %1776 = vmatprep.subr.bf16.mxu0 0
      %1777 = vmatpush1.bf16.msra.mxu0 0
      %1778 = vmatprep.subr.bf16.mxu0 0
      %1779 = vmatpush1.bf16.msra.mxu0 0
      %1780 = vmatprep.subr.bf16.mxu0 0
      %1781 = vmatpush1.bf16.msra.mxu0 0
      %1782 = vmatprep.subr.bf16.mxu0 0
      %1783 = vmatpush1.bf16.msra.mxu0 0
      %1784 = vmatprep.subr.bf16.mxu0 0
      %1785 = vmatpush1.bf16.msra.mxu0 0
      %1786 = vmatprep.subr.bf16.mxu0 0
      %1787 = vmatpush1.bf16.msra.mxu0 0
      %1788 = vmatprep.subr.bf16.mxu0 0
      %1789 = vmatpush1.bf16.msra.mxu0 %v1772
      %1790 = vmatprep.subr.bf16.mxu0 0
      %1791 = vmatpush2.bf16.msra.mxu0 0
      %1792 = vmatprep.subr.bf16.mxu0 0
      %1793 = vmatpush2.bf16.msra.mxu0 0
      %1794 = vmatprep.subr.bf16.mxu0 0
      %1795 = vmatpush2.bf16.msra.mxu0 0
      %1796 = vmatprep.subr.bf16.mxu0 0
      %1797 = vmatpush2.bf16.msra.mxu0 0
      %1798 = vmatprep.subr.bf16.mxu0 0
      %1799 = vmatpush2.bf16.msra.mxu0 0
      %1800 = vmatprep.subr.bf16.mxu0 0
      %1801 = vmatpush2.bf16.msra.mxu0 0
      %1802 = vmatprep.subr.bf16.mxu0 0
      %1803 = vmatpush2.bf16.msra.mxu0 0
      %1804 = vmatprep.subr.bf16.mxu0 0
      %1805 = vmatpush2.bf16.msra.mxu0 0
      %1806 = vmatprep.mubr.bf16.mxu0 0
      %1807 = vmatmul.mubr.bf16.gmra.mxu0 %v1730
      %v1808 = vpop.f32.mrf.mxu0
      %v1809 = vadd.f32 0.0, %v1808
      %v1810 = vpop.f32.mrf.mxu0
      %v1811 = vpop.f32.mrf.mxu0
      %v1812 = vadd.f32 0.0, %v1811
      %v1813 = vpop.f32.mrf.mxu0
      %1814 = vmatprep.mubr.bf16.mxu0 0
      %1815 = vmatmul.mubr.bf16.gmra.mxu0 %v1733
      %v1816 = vpop.f32.mrf.mxu0
      %v1817 = vadd.f32 0.0, %v1816
      %v1818 = vpop.f32.mrf.mxu0
      %v1819 = vpop.f32.mrf.mxu0
      %v1820 = vadd.f32 0.0, %v1819
      %v1821 = vpop.f32.mrf.mxu0
      %1822 = vmatprep.mubr.bf16.mxu0 0
      %1823 = vmatmul.mubr.bf16.gmra.mxu0 %v1736
      %v1824 = vpop.f32.mrf.mxu0
      %v1825 = vadd.f32 0.0, %v1824
      %v1826 = vpop.f32.mrf.mxu0
      %v1827 = vpop.f32.mrf.mxu0
      %v1828 = vadd.f32 0.0, %v1827
      %v1829 = vpop.f32.mrf.mxu0
      %1830 = vmatprep.mubr.bf16.mxu0 0
      %1831 = vmatmul.mubr.bf16.gmra.mxu0 %v1739
      %v1832 = vpop.f32.mrf.mxu0
      %v1833 = vadd.f32 0.0, %v1832
      %v1834 = vpop.f32.mrf.mxu0
      %v1835 = vpop.f32.mrf.mxu0
      %v1836 = vadd.f32 0.0, %v1835
      %v1837 = vpop.f32.mrf.mxu0
      %1838 = vmatprep.mubr.bf16.mxu0 0
      %1839 = vmatmul.mubr.bf16.gmra.mxu0 %v1742
      %v1840 = vpop.f32.mrf.mxu0
      %v1841 = vadd.f32 0.0, %v1840
      %v1842 = vpop.f32.mrf.mxu0
      %v1843 = vpop.f32.mrf.mxu0
      %v1844 = vadd.f32 0.0, %v1843
      %v1845 = vpop.f32.mrf.mxu0
      %1846 = vmatprep.mubr.bf16.mxu0 0
      %1847 = vmatmul.mubr.bf16.gmra.mxu0 %v1745
      %v1848 = vpop.f32.mrf.mxu0
      %v1849 = vadd.f32 0.0, %v1848
      %v1850 = vpop.f32.mrf.mxu0
      %v1851 = vpop.f32.mrf.mxu0
      %v1852 = vadd.f32 0.0, %v1851
      %v1853 = vpop.f32.mrf.mxu0
      %1854 = vmatprep.mubr.bf16.mxu0 0
      %1855 = vmatmul.mubr.bf16.gmra.mxu0 %v1748
      %v1856 = vpop.f32.mrf.mxu0
      %v1857 = vadd.f32 0.0, %v1856
      %v1858 = vpop.f32.mrf.mxu0
      %v1859 = vpop.f32.mrf.mxu0
      %v1860 = vadd.f32 0.0, %v1859
      %v1861 = vpop.f32.mrf.mxu0
      %1862 = vmatprep.mubr.bf16.mxu0 0
      %1863 = vmatmul.mubr.bf16.gmra.mxu0 %v1751
      %v1864 = vpop.f32.mrf.mxu0
      %v1865 = vadd.f32 0.0, %v1864
      %v1866 = vpop.f32.mrf.mxu0
      %v1867 = vpop.f32.mrf.mxu0
      %v1868 = vadd.f32 0.0, %v1867
      %v1869 = vpop.f32.mrf.mxu0
      %1870 = vmatprep.mubr.bf16.mxu0 0
      %1871 = vmatmul.mubr.bf16.gmra.mxu0 %v1754
      %v1872 = vpop.f32.mrf.mxu0
      %v1873 = vadd.f32 0.0, %v1872
      %v1874 = vpop.f32.mrf.mxu0
      %v1875 = vpop.f32.mrf.mxu0
      %v1876 = vadd.f32 0.0, %v1875
      %v1877 = vpop.f32.mrf.mxu0
      %1878 = vmatprep.mubr.bf16.mxu0 0
      %1879 = vmatmul.mubr.bf16.gmra.mxu0 %v1757
      %v1880 = vpop.f32.mrf.mxu0
      %v1881 = vadd.f32 0.0, %v1880
      %v1882 = vpop.f32.mrf.mxu0
      %v1883 = vpop.f32.mrf.mxu0
      %v1884 = vadd.f32 0.0, %v1883
      %v1885 = vpop.f32.mrf.mxu0
      %1886 = vmatprep.mubr.bf16.mxu0 0
      %1887 = vmatmul.mubr.bf16.gmra.mxu0 %v1760
      %v1888 = vpop.f32.mrf.mxu0
      %v1889 = vadd.f32 0.0, %v1888
      %v1890 = vpop.f32.mrf.mxu0
      %v1891 = vpop.f32.mrf.mxu0
      %v1892 = vadd.f32 0.0, %v1891
      %v1893 = vpop.f32.mrf.mxu0
      %1894 = vmatprep.mubr.bf16.mxu0 0
      %1895 = vmatmul.mubr.bf16.gmra.mxu0 %v1763
      %v1896 = vpop.f32.mrf.mxu0
      %v1897 = vadd.f32 0.0, %v1896
      %v1898 = vpop.f32.mrf.mxu0
      %v1899 = vpop.f32.mrf.mxu0
      %v1900 = vadd.f32 0.0, %v1899
      %v1901 = vpop.f32.mrf.mxu0
      %1902 = vmatprep.mubr.bf16.mxu0 0
      %1903 = vmatmul.mubr.bf16.gmra.mxu0 %v1766
      %v1904 = vpop.f32.mrf.mxu0
      %v1905 = vadd.f32 0.0, %v1904
      %v1906 = vpop.f32.mrf.mxu0
      %v1907 = vpop.f32.mrf.mxu0
      %v1908 = vadd.f32 0.0, %v1907
      %v1909 = vpop.f32.mrf.mxu0
      %1910 = vmatprep.mubr.bf16.mxu0 0
      %1911 = vmatmul.mubr.bf16.gmra.mxu0 %v1769
      %v1912 = vpop.f32.mrf.mxu0
      %v1913 = vadd.f32 0.0, %v1912
      %v1914 = vpop.f32.mrf.mxu0
      %v1915 = vpop.f32.mrf.mxu0
      %v1916 = vadd.f32 0.0, %v1915
      %v1917 = vpop.f32.mrf.mxu0
      %1918 = vdwg.mxu0
      %v1919 = vadd.f32 %v1669, %v1809
      %v1920 = vadd.f32 %v1670, %v1812
      %v1921 = vadd.f32 %v1671, %v1817
      %v1922 = vadd.f32 %v1672, %v1820
      %v1923 = vadd.f32 %v1673, %v1825
      %v1924 = vadd.f32 %v1674, %v1828
      %v1925 = vadd.f32 %v1675, %v1833
      %v1926 = vadd.f32 %v1676, %v1836
      %v1927 = vadd.f32 %v1677, %v1841
      %v1928 = vadd.f32 %v1678, %v1844
      %v1929 = vadd.f32 %v1679, %v1849
      %v1930 = vadd.f32 %v1680, %v1852
      %v1931 = vadd.f32 %v1681, %v1857
      %v1932 = vadd.f32 %v1682, %v1860
      %v1933 = vadd.f32 %v1683, %v1865
      %v1934 = vadd.f32 %v1684, %v1868
      %v1935 = vadd.f32 %v1685, %v1873
      %v1936 = vadd.f32 %v1686, %v1876
      %v1937 = vadd.f32 %v1687, %v1881
      %v1938 = vadd.f32 %v1688, %v1884
      %v1939 = vadd.f32 %v1689, %v1889
      %v1940 = vadd.f32 %v1690, %v1892
      %v1941 = vadd.f32 %v1691, %v1897
      %v1942 = vadd.f32 %v1692, %v1900
      %v1943 = vadd.f32 %v1693, %v1905
      %v1944 = vadd.f32 %v1694, %v1908
      %v1945 = vadd.f32 %v1695, %v1913
      %v1946 = vadd.f32 %v1696, %v1916
      %v1947 = vld [vmem:[%s206 + $0x10] sm:$0xf]
      %v1948 = vld [vmem:[%s206 + $0x14] sm:$0xf]
      %v1949 = vld [vmem:[%s206 + $0x18] sm:$0xf]
      %v1950 = vld [vmem:[%s206 + $0x1c] sm:$0xf]
      %v1951 = vld [vmem:[%s206 + $0x20] sm:$0xf]
      %v1952 = vld [vmem:[%s206 + $0x24] sm:$0xf]
      %v1953 = vld [vmem:[%s206 + $0x28] sm:$0xf]
      %v1954 = vld [vmem:[%s206 + $0x2c] sm:$0xf]
      %v1955 = vld [vmem:[%s206 + $0x30] sm:$0xf]
      %v1956 = vld [vmem:[%s206 + $0x34] sm:$0xf]
      %v1957 = vld [vmem:[%s206 + $0x38] sm:$0xf]
      %v1958 = vld [vmem:[%s206 + $0x3c] sm:$0xf]
      %v1959 = vld [vmem:[%s206 + $0x40] sm:$0xf]
      %v1960 = vld [vmem:[%s206 + $0x44] sm:$0xf]
      %v1961 = vld [vmem:[%s206 + $0x48] sm:$0xf]
      %v1962 = vld [vmem:[%s206 + $0x4c] sm:$0xf]
      %v1963 = vld [vmem:[%s206 + $0x50] sm:$0xf]
      %v1964 = vld [vmem:[%s206 + $0x54] sm:$0xf]
      %v1965 = vld [vmem:[%s206 + $0x58] sm:$0xf]
      %v1966 = vld [vmem:[%s206 + $0x5c] sm:$0xf]
      %v1967 = vld [vmem:[%s206 + $0x60] sm:$0xf]
      %v1968 = vld [vmem:[%s206 + $0x64] sm:$0xf]
      %v1969 = vld [vmem:[%s206 + $0x68] sm:$0xf]
      %v1970 = vld [vmem:[%s206 + $0x6c] sm:$0xf]
      %v1971 = vld [vmem:[%s206 + $0x70] sm:$0xf]
      %v1972 = vld [vmem:[%s206 + $0x74] sm:$0xf]
      %v1973 = vld [vmem:[%s206 + $0x78] sm:$0xf]
      %v1974 = vld [vmem:[%s206 + $0x7c] sm:$0x7]
      %v1975 = vld [vmem:[%s210 + $0x18] sm:$0xf]
      %v2004 = vunpack.c.l.b16 %v1947
      %v2005 = vunpack.c.l.b16 %v1948
      %v2006 = vunpack.c.l.b16 %v1949
      %v2007 = vunpack.c.l.b16 %v1950
      %v2008 = vunpack.c.l.b16 %v1951
      %v2009 = vunpack.c.l.b16 %v1952
      %v2010 = vunpack.c.l.b16 %v1953
      %v2011 = vunpack.c.l.b16 %v1954
      %v2012 = vunpack.c.l.b16 %v1955
      %v2013 = vunpack.c.l.b16 %v1956
      %v2014 = vunpack.c.l.b16 %v1957
      %v2015 = vunpack.c.l.b16 %v1958
      %v2016 = vunpack.c.l.b16 %v1959
      %v2017 = vunpack.c.l.b16 %v1960
      %v2018 = vunpack.c.l.b16 %v1961
      %v2019 = vunpack.c.l.b16 %v1962
      %v2020 = vunpack.c.l.b16 %v1963
      %v2021 = vunpack.c.l.b16 %v1964
      %v2022 = vunpack.c.l.b16 %v1965
      %v2023 = vunpack.c.l.b16 %v1966
      %v2024 = vunpack.c.l.b16 %v1967
      %v2025 = vunpack.c.l.b16 %v1968
      %v2026 = vunpack.c.l.b16 %v1969
      %v2027 = vunpack.c.l.b16 %v1970
      %v2028 = vunpack.c.l.b16 %v1971
      %v2029 = vunpack.c.l.b16 %v1972
      %v2030 = vunpack.c.l.b16 %v1973
      %v2031 = vunpack.c.l.b16 %v1974
      %v2032 = vpack.c.b16 %v2005, %v2004
      %v2033 = vpack.c.b16 %v2007, %v2006
      %v2034 = vpack.c.b16 %v2009, %v2008
      %v2035 = vpack.c.b16 %v2011, %v2010
      %v2036 = vpack.c.b16 %v2013, %v2012
      %v2037 = vpack.c.b16 %v2015, %v2014
      %v2038 = vpack.c.b16 %v2017, %v2016
      %v2039 = vpack.c.b16 %v2019, %v2018
      %v2040 = vpack.c.b16 %v2021, %v2020
      %v2041 = vpack.c.b16 %v2023, %v2022
      %v2042 = vpack.c.b16 %v2025, %v2024
      %v2043 = vpack.c.b16 %v2027, %v2026
      %v2044 = vpack.c.b16 %v2029, %v2028
      %v2045 = vpack.c.b16 %v2031, %v2030
      %v2047 = vsel %vm436, %v2032, 0
      %v2050 = vsel %vm436, %v2033, 0
      %v2053 = vsel %vm436, %v2034, 0
      %v2056 = vsel %vm436, %v2035, 0
      %v2059 = vsel %vm436, %v2036, 0
      %v2062 = vsel %vm436, %v2037, 0
      %v2065 = vsel %vm436, %v2038, 0
      %v2068 = vsel %vm436, %v2039, 0
      %v2071 = vsel %vm436, %v2040, 0
      %v2074 = vsel %vm436, %v2041, 0
      %v2077 = vsel %vm436, %v2042, 0
      %v2080 = vsel %vm436, %v2043, 0
      %v2083 = vsel %vm436, %v2044, 0
      %v2086 = vsel %vm436, %v2045, 0
      %v2089 = vsel %vm479, %v1975, 0
      %2091 = vmatprep.subr.bf16.mxu0 0
      %2092 = vmatpush1.bf16.msra.mxu0 0
      %2093 = vmatprep.subr.bf16.mxu0 0
      %2094 = vmatpush1.bf16.msra.mxu0 0
      %2095 = vmatprep.subr.bf16.mxu0 0
      %2096 = vmatpush1.bf16.msra.mxu0 0
      %2097 = vmatprep.subr.bf16.mxu0 0
      %2098 = vmatpush1.bf16.msra.mxu0 0
      %2099 = vmatprep.subr.bf16.mxu0 0
      %2100 = vmatpush1.bf16.msra.mxu0 0
      %2101 = vmatprep.subr.bf16.mxu0 0
      %2102 = vmatpush1.bf16.msra.mxu0 0
      %2103 = vmatprep.subr.bf16.mxu0 0
      %2104 = vmatpush1.bf16.msra.mxu0 0
      %2105 = vmatprep.subr.bf16.mxu0 0
      %2106 = vmatpush1.bf16.msra.mxu0 %v2089
      %2107 = vmatprep.subr.bf16.mxu0 0
      %2108 = vmatpush2.bf16.msra.mxu0 0
      %2109 = vmatprep.subr.bf16.mxu0 0
      %2110 = vmatpush2.bf16.msra.mxu0 0
      %2111 = vmatprep.subr.bf16.mxu0 0
      %2112 = vmatpush2.bf16.msra.mxu0 0
      %2113 = vmatprep.subr.bf16.mxu0 0
      %2114 = vmatpush2.bf16.msra.mxu0 0
      %2115 = vmatprep.subr.bf16.mxu0 0
      %2116 = vmatpush2.bf16.msra.mxu0 0
      %2117 = vmatprep.subr.bf16.mxu0 0
      %2118 = vmatpush2.bf16.msra.mxu0 0
      %2119 = vmatprep.subr.bf16.mxu0 0
      %2120 = vmatpush2.bf16.msra.mxu0 0
      %2121 = vmatprep.subr.bf16.mxu0 0
      %2122 = vmatpush2.bf16.msra.mxu0 0
      %2123 = vmatprep.mubr.bf16.mxu0 0
      %2124 = vmatmul.mubr.bf16.gmra.mxu0 %v2047
      %v2125 = vpop.f32.mrf.mxu0
      %v2126 = vadd.f32 0.0, %v2125
      %v2127 = vpop.f32.mrf.mxu0
      %v2128 = vpop.f32.mrf.mxu0
      %v2129 = vadd.f32 0.0, %v2128
      %v2130 = vpop.f32.mrf.mxu0
      %2131 = vmatprep.mubr.bf16.mxu0 0
      %2132 = vmatmul.mubr.bf16.gmra.mxu0 %v2050
      %v2133 = vpop.f32.mrf.mxu0
      %v2134 = vadd.f32 0.0, %v2133
      %v2135 = vpop.f32.mrf.mxu0
      %v2136 = vpop.f32.mrf.mxu0
      %v2137 = vadd.f32 0.0, %v2136
      %v2138 = vpop.f32.mrf.mxu0
      %2139 = vmatprep.mubr.bf16.mxu0 0
      %2140 = vmatmul.mubr.bf16.gmra.mxu0 %v2053
      %v2141 = vpop.f32.mrf.mxu0
      %v2142 = vadd.f32 0.0, %v2141
      %v2143 = vpop.f32.mrf.mxu0
      %v2144 = vpop.f32.mrf.mxu0
      %v2145 = vadd.f32 0.0, %v2144
      %v2146 = vpop.f32.mrf.mxu0
      %2147 = vmatprep.mubr.bf16.mxu0 0
      %2148 = vmatmul.mubr.bf16.gmra.mxu0 %v2056
      %v2149 = vpop.f32.mrf.mxu0
      %v2150 = vadd.f32 0.0, %v2149
      %v2151 = vpop.f32.mrf.mxu0
      %v2152 = vpop.f32.mrf.mxu0
      %v2153 = vadd.f32 0.0, %v2152
      %v2154 = vpop.f32.mrf.mxu0
      %2155 = vmatprep.mubr.bf16.mxu0 0
      %2156 = vmatmul.mubr.bf16.gmra.mxu0 %v2059
      %v2157 = vpop.f32.mrf.mxu0
      %v2158 = vadd.f32 0.0, %v2157
      %v2159 = vpop.f32.mrf.mxu0
      %v2160 = vpop.f32.mrf.mxu0
      %v2161 = vadd.f32 0.0, %v2160
      %v2162 = vpop.f32.mrf.mxu0
      %2163 = vmatprep.mubr.bf16.mxu0 0
      %2164 = vmatmul.mubr.bf16.gmra.mxu0 %v2062
      %v2165 = vpop.f32.mrf.mxu0
      %v2166 = vadd.f32 0.0, %v2165
      %v2167 = vpop.f32.mrf.mxu0
      %v2168 = vpop.f32.mrf.mxu0
      %v2169 = vadd.f32 0.0, %v2168
      %v2170 = vpop.f32.mrf.mxu0
      %2171 = vmatprep.mubr.bf16.mxu0 0
      %2172 = vmatmul.mubr.bf16.gmra.mxu0 %v2065
      %v2173 = vpop.f32.mrf.mxu0
      %v2174 = vadd.f32 0.0, %v2173
      %v2175 = vpop.f32.mrf.mxu0
      %v2176 = vpop.f32.mrf.mxu0
      %v2177 = vadd.f32 0.0, %v2176
      %v2178 = vpop.f32.mrf.mxu0
      %2179 = vmatprep.mubr.bf16.mxu0 0
      %2180 = vmatmul.mubr.bf16.gmra.mxu0 %v2068
      %v2181 = vpop.f32.mrf.mxu0
      %v2182 = vadd.f32 0.0, %v2181
      %v2183 = vpop.f32.mrf.mxu0
      %v2184 = vpop.f32.mrf.mxu0
      %v2185 = vadd.f32 0.0, %v2184
      %v2186 = vpop.f32.mrf.mxu0
      %2187 = vmatprep.mubr.bf16.mxu0 0
      %2188 = vmatmul.mubr.bf16.gmra.mxu0 %v2071
      %v2189 = vpop.f32.mrf.mxu0
      %v2190 = vadd.f32 0.0, %v2189
      %v2191 = vpop.f32.mrf.mxu0
      %v2192 = vpop.f32.mrf.mxu0
      %v2193 = vadd.f32 0.0, %v2192
      %v2194 = vpop.f32.mrf.mxu0
      %2195 = vmatprep.mubr.bf16.mxu0 0
      %2196 = vmatmul.mubr.bf16.gmra.mxu0 %v2074
      %v2197 = vpop.f32.mrf.mxu0
      %v2198 = vadd.f32 0.0, %v2197
      %v2199 = vpop.f32.mrf.mxu0
      %v2200 = vpop.f32.mrf.mxu0
      %v2201 = vadd.f32 0.0, %v2200
      %v2202 = vpop.f32.mrf.mxu0
      %2203 = vmatprep.mubr.bf16.mxu0 0
      %2204 = vmatmul.mubr.bf16.gmra.mxu0 %v2077
      %v2205 = vpop.f32.mrf.mxu0
      %v2206 = vadd.f32 0.0, %v2205
      %v2207 = vpop.f32.mrf.mxu0
      %v2208 = vpop.f32.mrf.mxu0
      %v2209 = vadd.f32 0.0, %v2208
      %v2210 = vpop.f32.mrf.mxu0
      %2211 = vmatprep.mubr.bf16.mxu0 0
      %2212 = vmatmul.mubr.bf16.gmra.mxu0 %v2080
      %v2213 = vpop.f32.mrf.mxu0
      %v2214 = vadd.f32 0.0, %v2213
      %v2215 = vpop.f32.mrf.mxu0
      %v2216 = vpop.f32.mrf.mxu0
      %v2217 = vadd.f32 0.0, %v2216
      %v2218 = vpop.f32.mrf.mxu0
      %2219 = vmatprep.mubr.bf16.mxu0 0
      %2220 = vmatmul.mubr.bf16.gmra.mxu0 %v2083
      %v2221 = vpop.f32.mrf.mxu0
      %v2222 = vadd.f32 0.0, %v2221
      %v2223 = vpop.f32.mrf.mxu0
      %v2224 = vpop.f32.mrf.mxu0
      %v2225 = vadd.f32 0.0, %v2224
      %v2226 = vpop.f32.mrf.mxu0
      %2227 = vmatprep.mubr.bf16.mxu0 0
      %2228 = vmatmul.mubr.bf16.gmra.mxu0 %v2086
      %v2229 = vpop.f32.mrf.mxu0
      %v2230 = vadd.f32 0.0, %v2229
      %v2231 = vpop.f32.mrf.mxu0
      %v2232 = vpop.f32.mrf.mxu0
      %v2233 = vadd.f32 0.0, %v2232
      %v2234 = vpop.f32.mrf.mxu0
      %2235 = vdwg.mxu0
      %v2236 = vadd.f32 %v1919, %v2126
      %v2237 = vadd.f32 %v1920, %v2129
      %v2238 = vadd.f32 %v1921, %v2134
      %v2239 = vadd.f32 %v1922, %v2137
      %v2240 = vadd.f32 %v1923, %v2142
      %v2241 = vadd.f32 %v1924, %v2145
      %v2242 = vadd.f32 %v1925, %v2150
      %v2243 = vadd.f32 %v1926, %v2153
      %v2244 = vadd.f32 %v1927, %v2158
      %v2245 = vadd.f32 %v1928, %v2161
      %v2246 = vadd.f32 %v1929, %v2166
      %v2247 = vadd.f32 %v1930, %v2169
      %v2248 = vadd.f32 %v1931, %v2174
      %v2249 = vadd.f32 %v1932, %v2177
      %v2250 = vadd.f32 %v1933, %v2182
      %v2251 = vadd.f32 %v1934, %v2185
      %v2252 = vadd.f32 %v1935, %v2190
      %v2253 = vadd.f32 %v1936, %v2193
      %v2254 = vadd.f32 %v1937, %v2198
      %v2255 = vadd.f32 %v1938, %v2201
      %v2256 = vadd.f32 %v1939, %v2206
      %v2257 = vadd.f32 %v1940, %v2209
      %v2258 = vadd.f32 %v1941, %v2214
      %v2259 = vadd.f32 %v1942, %v2217
      %v2260 = vadd.f32 %v1943, %v2222
      %v2261 = vadd.f32 %v1944, %v2225
      %v2262 = vadd.f32 %v1945, %v2230
      %v2263 = vadd.f32 %v1946, %v2233
      %v2264 = vld [vmem:[%s206 + $0x7c] sm:$0xf]
      %v2265 = vld [vmem:[%s210 + $0x1c] sm:$0xf]
      %v2267 = vunpack.c.l.b16 %v2264
      %v2268 = vpack.c.b16 %v2267, %v2030
      %v2269 = vshrl.u32 %v2032, 16
      %v2271 = vshll.u32 %v2032, 16
      %v2273 = vrot.slane %v2271, 1
      %v2274 = vor.u32 %v2269, %v2273
      %v2275 = vshll.u32 %v2033, 16
      %v2277 = vrot.slane %v2275, 1
      %v2278 = vsel %vm324, %v2274, %v2277
      %v2279 = vshrl.u32 %v2033, 16
      %v2281 = vor.u32 %v2279, %v2277
      %v2282 = vshll.u32 %v2034, 16
      %v2284 = vrot.slane %v2282, 1
      %v2285 = vsel %vm324, %v2281, %v2284
      %v2286 = vshrl.u32 %v2034, 16
      %v2288 = vor.u32 %v2286, %v2284
      %v2289 = vshll.u32 %v2035, 16
      %v2291 = vrot.slane %v2289, 1
      %v2292 = vsel %vm324, %v2288, %v2291
      %v2293 = vshrl.u32 %v2035, 16
      %v2295 = vor.u32 %v2293, %v2291
      %v2296 = vshll.u32 %v2036, 16
      %v2298 = vrot.slane %v2296, 1
      %v2299 = vsel %vm324, %v2295, %v2298
      %v2300 = vshrl.u32 %v2036, 16
      %v2302 = vor.u32 %v2300, %v2298
      %v2303 = vshll.u32 %v2037, 16
      %v2305 = vrot.slane %v2303, 1
      %v2306 = vsel %vm324, %v2302, %v2305
      %v2307 = vshrl.u32 %v2037, 16
      %v2309 = vor.u32 %v2307, %v2305
      %v2310 = vshll.u32 %v2038, 16
      %v2312 = vrot.slane %v2310, 1
      %v2313 = vsel %vm324, %v2309, %v2312
      %v2314 = vshrl.u32 %v2038, 16
      %v2316 = vor.u32 %v2314, %v2312
      %v2317 = vshll.u32 %v2039, 16
      %v2319 = vrot.slane %v2317, 1
      %v2320 = vsel %vm324, %v2316, %v2319
      %v2321 = vshrl.u32 %v2039, 16
      %v2323 = vor.u32 %v2321, %v2319
      %v2324 = vshll.u32 %v2040, 16
      %v2326 = vrot.slane %v2324, 1
      %v2327 = vsel %vm324, %v2323, %v2326
      %v2328 = vshrl.u32 %v2040, 16
      %v2330 = vor.u32 %v2328, %v2326
      %v2331 = vshll.u32 %v2041, 16
      %v2333 = vrot.slane %v2331, 1
      %v2334 = vsel %vm324, %v2330, %v2333
      %v2335 = vshrl.u32 %v2041, 16
      %v2337 = vor.u32 %v2335, %v2333
      %v2338 = vshll.u32 %v2042, 16
      %v2340 = vrot.slane %v2338, 1
      %v2341 = vsel %vm324, %v2337, %v2340
      %v2342 = vshrl.u32 %v2042, 16
      %v2344 = vor.u32 %v2342, %v2340
      %v2345 = vshll.u32 %v2043, 16
      %v2347 = vrot.slane %v2345, 1
      %v2348 = vsel %vm324, %v2344, %v2347
      %v2349 = vshrl.u32 %v2043, 16
      %v2351 = vor.u32 %v2349, %v2347
      %v2352 = vshll.u32 %v2044, 16
      %v2354 = vrot.slane %v2352, 1
      %v2355 = vsel %vm324, %v2351, %v2354
      %v2356 = vshrl.u32 %v2044, 16
      %v2358 = vor.u32 %v2356, %v2354
      %v2360 = vshll.u32 %v2268, 16
      %v2362 = vrot.slane %v2360, 1
      %v2363 = vsel %vm324, %v2358, %v2362
      %v2364 = vshrl.u32 %v2268, 16
      %v2366 = vor.u32 %v2364, %v2362
      %v2368 = vsel %vm436, %v2278, 0
      %v2371 = vsel %vm436, %v2285, 0
      %v2374 = vsel %vm436, %v2292, 0
      %v2377 = vsel %vm436, %v2299, 0
      %v2380 = vsel %vm436, %v2306, 0
      %v2383 = vsel %vm436, %v2313, 0
      %v2386 = vsel %vm436, %v2320, 0
      %v2389 = vsel %vm436, %v2327, 0
      %v2392 = vsel %vm436, %v2334, 0
      %v2395 = vsel %vm436, %v2341, 0
      %v2398 = vsel %vm436, %v2348, 0
      %v2401 = vsel %vm436, %v2355, 0
      %v2404 = vsel %vm436, %v2363, 0
      %v2407 = vsel %vm436, %v2366, 0
      %v2410 = vsel %vm479, %v2265, 0
      %2412 = vmatprep.subr.bf16.mxu0 0
      %2413 = vmatpush1.bf16.msra.mxu0 0
      %2414 = vmatprep.subr.bf16.mxu0 0
      %2415 = vmatpush1.bf16.msra.mxu0 0
      %2416 = vmatprep.subr.bf16.mxu0 0
      %2417 = vmatpush1.bf16.msra.mxu0 0
      %2418 = vmatprep.subr.bf16.mxu0 0
      %2419 = vmatpush1.bf16.msra.mxu0 0
      %2420 = vmatprep.subr.bf16.mxu0 0
      %2421 = vmatpush1.bf16.msra.mxu0 0
      %2422 = vmatprep.subr.bf16.mxu0 0
      %2423 = vmatpush1.bf16.msra.mxu0 0
      %2424 = vmatprep.subr.bf16.mxu0 0
      %2425 = vmatpush1.bf16.msra.mxu0 0
      %2426 = vmatprep.subr.bf16.mxu0 0
      %2427 = vmatpush1.bf16.msra.mxu0 %v2410
      %2428 = vmatprep.subr.bf16.mxu0 0
      %2429 = vmatpush2.bf16.msra.mxu0 0
      %2430 = vmatprep.subr.bf16.mxu0 0
      %2431 = vmatpush2.bf16.msra.mxu0 0
      %2432 = vmatprep.subr.bf16.mxu0 0
      %2433 = vmatpush2.bf16.msra.mxu0 0
      %2434 = vmatprep.subr.bf16.mxu0 0
      %2435 = vmatpush2.bf16.msra.mxu0 0
      %2436 = vmatprep.subr.bf16.mxu0 0
      %2437 = vmatpush2.bf16.msra.mxu0 0
      %2438 = vmatprep.subr.bf16.mxu0 0
      %2439 = vmatpush2.bf16.msra.mxu0 0
      %2440 = vmatprep.subr.bf16.mxu0 0
      %2441 = vmatpush2.bf16.msra.mxu0 0
      %2442 = vmatprep.subr.bf16.mxu0 0
      %2443 = vmatpush2.bf16.msra.mxu0 0
      %2444 = vmatprep.mubr.bf16.mxu0 0
      %2445 = vmatmul.mubr.bf16.gmra.mxu0 %v2368
      %v2446 = vpop.f32.mrf.mxu0
      %v2447 = vadd.f32 0.0, %v2446
      %v2448 = vpop.f32.mrf.mxu0
      %v2449 = vpop.f32.mrf.mxu0
      %v2450 = vadd.f32 0.0, %v2449
      %v2451 = vpop.f32.mrf.mxu0
      %2452 = vmatprep.mubr.bf16.mxu0 0
      %2453 = vmatmul.mubr.bf16.gmra.mxu0 %v2371
      %v2454 = vpop.f32.mrf.mxu0
      %v2455 = vadd.f32 0.0, %v2454
      %v2456 = vpop.f32.mrf.mxu0
      %v2457 = vpop.f32.mrf.mxu0
      %v2458 = vadd.f32 0.0, %v2457
      %v2459 = vpop.f32.mrf.mxu0
      %2460 = vmatprep.mubr.bf16.mxu0 0
      %2461 = vmatmul.mubr.bf16.gmra.mxu0 %v2374
      %v2462 = vpop.f32.mrf.mxu0
      %v2463 = vadd.f32 0.0, %v2462
      %v2464 = vpop.f32.mrf.mxu0
      %v2465 = vpop.f32.mrf.mxu0
      %v2466 = vadd.f32 0.0, %v2465
      %v2467 = vpop.f32.mrf.mxu0
      %2468 = vmatprep.mubr.bf16.mxu0 0
      %2469 = vmatmul.mubr.bf16.gmra.mxu0 %v2377
      %v2470 = vpop.f32.mrf.mxu0
      %v2471 = vadd.f32 0.0, %v2470
      %v2472 = vpop.f32.mrf.mxu0
      %v2473 = vpop.f32.mrf.mxu0
      %v2474 = vadd.f32 0.0, %v2473
      %v2475 = vpop.f32.mrf.mxu0
      %2476 = vmatprep.mubr.bf16.mxu0 0
      %2477 = vmatmul.mubr.bf16.gmra.mxu0 %v2380
      %v2478 = vpop.f32.mrf.mxu0
      %v2479 = vadd.f32 0.0, %v2478
      %v2480 = vpop.f32.mrf.mxu0
      %v2481 = vpop.f32.mrf.mxu0
      %v2482 = vadd.f32 0.0, %v2481
      %v2483 = vpop.f32.mrf.mxu0
      %2484 = vmatprep.mubr.bf16.mxu0 0
      %2485 = vmatmul.mubr.bf16.gmra.mxu0 %v2383
      %v2486 = vpop.f32.mrf.mxu0
      %v2487 = vadd.f32 0.0, %v2486
      %v2488 = vpop.f32.mrf.mxu0
      %v2489 = vpop.f32.mrf.mxu0
      %v2490 = vadd.f32 0.0, %v2489
      %v2491 = vpop.f32.mrf.mxu0
      %2492 = vmatprep.mubr.bf16.mxu0 0
      %2493 = vmatmul.mubr.bf16.gmra.mxu0 %v2386
      %v2494 = vpop.f32.mrf.mxu0
      %v2495 = vadd.f32 0.0, %v2494
      %v2496 = vpop.f32.mrf.mxu0
      %v2497 = vpop.f32.mrf.mxu0
      %v2498 = vadd.f32 0.0, %v2497
      %v2499 = vpop.f32.mrf.mxu0
      %2500 = vmatprep.mubr.bf16.mxu0 0
      %2501 = vmatmul.mubr.bf16.gmra.mxu0 %v2389
      %v2502 = vpop.f32.mrf.mxu0
      %v2503 = vadd.f32 0.0, %v2502
      %v2504 = vpop.f32.mrf.mxu0
      %v2505 = vpop.f32.mrf.mxu0
      %v2506 = vadd.f32 0.0, %v2505
      %v2507 = vpop.f32.mrf.mxu0
      %2508 = vmatprep.mubr.bf16.mxu0 0
      %2509 = vmatmul.mubr.bf16.gmra.mxu0 %v2392
      %v2510 = vpop.f32.mrf.mxu0
      %v2511 = vadd.f32 0.0, %v2510
      %v2512 = vpop.f32.mrf.mxu0
      %v2513 = vpop.f32.mrf.mxu0
      %v2514 = vadd.f32 0.0, %v2513
      %v2515 = vpop.f32.mrf.mxu0
      %2516 = vmatprep.mubr.bf16.mxu0 0
      %2517 = vmatmul.mubr.bf16.gmra.mxu0 %v2395
      %v2518 = vpop.f32.mrf.mxu0
      %v2519 = vadd.f32 0.0, %v2518
      %v2520 = vpop.f32.mrf.mxu0
      %v2521 = vpop.f32.mrf.mxu0
      %v2522 = vadd.f32 0.0, %v2521
      %v2523 = vpop.f32.mrf.mxu0
      %2524 = vmatprep.mubr.bf16.mxu0 0
      %2525 = vmatmul.mubr.bf16.gmra.mxu0 %v2398
      %v2526 = vpop.f32.mrf.mxu0
      %v2527 = vadd.f32 0.0, %v2526
      %v2528 = vpop.f32.mrf.mxu0
      %v2529 = vpop.f32.mrf.mxu0
      %v2530 = vadd.f32 0.0, %v2529
      %v2531 = vpop.f32.mrf.mxu0
      %2532 = vmatprep.mubr.bf16.mxu0 0
      %2533 = vmatmul.mubr.bf16.gmra.mxu0 %v2401
      %v2534 = vpop.f32.mrf.mxu0
      %v2535 = vadd.f32 0.0, %v2534
      %v2536 = vpop.f32.mrf.mxu0
      %v2537 = vpop.f32.mrf.mxu0
      %v2538 = vadd.f32 0.0, %v2537
      %v2539 = vpop.f32.mrf.mxu0
      %2540 = vmatprep.mubr.bf16.mxu0 0
      %2541 = vmatmul.mubr.bf16.gmra.mxu0 %v2404
      %v2542 = vpop.f32.mrf.mxu0
      %v2543 = vadd.f32 0.0, %v2542
      %v2544 = vpop.f32.mrf.mxu0
      %v2545 = vpop.f32.mrf.mxu0
      %v2546 = vadd.f32 0.0, %v2545
      %v2547 = vpop.f32.mrf.mxu0
      %2548 = vmatprep.mubr.bf16.mxu0 0
      %2549 = vmatmul.mubr.bf16.gmra.mxu0 %v2407
      %v2550 = vpop.f32.mrf.mxu0
      %v2551 = vadd.f32 0.0, %v2550
      %v2552 = vpop.f32.mrf.mxu0
      %v2553 = vpop.f32.mrf.mxu0
      %v2554 = vadd.f32 0.0, %v2553
      %v2555 = vpop.f32.mrf.mxu0
      %2556 = vdwg.mxu0
      %v2557 = vadd.f32 %v2236, %v2447
      %v2558 = vadd.f32 %v2237, %v2450
      %v2559 = vadd.f32 %v2238, %v2455
      %v2560 = vadd.f32 %v2239, %v2458
      %v2561 = vadd.f32 %v2240, %v2463
      %v2562 = vadd.f32 %v2241, %v2466
      %v2563 = vadd.f32 %v2242, %v2471
      %v2564 = vadd.f32 %v2243, %v2474
      %v2565 = vadd.f32 %v2244, %v2479
      %v2566 = vadd.f32 %v2245, %v2482
      %v2567 = vadd.f32 %v2246, %v2487
      %v2568 = vadd.f32 %v2247, %v2490
      %v2569 = vadd.f32 %v2248, %v2495
      %v2570 = vadd.f32 %v2249, %v2498
      %v2571 = vadd.f32 %v2250, %v2503
      %v2572 = vadd.f32 %v2251, %v2506
      %v2573 = vadd.f32 %v2252, %v2511
      %v2574 = vadd.f32 %v2253, %v2514
      %v2575 = vadd.f32 %v2254, %v2519
      %v2576 = vadd.f32 %v2255, %v2522
      %v2577 = vadd.f32 %v2256, %v2527
      %v2578 = vadd.f32 %v2257, %v2530
      %v2579 = vadd.f32 %v2258, %v2535
      %v2580 = vadd.f32 %v2259, %v2538
      %v2581 = vadd.f32 %v2260, %v2543
      %v2582 = vadd.f32 %v2261, %v2546
      %v2583 = vadd.f32 %v2262, %v2551
      %v2584 = vadd.f32 %v2263, %v2554
      %v2585 = vld [vmem:[%s206 + $0x10] sm:$0xe]
      %v2586 = vld [vmem:[%s210 + $0x20] sm:$0xf]
      %v2588 = vunpack.c.l.b16 %v2585
      %v2589 = vpack.c.b16 %v2005, %v2588
      %v2590 = vrot.slane %v2589, 1
      %v2591 = vrot.slane %v2033, 1
      %v2592 = vsel %vm813, %v2590, %v2591
      %v2593 = vrot.slane %v2034, 1
      %v2594 = vsel %vm813, %v2591, %v2593
      %v2595 = vrot.slane %v2035, 1
      %v2596 = vsel %vm813, %v2593, %v2595
      %v2597 = vrot.slane %v2036, 1
      %v2598 = vsel %vm813, %v2595, %v2597
      %v2599 = vrot.slane %v2037, 1
      %v2600 = vsel %vm813, %v2597, %v2599
      %v2601 = vrot.slane %v2038, 1
      %v2602 = vsel %vm813, %v2599, %v2601
      %v2603 = vrot.slane %v2039, 1
      %v2604 = vsel %vm813, %v2601, %v2603
      %v2605 = vrot.slane %v2040, 1
      %v2606 = vsel %vm813, %v2603, %v2605
      %v2607 = vrot.slane %v2041, 1
      %v2608 = vsel %vm813, %v2605, %v2607
      %v2609 = vrot.slane %v2042, 1
      %v2610 = vsel %vm813, %v2607, %v2609
      %v2611 = vrot.slane %v2043, 1
      %v2612 = vsel %vm813, %v2609, %v2611
      %v2613 = vrot.slane %v2044, 1
      %v2614 = vsel %vm813, %v2611, %v2613
      %v2615 = vrot.slane %v2268, 1
      %v2616 = vsel %vm813, %v2613, %v2615
      %v2618 = vsel %vm436, %v2592, 0
      %v2621 = vsel %vm436, %v2594, 0
      %v2624 = vsel %vm436, %v2596, 0
      %v2627 = vsel %vm436, %v2598, 0
      %v2630 = vsel %vm436, %v2600, 0
      %v2633 = vsel %vm436, %v2602, 0
      %v2636 = vsel %vm436, %v2604, 0
      %v2639 = vsel %vm436, %v2606, 0
      %v2642 = vsel %vm436, %v2608, 0
      %v2645 = vsel %vm436, %v2610, 0
      %v2648 = vsel %vm436, %v2612, 0
      %v2651 = vsel %vm436, %v2614, 0
      %v2654 = vsel %vm436, %v2616, 0
      %v2657 = vsel %vm436, %v2615, 0
      %v2660 = vsel %vm479, %v2586, 0
      %2662 = vmatprep.subr.bf16.mxu0 0
      %2663 = vmatpush1.bf16.msra.mxu0 0
      %2664 = vmatprep.subr.bf16.mxu0 0
      %2665 = vmatpush1.bf16.msra.mxu0 0
      %2666 = vmatprep.subr.bf16.mxu0 0
      %2667 = vmatpush1.bf16.msra.mxu0 0
      %2668 = vmatprep.subr.bf16.mxu0 0
      %2669 = vmatpush1.bf16.msra.mxu0 0
      %2670 = vmatprep.subr.bf16.mxu0 0
      %2671 = vmatpush1.bf16.msra.mxu0 0
      %2672 = vmatprep.subr.bf16.mxu0 0
      %2673 = vmatpush1.bf16.msra.mxu0 0
      %2674 = vmatprep.subr.bf16.mxu0 0
      %2675 = vmatpush1.bf16.msra.mxu0 0
      %2676 = vmatprep.subr.bf16.mxu0 0
      %2677 = vmatpush1.bf16.msra.mxu0 %v2660
      %2678 = vmatprep.subr.bf16.mxu0 0
      %2679 = vmatpush2.bf16.msra.mxu0 0
      %2680 = vmatprep.subr.bf16.mxu0 0
      %2681 = vmatpush2.bf16.msra.mxu0 0
      %2682 = vmatprep.subr.bf16.mxu0 0
      %2683 = vmatpush2.bf16.msra.mxu0 0
      %2684 = vmatprep.subr.bf16.mxu0 0
      %2685 = vmatpush2.bf16.msra.mxu0 0
      %2686 = vmatprep.subr.bf16.mxu0 0
      %2687 = vmatpush2.bf16.msra.mxu0 0
      %2688 = vmatprep.subr.bf16.mxu0 0
      %2689 = vmatpush2.bf16.msra.mxu0 0
      %2690 = vmatprep.subr.bf16.mxu0 0
      %2691 = vmatpush2.bf16.msra.mxu0 0
      %2692 = vmatprep.subr.bf16.mxu0 0
      %2693 = vmatpush2.bf16.msra.mxu0 0
      %2694 = vmatprep.mubr.bf16.mxu0 0
      %2695 = vmatmul.mubr.bf16.gmra.mxu0 %v2618
      %v2696 = vpop.f32.mrf.mxu0
      %v2697 = vadd.f32 0.0, %v2696
      %v2698 = vpop.f32.mrf.mxu0
      %v2699 = vpop.f32.mrf.mxu0
      %v2700 = vadd.f32 0.0, %v2699
      %v2701 = vpop.f32.mrf.mxu0
      %2702 = vmatprep.mubr.bf16.mxu0 0
      %2703 = vmatmul.mubr.bf16.gmra.mxu0 %v2621
      %v2704 = vpop.f32.mrf.mxu0
      %v2705 = vadd.f32 0.0, %v2704
      %v2706 = vpop.f32.mrf.mxu0
      %v2707 = vpop.f32.mrf.mxu0
      %v2708 = vadd.f32 0.0, %v2707
      %v2709 = vpop.f32.mrf.mxu0
      %2710 = vmatprep.mubr.bf16.mxu0 0
      %2711 = vmatmul.mubr.bf16.gmra.mxu0 %v2624
      %v2712 = vpop.f32.mrf.mxu0
      %v2713 = vadd.f32 0.0, %v2712
      %v2714 = vpop.f32.mrf.mxu0
      %v2715 = vpop.f32.mrf.mxu0
      %v2716 = vadd.f32 0.0, %v2715
      %v2717 = vpop.f32.mrf.mxu0
      %2718 = vmatprep.mubr.bf16.mxu0 0
      %2719 = vmatmul.mubr.bf16.gmra.mxu0 %v2627
      %v2720 = vpop.f32.mrf.mxu0
      %v2721 = vadd.f32 0.0, %v2720
      %v2722 = vpop.f32.mrf.mxu0
      %v2723 = vpop.f32.mrf.mxu0
      %v2724 = vadd.f32 0.0, %v2723
      %v2725 = vpop.f32.mrf.mxu0
      %2726 = vmatprep.mubr.bf16.mxu0 0
      %2727 = vmatmul.mubr.bf16.gmra.mxu0 %v2630
      %v2728 = vpop.f32.mrf.mxu0
      %v2729 = vadd.f32 0.0, %v2728
      %v2730 = vpop.f32.mrf.mxu0
      %v2731 = vpop.f32.mrf.mxu0
      %v2732 = vadd.f32 0.0, %v2731
      %v2733 = vpop.f32.mrf.mxu0
      %2734 = vmatprep.mubr.bf16.mxu0 0
      %2735 = vmatmul.mubr.bf16.gmra.mxu0 %v2633
      %v2736 = vpop.f32.mrf.mxu0
      %v2737 = vadd.f32 0.0, %v2736
      %v2738 = vpop.f32.mrf.mxu0
      %v2739 = vpop.f32.mrf.mxu0
      %v2740 = vadd.f32 0.0, %v2739
      %v2741 = vpop.f32.mrf.mxu0
      %2742 = vmatprep.mubr.bf16.mxu0 0
      %2743 = vmatmul.mubr.bf16.gmra.mxu0 %v2636
      %v2744 = vpop.f32.mrf.mxu0
      %v2745 = vadd.f32 0.0, %v2744
      %v2746 = vpop.f32.mrf.mxu0
      %v2747 = vpop.f32.mrf.mxu0
      %v2748 = vadd.f32 0.0, %v2747
      %v2749 = vpop.f32.mrf.mxu0
      %2750 = vmatprep.mubr.bf16.mxu0 0
      %2751 = vmatmul.mubr.bf16.gmra.mxu0 %v2639
      %v2752 = vpop.f32.mrf.mxu0
      %v2753 = vadd.f32 0.0, %v2752
      %v2754 = vpop.f32.mrf.mxu0
      %v2755 = vpop.f32.mrf.mxu0
      %v2756 = vadd.f32 0.0, %v2755
      %v2757 = vpop.f32.mrf.mxu0
      %2758 = vmatprep.mubr.bf16.mxu0 0
      %2759 = vmatmul.mubr.bf16.gmra.mxu0 %v2642
      %v2760 = vpop.f32.mrf.mxu0
      %v2761 = vadd.f32 0.0, %v2760
      %v2762 = vpop.f32.mrf.mxu0
      %v2763 = vpop.f32.mrf.mxu0
      %v2764 = vadd.f32 0.0, %v2763
      %v2765 = vpop.f32.mrf.mxu0
      %2766 = vmatprep.mubr.bf16.mxu0 0
      %2767 = vmatmul.mubr.bf16.gmra.mxu0 %v2645
      %v2768 = vpop.f32.mrf.mxu0
      %v2769 = vadd.f32 0.0, %v2768
      %v2770 = vpop.f32.mrf.mxu0
      %v2771 = vpop.f32.mrf.mxu0
      %v2772 = vadd.f32 0.0, %v2771
      %v2773 = vpop.f32.mrf.mxu0
      %2774 = vmatprep.mubr.bf16.mxu0 0
      %2775 = vmatmul.mubr.bf16.gmra.mxu0 %v2648
      %v2776 = vpop.f32.mrf.mxu0
      %v2777 = vadd.f32 0.0, %v2776
      %v2778 = vpop.f32.mrf.mxu0
      %v2779 = vpop.f32.mrf.mxu0
      %v2780 = vadd.f32 0.0, %v2779
      %v2781 = vpop.f32.mrf.mxu0
      %2782 = vmatprep.mubr.bf16.mxu0 0
      %2783 = vmatmul.mubr.bf16.gmra.mxu0 %v2651
      %v2784 = vpop.f32.mrf.mxu0
      %v2785 = vadd.f32 0.0, %v2784
      %v2786 = vpop.f32.mrf.mxu0
      %v2787 = vpop.f32.mrf.mxu0
      %v2788 = vadd.f32 0.0, %v2787
      %v2789 = vpop.f32.mrf.mxu0
      %2790 = vmatprep.mubr.bf16.mxu0 0
      %2791 = vmatmul.mubr.bf16.gmra.mxu0 %v2654
      %v2792 = vpop.f32.mrf.mxu0
      %v2793 = vadd.f32 0.0, %v2792
      %v2794 = vpop.f32.mrf.mxu0
      %v2795 = vpop.f32.mrf.mxu0
      %v2796 = vadd.f32 0.0, %v2795
      %v2797 = vpop.f32.mrf.mxu0
      %2798 = vmatprep.mubr.bf16.mxu0 0
      %2799 = vmatmul.mubr.bf16.gmra.mxu0 %v2657
      %v2800 = vpop.f32.mrf.mxu0
      %v2801 = vadd.f32 0.0, %v2800
      %v2802 = vpop.f32.mrf.mxu0
      %v2803 = vpop.f32.mrf.mxu0
      %v2804 = vadd.f32 0.0, %v2803
      %v2805 = vpop.f32.mrf.mxu0
      %2806 = vdwg.mxu0
      %v2807 = vadd.f32 %v2557, %v2697
      %v2808 = vadd.f32 %v2558, %v2700
      %v2809 = vadd.f32 %v2559, %v2705
      %v2810 = vadd.f32 %v2560, %v2708
      %v2811 = vadd.f32 %v2561, %v2713
      %v2812 = vadd.f32 %v2562, %v2716
      %v2813 = vadd.f32 %v2563, %v2721
      %v2814 = vadd.f32 %v2564, %v2724
      %v2815 = vadd.f32 %v2565, %v2729
      %v2816 = vadd.f32 %v2566, %v2732
      %v2817 = vadd.f32 %v2567, %v2737
      %v2818 = vadd.f32 %v2568, %v2740
      %v2819 = vadd.f32 %v2569, %v2745
      %v2820 = vadd.f32 %v2570, %v2748
      %v2821 = vadd.f32 %v2571, %v2753
      %v2822 = vadd.f32 %v2572, %v2756
      %v2823 = vadd.f32 %v2573, %v2761
      %v2824 = vadd.f32 %v2574, %v2764
      %v2825 = vadd.f32 %v2575, %v2769
      %v2826 = vadd.f32 %v2576, %v2772
      %v2827 = vadd.f32 %v2577, %v2777
      %v2828 = vadd.f32 %v2578, %v2780
      %v2829 = vadd.f32 %v2579, %v2785
      %v2830 = vadd.f32 %v2580, %v2788
      %v2831 = vadd.f32 %v2581, %v2793
      %v2832 = vadd.f32 %v2582, %v2796
      %v2833 = vadd.f32 %v2583, %v2801
      %v2834 = vadd.f32 %v2584, %v2804
      %v2835 = vld [vmem:[%s213] sm:$0x1]
      %v2837 = vlaneseq
      %v2838 = vshrl.u32 %v2837, 7
      %v2839 = vsub.s32 0, %v2838
      %v2840 = vrot.slane %v2835, %v2839
      %v2842 = vadd.f32 %v2807, %v2840
      %v2843 = vadd.f32 %v2808, %v2840
      %v2844 = vadd.f32 %v2809, %v2840
      %v2845 = vadd.f32 %v2810, %v2840
      %v2846 = vadd.f32 %v2811, %v2840
      %v2847 = vadd.f32 %v2812, %v2840
      %v2848 = vadd.f32 %v2813, %v2840
      %v2849 = vadd.f32 %v2814, %v2840
      %v2850 = vadd.f32 %v2815, %v2840
      %v2851 = vadd.f32 %v2816, %v2840
      %v2852 = vadd.f32 %v2817, %v2840
      %v2853 = vadd.f32 %v2818, %v2840
      %v2854 = vadd.f32 %v2819, %v2840
      %v2855 = vadd.f32 %v2820, %v2840
      %v2856 = vadd.f32 %v2821, %v2840
      %v2857 = vadd.f32 %v2822, %v2840
      %v2858 = vadd.f32 %v2823, %v2840
      %v2859 = vadd.f32 %v2824, %v2840
      %v2860 = vadd.f32 %v2825, %v2840
      %v2861 = vadd.f32 %v2826, %v2840
      %v2862 = vadd.f32 %v2827, %v2840
      %v2863 = vadd.f32 %v2828, %v2840
      %v2864 = vadd.f32 %v2829, %v2840
      %v2865 = vadd.f32 %v2830, %v2840
      %v2866 = vadd.f32 %v2831, %v2840
      %v2867 = vadd.f32 %v2832, %v2840
      %v2868 = vadd.f32 %v2833, %v2840
      %v2869 = vadd.f32 %v2834, %v2840
      %v2870 = vmax.f32 %v2842, 0.0
      %v2871 = vmax.f32 %v2843, 0.0
      %v2872 = vmax.f32 %v2844, 0.0
      %v2873 = vmax.f32 %v2845, 0.0
      %v2874 = vmax.f32 %v2846, 0.0
      %v2875 = vmax.f32 %v2847, 0.0
      %v2876 = vmax.f32 %v2848, 0.0
      %v2877 = vmax.f32 %v2849, 0.0
      %v2878 = vmax.f32 %v2850, 0.0
      %v2879 = vmax.f32 %v2851, 0.0
      %v2880 = vmax.f32 %v2852, 0.0
      %v2881 = vmax.f32 %v2853, 0.0
      %v2882 = vmax.f32 %v2854, 0.0
      %v2883 = vmax.f32 %v2855, 0.0
      %v2884 = vmax.f32 %v2856, 0.0
      %v2885 = vmax.f32 %v2857, 0.0
      %v2886 = vmax.f32 %v2858, 0.0
      %v2887 = vmax.f32 %v2859, 0.0
      %v2888 = vmax.f32 %v2860, 0.0
      %v2889 = vmax.f32 %v2861, 0.0
      %v2890 = vmax.f32 %v2862, 0.0
      %v2891 = vmax.f32 %v2863, 0.0
      %v2892 = vmax.f32 %v2864, 0.0
      %v2893 = vmax.f32 %v2865, 0.0
      %v2894 = vmax.f32 %v2866, 0.0
      %v2895 = vmax.f32 %v2867, 0.0
      %v2896 = vmax.f32 %v2868, 0.0
      %v2897 = vmax.f32 %v2869, 0.0
      %v2898 = vpack.c.bf16 %v2871, %v2870
      %v2899 = vpack.c.bf16 %v2873, %v2872
      %v2900 = vpack.c.bf16 %v2875, %v2874
      %v2901 = vpack.c.bf16 %v2877, %v2876
      %v2902 = vpack.c.bf16 %v2879, %v2878
      %v2903 = vpack.c.bf16 %v2881, %v2880
      %v2904 = vpack.c.bf16 %v2883, %v2882
      %v2905 = vpack.c.bf16 %v2885, %v2884
      %v2906 = vpack.c.bf16 %v2887, %v2886
      %v2907 = vpack.c.bf16 %v2889, %v2888
      %v2908 = vpack.c.bf16 %v2891, %v2890
      %v2909 = vpack.c.bf16 %v2893, %v2892
      %v2910 = vpack.c.bf16 %v2895, %v2894
      %v2911 = vpack.c.bf16 %v2897, %v2896
      %v2926 = vunpack.c.l.b16 %v2898
      %v2927 = vunpack.c.h.b16 %v2898
      %v2928 = vunpack.c.l.b16 %v2899
      %v2929 = vunpack.c.h.b16 %v2899
      %v2930 = vunpack.c.l.b16 %v2900
      %v2931 = vunpack.c.h.b16 %v2900
      %v2932 = vunpack.c.l.b16 %v2901
      %v2933 = vunpack.c.h.b16 %v2901
      %v2934 = vunpack.c.l.b16 %v2902
      %v2935 = vunpack.c.h.b16 %v2902
      %v2936 = vunpack.c.l.b16 %v2903
      %v2937 = vunpack.c.h.b16 %v2903
      %v2938 = vunpack.c.l.b16 %v2904
      %v2939 = vunpack.c.h.b16 %v2904
      %v2940 = vunpack.c.l.b16 %v2905
      %v2941 = vunpack.c.h.b16 %v2905
      %v2942 = vunpack.c.l.b16 %v2906
      %v2943 = vunpack.c.h.b16 %v2906
      %v2944 = vunpack.c.l.b16 %v2907
      %v2945 = vunpack.c.h.b16 %v2907
      %v2946 = vunpack.c.l.b16 %v2908
      %v2947 = vunpack.c.h.b16 %v2908
      %v2948 = vunpack.c.l.b16 %v2909
      %v2949 = vunpack.c.h.b16 %v2909
      %v2950 = vunpack.c.l.b16 %v2910
      %v2951 = vunpack.c.h.b16 %v2910
      %v2952 = vunpack.c.l.b16 %v2911
      %v2953 = vunpack.c.h.b16 %v2911
      %v2954 = vpack.c.b16 %v2926, %v2926
      %v2955 = vpack.c.b16 %v2927, %v2927
      %v2956 = vpack.c.b16 %v2928, %v2928
      %v2957 = vpack.c.b16 %v2929, %v2929
      %v2958 = vpack.c.b16 %v2930, %v2930
      %v2959 = vpack.c.b16 %v2931, %v2931
      %v2960 = vpack.c.b16 %v2932, %v2932
      %v2961 = vpack.c.b16 %v2933, %v2933
      %v2962 = vpack.c.b16 %v2934, %v2934
      %v2963 = vpack.c.b16 %v2935, %v2935
      %v2964 = vpack.c.b16 %v2936, %v2936
      %v2965 = vpack.c.b16 %v2937, %v2937
      %v2966 = vpack.c.b16 %v2938, %v2938
      %v2967 = vpack.c.b16 %v2939, %v2939
      %v2968 = vpack.c.b16 %v2940, %v2940
      %v2969 = vpack.c.b16 %v2941, %v2941
      %v2970 = vpack.c.b16 %v2942, %v2942
      %v2971 = vpack.c.b16 %v2943, %v2943
      %v2972 = vpack.c.b16 %v2944, %v2944
      %v2973 = vpack.c.b16 %v2945, %v2945
      %v2974 = vpack.c.b16 %v2946, %v2946
      %v2975 = vpack.c.b16 %v2947, %v2947
      %v2976 = vpack.c.b16 %v2948, %v2948
      %v2977 = vpack.c.b16 %v2949, %v2949
      %v2978 = vpack.c.b16 %v2950, %v2950
      %v2979 = vpack.c.b16 %v2951, %v2951
      %v2980 = vpack.c.b16 %v2952, %v2952
      %v2981 = vpack.c.b16 %v2953, %v2953
      %vm3010 = vcmask 125952
      %3011 = vst.msk [vmem:[%s221] sm:$0xf] %vm3010, %v2954
      %3012 = vst.msk [vmem:[%s221 + $0x4] sm:$0xf] %vm3010, %v2955
      %3013 = vst.msk [vmem:[%s221 + $0x8] sm:$0xf] %vm3010, %v2956
      %3014 = vst.msk [vmem:[%s221 + $0xc] sm:$0xf] %vm3010, %v2957
      %3015 = vst.msk [vmem:[%s221 + $0x10] sm:$0xf] %vm3010, %v2958
      %3016 = vst.msk [vmem:[%s221 + $0x14] sm:$0xf] %vm3010, %v2959
      %3017 = vst.msk [vmem:[%s221 + $0x18] sm:$0xf] %vm3010, %v2960
      %3018 = vst.msk [vmem:[%s221 + $0x1c] sm:$0xf] %vm3010, %v2961
      %3019 = vst.msk [vmem:[%s221 + $0x20] sm:$0xf] %vm3010, %v2962
      %3020 = vst.msk [vmem:[%s221 + $0x24] sm:$0xf] %vm3010, %v2963
      %3021 = vst.msk [vmem:[%s221 + $0x28] sm:$0xf] %vm3010, %v2964
      %3022 = vst.msk [vmem:[%s221 + $0x2c] sm:$0xf] %vm3010, %v2965
      %3023 = vst.msk [vmem:[%s221 + $0x30] sm:$0xf] %vm3010, %v2966
      %3024 = vst.msk [vmem:[%s221 + $0x34] sm:$0xf] %vm3010, %v2967
      %3025 = vst.msk [vmem:[%s221 + $0x38] sm:$0xf] %vm3010, %v2968
      %3026 = vst.msk [vmem:[%s221 + $0x3c] sm:$0xf] %vm3010, %v2969
      %3027 = vst.msk [vmem:[%s221 + $0x40] sm:$0xf] %vm3010, %v2970
      %3028 = vst.msk [vmem:[%s221 + $0x44] sm:$0xf] %vm3010, %v2971
      %3029 = vst.msk [vmem:[%s221 + $0x48] sm:$0xf] %vm3010, %v2972
      %3030 = vst.msk [vmem:[%s221 + $0x4c] sm:$0xf] %vm3010, %v2973
      %3031 = vst.msk [vmem:[%s221 + $0x50] sm:$0xf] %vm3010, %v2974
      %3032 = vst.msk [vmem:[%s221 + $0x54] sm:$0xf] %vm3010, %v2975
      %3033 = vst.msk [vmem:[%s221 + $0x58] sm:$0xf] %vm3010, %v2976
      %3034 = vst.msk [vmem:[%s221 + $0x5c] sm:$0xf] %vm3010, %v2977
      %3035 = vst.msk [vmem:[%s221 + $0x60] sm:$0xf] %vm3010, %v2978
      %3036 = vst.msk [vmem:[%s221 + $0x64] sm:$0xf] %vm3010, %v2979
      %3037 = vst.msk [vmem:[%s221 + $0x68] sm:$0xf] %vm3010, %v2980
      %vm3038 = vcmask 124928
      %3039 = vst.msk [vmem:[%s221 + $0x6c] sm:$0x7] %vm3038, %v2981
      %vm3040 = vcmask 125955
      %3041 = vst.msk [vmem:[%s221 + $0x6c] sm:$0x8] %vm3040, 0
      %3042 = vst.msk [vmem:[%s221 + $0x70] sm:$0xf] %vm3010, 0
      %3043 = vst.msk [vmem:[%s221 + $0x74] sm:$0xf] %vm3010, 0
      %3044 = vst.msk [vmem:[%s221 + $0x78] sm:$0xf] %vm3010, 0
      %3045 = vst.msk [vmem:[%s221 + $0x7c] sm:$0xf] %vm3010, 0
      %p3046 = scmp.lt.s32.totalorder %s18, 1
      %s3047 = scalar_select %p3046, %s18, 1
      %p3048 = scmp.lt.s32.totalorder %s19, 0
      %s3049 = scalar_select %p3048, %s19, 0
      %s3050 = smul.addr %s3047, 32
      %s3051 = sadd.s32 %s3049, %s3050
      %s3052 = smul.addr %s3051, 4
      %s3053 = scalar_lea.vmem %s3, %s3052
      // Predicated region
      $region33: #{encoder_block_fwd.2} parent=31 // pred_check
        %p3054 = pneg %p124
      $region34: #{encoder_block_fwd.2} parent=31 // pred_check_branch
        %3056 = sbr.rel (%p3054) target = $region36
      $region35: #{encoder_block_fwd.2} parent=31 // pred_region
        _
      $region36: #{encoder_block_fwd.2} parent=31 // pred_fallthru
        _
    $region32: #{encoder_block_fwd.2} parent=5 // pred_fallthru
      _
    %p3057 = scmp.le.s32.totalorder 2, %s9
    // Predicated region
    $region37: #{encoder_block_fwd.2} parent=5 // pred_check
      %p3058 = pneg %p3057
    $region38: #{encoder_block_fwd.2} parent=5 // pred_check_branch
      %3060 = sbr.rel (%p3058) target = $region40
    $region39: #{encoder_block_fwd.2} parent=5 // pred_region
      %s3061 = ssub.s32 %s9, 2
      // Predicated region
      $region41: #{encoder_block_fwd.2} parent=39 // pred_check
        %p3062 = pneg %p130
      $region42: #{encoder_block_fwd.2} parent=39 // pred_check_branch
        %3064 = sbr.rel (%p3062) target = $region44
      $region43: #{encoder_block_fwd.2} parent=39 // pred_region
        %p3065 = scmp.lt.s32.totalorder %s20, 1
        %s3066 = scalar_select %p3065, %s20, 1
        %p3067 = scmp.lt.s32.totalorder %s21, 0
        %s3068 = scalar_select %p3067, %s21, 0
        %s3069 = smul.addr %s3066, 32
        %s3070 = sadd.s32 %s3068, %s3069
        %s3071 = smul.addr %s3070, 4
        %s3072 = scalar_lea.vmem %s3, %s3071
      $region44: #{encoder_block_fwd.2} parent=39 // pred_fallthru
        _
    $region40: #{encoder_block_fwd.2} parent=5 // pred_fallthru
      _
  $region6: #{encoder_block_fwd.2} parent=0 // loop_footer
    %s13 = sadd.s32 1, %s9
  $region7: #{encoder_block_fwd.2} parent=0 // loop_footer_branch
    %8 = sbr.rel target = $region3
  $region8: #{encoder_block_fwd.2} parent=0 // loop_exit
    _

// kernel: encoder_block_fwd.3
$region0: #{encoder_block_fwd.3}
  #allocation0 [shape = 'u32[]', space=smem, size = 0x4, offset = 0x4, fixed_abs, tag = 'smem constant byte address 0x4 - core index']
  #allocation1 [shape = 'u32[144,128]{1,0:T(1,128)}', space=vmem, size = 0x12000, scoped, tag = 'internal scratch']
  %s0 = inlined_call_operand.vmem [shape: bf16[2,256,16], index: 0, kind: input, shape index: {}]
  %s1 = inlined_call_operand.vmem [shape: bf16[144,16], index: 1, kind: input, shape index: {}]
  %s2 = inlined_call_operand.vmem [shape: f32[1,16], index: 2, kind: input, shape index: {}]
  %s3 = inlined_call_operand.vmem [shape: bf16[2,256,16], index: 3, kind: output, shape index: {}]
  %s4 = sld [smem:[#allocation0]]
  $region45: #{encoder_block_fwd.3} parent=0
    _
  %s6 = ssub.s32 1, %s4
  %s7 = scalar_select 0, %s6, %s4
  loop: start=0, step=1, limit=4
  $region2: #{encoder_block_fwd.3} parent=0 // loop_pre_header
    _
  $region3: #{encoder_block_fwd.3} parent=0 // loop_header
    %s9 = sphi 0, %s13
    %p10 = scmp.ge.s32.totalorder %s9, 4
    %s16 = sphi 0, %s28
    %s17 = sphi 0, %s24
    %s18 = sphi 0, %s16
    %s19 = sphi 0, %s17
    %s20 = sphi 0, %s18
    %s21 = sphi 0, %s19
    %s31 = sphi 0, %s33
    %s34 = sphi 0, %s31
    %s35 = sphi 0, %s34
    %s51 = sphi 0, %s35
    %s57 = sphi 0, %s59
    %s60 = sphi 0, %s57
    %s61 = sphi 0, %s60
    %s77 = sphi 0, %s61
    %s83 = sphi 0, %s85
    %s86 = sphi 0, %s83
    %s87 = sphi 0, %s86
    %s103 = sphi 0, %s87
    %s111 = sphi 0, %s113
    %s114 = sphi 0, %s111
    %s115 = sphi 0, %s114
    %s131 = sphi 0, %s115
  $region4: #{encoder_block_fwd.3} parent=0 // loop_header_branch
    %12 = sbr.rel (%p10) target = $region8
  $region5: #{encoder_block_fwd.3} parent=0 // loop_body
    %s14 = ssub.s32 %s9, 1
    %s15 = ssub.s32 %s9, 2
    %s22 = sadd.s32 1, %s17
    %p23 = scmp.ge.s32.totalorder %s22, 1
    %s24 = scalar_select %p23, 0, %s22
    %s25 = sadd.s32 1, %s16
    %s26 = scalar_select %p23, %s25, %s16
    %p27 = scmp.ge.s32.totalorder %s26, 2
    %s28 = scalar_select %p27, 0, %s26
    %s29 = ssub.s32 %s16, %s28
    %p30 = scmp.eq.s32.totalorder %s29, 0
    %s32 = sadd.s32 %s31, 1
    %s33 = scalar_select %p30, %s31, %s32
    %p36 = pneg %p30
    %p37 = scmp.eq.s32.totalorder %s9, 1
    %p38 = por %p36, %p37
    %p39 = scmp.ne.s32.totalorder %s31, %s34
    %p40 = scmp.eq.s32.totalorder %s9, 0
    %p41 = por %p39, %p40
    %p42 = scmp.ne.s32.totalorder %s31, %s34
    %p43 = scmp.eq.s32.totalorder %s14, 1
    %p44 = por %p42, %p43
    %p45 = scmp.ne.s32.totalorder %s34, %s35
    %p46 = scmp.eq.s32.totalorder %s14, 0
    %p47 = por %p45, %p46
    %p48 = scmp.ne.s32.totalorder %s34, %s35
    %p49 = scmp.eq.s32.totalorder %s15, 1
    %p50 = por %p48, %p49
    %p52 = scmp.ne.s32.totalorder %s35, %s51
    %p53 = scmp.eq.s32.totalorder %s15, 0
    %p54 = por %p52, %p53
    %s55 = ssub.s32 %s17, %s24
    %p56 = scmp.eq.s32.totalorder %s55, 0
    %s58 = sadd.s32 %s57, 1
    %s59 = scalar_select %p56, %s57, %s58
    %p62 = pneg %p56
    %p63 = scmp.eq.s32.totalorder %s9, 1
    %p64 = por %p62, %p63
    %p65 = scmp.ne.s32.totalorder %s57, %s60
    %p66 = scmp.eq.s32.totalorder %s9, 0
    %p67 = por %p65, %p66
    %p68 = scmp.ne.s32.totalorder %s57, %s60
    %p69 = scmp.eq.s32.totalorder %s14, 1
    %p70 = por %p68, %p69
    %p71 = scmp.ne.s32.totalorder %s60, %s61
    %p72 = scmp.eq.s32.totalorder %s14, 0
    %p73 = por %p71, %p72
    %p74 = scmp.ne.s32.totalorder %s60, %s61
    %p75 = scmp.eq.s32.totalorder %s15, 1
    %p76 = por %p74, %p75
    %p78 = scmp.ne.s32.totalorder %s61, %s77
    %p79 = scmp.eq.s32.totalorder %s15, 0
    %p80 = por %p78, %p79
    %s81 = ssub.s32 %s17, %s24
    %p82 = scmp.eq.s32.totalorder %s81, 0
    %s84 = sadd.s32 %s83, 1
    %s85 = scalar_select %p82, %s83, %s84
    %p88 = pneg %p82
    %p89 = scmp.eq.s32.totalorder %s9, 1
    %p90 = por %p88, %p89
    %p91 = scmp.ne.s32.totalorder %s83, %s86
    %p92 = scmp.eq.s32.totalorder %s9, 0
    %p93 = por %p91, %p92
    %p94 = scmp.ne.s32.totalorder %s83, %s86
    %p95 = scmp.eq.s32.totalorder %s14, 1
    %p96 = por %p94, %p95
    %p97 = scmp.ne.s32.totalorder %s86, %s87
    %p98 = scmp.eq.s32.totalorder %s14, 0
    %p99 = por %p97, %p98
    %p100 = scmp.ne.s32.totalorder %s86, %s87
    %p101 = scmp.eq.s32.totalorder %s15, 1
    %p102 = por %p100, %p101
    %p104 = scmp.ne.s32.totalorder %s87, %s103
    %p105 = scmp.eq.s32.totalorder %s15, 0
    %p106 = por %p104, %p105
    %s107 = ssub.s32 %s16, %s28
    %s108 = ssub.s32 %s17, %s24
    %s109 = sor.u32 %s107, %s108
    %p110 = scmp.eq.s32.totalorder %s109, 0
    %s112 = sadd.s32 %s111, 1
    %s113 = scalar_select %p110, %s111, %s112
    %p116 = pneg %p110
    %p117 = scmp.eq.s32.totalorder %s9, 1
    %p118 = por %p116, %p117
    %p119 = scmp.ne.s32.totalorder %s111, %s114
    %p120 = scmp.eq.s32.totalorder %s9, 0
    %p121 = por %p119, %p120
    %p122 = scmp.ne.s32.totalorder %s111, %s114
    %p123 = scmp.eq.s32.totalorder %s14, 1
    %p124 = por %p122, %p123
    %p125 = scmp.ne.s32.totalorder %s114, %s115
    %p126 = scmp.eq.s32.totalorder %s14, 0
    %p127 = por %p125, %p126
    %p128 = scmp.ne.s32.totalorder %s114, %s115
    %p129 = scmp.eq.s32.totalorder %s15, 1
    %p130 = por %p128, %p129
    %p132 = scmp.ne.s32.totalorder %s115, %s131
    %p133 = scmp.eq.s32.totalorder %s15, 0
    %p134 = por %p132, %p133
    %p135 = scmp.le.s32.totalorder 1, %s9
    %p136 = scmp.lt.s32.totalorder %s9, 3
    %p137 = pnand %p135, %p136
    %p138 = pneg %p137
    // Predicated region
    $region9: #{encoder_block_fwd.3} parent=5 // pred_check
      _
    $region10: #{encoder_block_fwd.3} parent=5 // pred_check_branch
      %140 = sbr.rel (%p137) target = $region12
    $region11: #{encoder_block_fwd.3} parent=5 // pred_region
      %s141 = ssub.s32 %s9, 1
      // Predicated region
      $region13: #{encoder_block_fwd.3} parent=11 // pred_check
        %p142 = pneg %p73
      $region14: #{encoder_block_fwd.3} parent=11 // pred_check_branch
        %144 = sbr.rel (%p142) target = $region16
      $region15: #{encoder_block_fwd.3} parent=11 // pred_region
        %p145 = scmp.lt.s32.totalorder %s19, 0
        %s146 = scalar_select %p145, %s19, 0
        %s147 = smul.addr %s146, 4
        %s148 = scalar_lea.vmem %s1, %s147
      $region16: #{encoder_block_fwd.3} parent=11 // pred_fallthru
        _
      // Predicated region
      $region17: #{encoder_block_fwd.3} parent=11 // pred_check
        %p149 = pneg %p99
      $region18: #{encoder_block_fwd.3} parent=11 // pred_check_branch
        %151 = sbr.rel (%p149) target = $region20
      $region19: #{encoder_block_fwd.3} parent=11 // pred_region
        %p152 = scmp.lt.s32.totalorder %s19, 0
        %s153 = scalar_select %p152, %s19, 0
        %s154 = scalar_lea.vmem %s2, %s153
      $region20: #{encoder_block_fwd.3} parent=11 // pred_fallthru
        _
    $region12: #{encoder_block_fwd.3} parent=5 // pred_fallthru
      _
    %p155 = scmp.lt.s32.totalorder %s9, 2
    // Predicated region
    $region21: #{encoder_block_fwd.3} parent=5 // pred_check
      %p156 = pneg %p155
    $region22: #{encoder_block_fwd.3} parent=5 // pred_check_branch
      %158 = sbr.rel (%p156) target = $region24
    $region23: #{encoder_block_fwd.3} parent=5 // pred_region
      // Predicated region
      $region25: #{encoder_block_fwd.3} parent=23 // pred_check
        %p159 = pneg %p41
      $region26: #{encoder_block_fwd.3} parent=23 // pred_check_branch
        %161 = sbr.rel (%p159) target = $region28
      $region27: #{encoder_block_fwd.3} parent=23 // pred_region
        %p162 = scmp.lt.s32.totalorder %s16, 1
        %s163 = scalar_select %p162, %s16, 1
        %s164 = smul.addr %s163, 32
        %s165 = smul.addr %s164, 4
        %s166 = scalar_lea.vmem %s0, %s165
      $region28: #{encoder_block_fwd.3} parent=23 // pred_fallthru
        _
    $region24: #{encoder_block_fwd.3} parent=5 // pred_fallthru
      _
    %p167 = scmp.le.s32.totalorder 1, %s9
    %p168 = scmp.lt.s32.totalorder %s9, 3
    %p169 = pnand %p167, %p168
    %p170 = pneg %p169
    // Predicated region
    $region29: #{encoder_block_fwd.3} parent=5 // pred_check
      _
    $region30: #{encoder_block_fwd.3} parent=5 // pred_check_branch
      %172 = sbr.rel (%p169) target = $region32
    $region31: #{encoder_block_fwd.3} parent=5 // pred_region
      %s173 = ssub.s32 %s9, 1
      %p174 = scmp.lt.s32.totalorder %s18, 1
      %s175 = scalar_select %p174, %s18, 1
      %s176 = smul.addr %s175, 32
      %s177 = smul.addr %s176, 4
      %s178 = scalar_lea.vmem %s0, %s177
      %p179 = pneg %p47
      %p180 = pneg %p44
      %p181 = scmp.lt.s32.totalorder %s19, 0
      %s182 = scalar_select %p181, %s19, 0
      %s183 = smul.addr %s182, 4
      %s184 = scalar_lea.vmem %s1, %s183
      %p185 = pneg %p73
      %p186 = pneg %p70
      %p187 = scmp.lt.s32.totalorder %s19, 0
      %s188 = scalar_select %p187, %s19, 0
      %s189 = scalar_lea.vmem %s2, %s188
      %p190 = pneg %p99
      %p191 = pneg %p96
      %p192 = pneg %p127
      %p193 = pneg %p124
      %p194 = scmp.lt.s32.totalorder %s18, 1
      %s195 = scalar_select %p194, %s18, 1
      %p196 = scmp.lt.s32.totalorder %s19, 0
      %s197 = scalar_select %p196, %s19, 0
      %s198 = smul.addr %s195, 32
      %s199 = sadd.s32 %s197, %s198
      %s200 = smul.addr %s199, 4
      %s201 = scalar_lea.vmem %s3, %s200
      %p202 = scmp.lt.s32.totalorder %s18, 1
      %s203 = scalar_select %p202, %s18, 1
      %s204 = smul.addr %s203, 32
      %s205 = smul.addr %s204, 4
      %s206 = scalar_lea.vmem %s0, %s205
      %p207 = scmp.lt.s32.totalorder %s19, 0
      %s208 = scalar_select %p207, %s19, 0
      %s209 = smul.addr %s208, 4
      %s210 = scalar_lea.vmem %s1, %s209
      %p211 = scmp.lt.s32.totalorder %s19, 0
      %s212 = scalar_select %p211, %s19, 0
      %s213 = scalar_lea.vmem %s2, %s212
      %p214 = scmp.lt.s32.totalorder %s18, 1
      %s215 = scalar_select %p214, %s18, 1
      %p216 = scmp.lt.s32.totalorder %s19, 0
      %s217 = scalar_select %p216, %s19, 0
      %s218 = smul.addr %s215, 32
      %s219 = sadd.s32 %s217, %s218
      %s220 = smul.addr %s219, 4
      %s221 = scalar_lea.vmem %s3, %s220
      %v223 = vld [vmem:[%s206] sm:$0xf]
      %v224 = vld [vmem:[%s206 + $0x4] sm:$0xf]
      %v225 = vld [vmem:[%s206 + $0x8] sm:$0xf]
      %v226 = vld [vmem:[%s206 + $0xc] sm:$0xf]
      %v227 = vld [vmem:[%s206 + $0x10] sm:$0xf]
      %v228 = vld [vmem:[%s206 + $0x14] sm:$0xf]
      %v229 = vld [vmem:[%s206 + $0x18] sm:$0xf]
      %v230 = vld [vmem:[%s206 + $0x1c] sm:$0xf]
      %v231 = vld [vmem:[%s206 + $0x20] sm:$0xf]
      %v232 = vld [vmem:[%s206 + $0x24] sm:$0xf]
      %v233 = vld [vmem:[%s206 + $0x28] sm:$0xf]
      %v234 = vld [vmem:[%s206 + $0x2c] sm:$0xf]
      %v235 = vld [vmem:[%s206 + $0x30] sm:$0xf]
      %v236 = vld [vmem:[%s206 + $0x34] sm:$0xf]
      %v237 = vld [vmem:[%s206 + $0x38] sm:$0xf]
      %v238 = vld [vmem:[%s206 + $0x3c] sm:$0xf]
      %v239 = vld [vmem:[%s206 + $0x40] sm:$0xf]
      %v240 = vld [vmem:[%s206 + $0x44] sm:$0xf]
      %v241 = vld [vmem:[%s206 + $0x48] sm:$0xf]
      %v242 = vld [vmem:[%s206 + $0x4c] sm:$0xf]
      %v243 = vld [vmem:[%s206 + $0x50] sm:$0xf]
      %v244 = vld [vmem:[%s206 + $0x54] sm:$0xf]
      %v245 = vld [vmem:[%s206 + $0x58] sm:$0xf]
      %v246 = vld [vmem:[%s206 + $0x5c] sm:$0xf]
      %v247 = vld [vmem:[%s206 + $0x60] sm:$0xf]
      %v248 = vld [vmem:[%s206 + $0x64] sm:$0xf]
      %v249 = vld [vmem:[%s206 + $0x68] sm:$0xf]
      %v250 = vld [vmem:[%s206 + $0x6c] sm:$0x7]
      %v251 = vld [vmem:[%s210] sm:$0xf]
      %v252 = vld [vmem:[%s210 + $0x4] sm:$0xf]
      %v253 = vld [vmem:[%s206 + $0x6c] sm:$0xf]
      %v254 = vld [vmem:[%s210 + $0x8] sm:$0xf]
      %v255 = vld [vmem:[%s210 + $0xc] sm:$0xf]
      %v284 = vunpack.c.l.b16 %v223
      %v285 = vunpack.c.l.b16 %v224
      %v286 = vunpack.c.l.b16 %v225
      %v287 = vunpack.c.l.b16 %v226
      %v288 = vunpack.c.l.b16 %v227
      %v289 = vunpack.c.l.b16 %v228
      %v290 = vunpack.c.l.b16 %v229
      %v291 = vunpack.c.l.b16 %v230
      %v292 = vunpack.c.l.b16 %v231
      %v293 = vunpack.c.l.b16 %v232
      %v294 = vunpack.c.l.b16 %v233
      %v295 = vunpack.c.l.b16 %v234
      %v296 = vunpack.c.l.b16 %v235
      %v297 = vunpack.c.l.b16 %v236
      %v298 = vunpack.c.l.b16 %v237
      %v299 = vunpack.c.l.b16 %v238
      %v300 = vunpack.c.l.b16 %v239
      %v301 = vunpack.c.l.b16 %v240
      %v302 = vunpack.c.l.b16 %v241
      %v303 = vunpack.c.l.b16 %v242
      %v304 = vunpack.c.l.b16 %v243
      %v305 = vunpack.c.l.b16 %v244
      %v306 = vunpack.c.l.b16 %v245
      %v307 = vunpack.c.l.b16 %v246
      %v308 = vunpack.c.l.b16 %v247
      %v309 = vunpack.c.l.b16 %v248
      %v310 = vunpack.c.l.b16 %v249
      %v311 = vunpack.c.l.b16 %v253
      %v312 = vpack.c.b16 %v285, %v284
      %v313 = vpack.c.b16 %v287, %v286
      %v314 = vpack.c.b16 %v289, %v288
      %v315 = vpack.c.b16 %v291, %v290
      %v316 = vpack.c.b16 %v293, %v292
      %v317 = vpack.c.b16 %v295, %v294
      %v318 = vpack.c.b16 %v297, %v296
      %v319 = vpack.c.b16 %v299, %v298
      %v320 = vpack.c.b16 %v301, %v300
      %v321 = vpack.c.b16 %v303, %v302
      %v322 = vpack.c.b16 %v305, %v304
      %v323 = vpack.c.b16 %v307, %v306
      %v324 = vpack.c.b16 %v309, %v308
      %v325 = vpack.c.b16 %v311, %v310
      %vm326 = vsmask.f32 7424
      %v328 = vshrl.u32 %v312, 16
      %v330 = vshll.u32 %v312, 16
      %v332 = vrot.slane %v330, 1
      %v333 = vor.u32 %v328, %v332
      %v335 = vshll.u32 %v313, 16
      %v337 = vrot.slane %v335, 1
      %v338 = vsel %vm326, %v333, %v337
      %v339 = vshrl.u32 %v313, 16
      %v341 = vor.u32 %v339, %v337
      %v343 = vshll.u32 %v314, 16
      %v345 = vrot.slane %v343, 1
      %v346 = vsel %vm326, %v341, %v345
      %v347 = vshrl.u32 %v314, 16
      %v349 = vor.u32 %v347, %v345
      %v351 = vshll.u32 %v315, 16
      %v353 = vrot.slane %v351, 1
      %v354 = vsel %vm326, %v349, %v353
      %v355 = vshrl.u32 %v315, 16
      %v357 = vor.u32 %v355, %v353
      %v359 = vshll.u32 %v316, 16
      %v361 = vrot.slane %v359, 1
      %v362 = vsel %vm326, %v357, %v361
      %v363 = vshrl.u32 %v316, 16
      %v365 = vor.u32 %v363, %v361
      %v367 = vshll.u32 %v317, 16
      %v369 = vrot.slane %v367, 1
      %v370 = vsel %vm326, %v365, %v369
      %v371 = vshrl.u32 %v317, 16
      %v373 = vor.u32 %v371, %v369
      %v375 = vshll.u32 %v318, 16
      %v377 = vrot.slane %v375, 1
      %v378 = vsel %vm326, %v373, %v377
      %v379 = vshrl.u32 %v318, 16
      %v381 = vor.u32 %v379, %v377
      %v383 = vshll.u32 %v319, 16
      %v385 = vrot.slane %v383, 1
      %v386 = vsel %vm326, %v381, %v385
      %v387 = vshrl.u32 %v319, 16
      %v389 = vor.u32 %v387, %v385
      %v391 = vshll.u32 %v320, 16
      %v393 = vrot.slane %v391, 1
      %v394 = vsel %vm326, %v389, %v393
      %v395 = vshrl.u32 %v320, 16
      %v397 = vor.u32 %v395, %v393
      %v399 = vshll.u32 %v321, 16
      %v401 = vrot.slane %v399, 1
      %v402 = vsel %vm326, %v397, %v401
      %v403 = vshrl.u32 %v321, 16
      %v405 = vor.u32 %v403, %v401
      %v407 = vshll.u32 %v322, 16
      %v409 = vrot.slane %v407, 1
      %v410 = vsel %vm326, %v405, %v409
      %v411 = vshrl.u32 %v322, 16
      %v413 = vor.u32 %v411, %v409
      %v415 = vshll.u32 %v323, 16
      %v417 = vrot.slane %v415, 1
      %v418 = vsel %vm326, %v413, %v417
      %v419 = vshrl.u32 %v323, 16
      %v421 = vor.u32 %v419, %v417
      %v423 = vshll.u32 %v324, 16
      %v425 = vrot.slane %v423, 1
      %v426 = vsel %vm326, %v421, %v425
      %v427 = vshrl.u32 %v324, 16
      %v429 = vor.u32 %v427, %v425
      %v431 = vshll.u32 %v325, 16
      %v433 = vrot.slane %v431, 1
      %v434 = vsel %vm326, %v429, %v433
      %v435 = vshrl.u32 %v325, 16
      %v437 = vor.u32 %v435, %v433
      %v440 = vunpack.c.l.b16 %v254
      %v441 = vunpack.c.l.b16 %v255
      %v442 = vpack.c.b16 %v441, %v440
      %vm444 = vcmask 130048
      %v446 = vsel %vm444, %v338, 0
      %v449 = vsel %vm444, %v346, 0
      %v452 = vsel %vm444, %v354, 0
      %v455 = vsel %vm444, %v362, 0
      %v458 = vsel %vm444, %v370, 0
      %v461 = vsel %vm444, %v378, 0
      %v464 = vsel %vm444, %v386, 0
      %v467 = vsel %vm444, %v394, 0
      %v470 = vsel %vm444, %v402, 0
      %v473 = vsel %vm444, %v410, 0
      %v476 = vsel %vm444, %v418, 0
      %v479 = vsel %vm444, %v426, 0
      %v482 = vsel %vm444, %v434, 0
      %v485 = vsel %vm444, %v437, 0
      %487 = vmatprep.subr.bf16.mxu0 0
      %488 = vmatpush1.bf16.msra.mxu0 0
      %489 = vmatprep.subr.bf16.mxu0 0
      %490 = vmatpush1.bf16.msra.mxu0 0
      %491 = vmatprep.subr.bf16.mxu0 0
      %492 = vmatpush1.bf16.msra.mxu0 0
      %493 = vmatprep.subr.bf16.mxu0 0
      %494 = vmatpush1.bf16.msra.mxu0 0
      %495 = vmatprep.subr.bf16.mxu0 0
      %496 = vmatpush1.bf16.msra.mxu0 0
      %497 = vmatprep.subr.bf16.mxu0 0
      %498 = vmatpush1.bf16.msra.mxu0 0
      %499 = vmatprep.subr.bf16.mxu0 0
      %500 = vmatpush1.bf16.msra.mxu0 0
      %501 = vmatprep.subr.bf16.mxu0 0
      %502 = vmatpush1.bf16.msra.mxu0 %v442
      %503 = vmatprep.subr.bf16.mxu0 0
      %504 = vmatpush2.bf16.msra.mxu0 0
      %505 = vmatprep.subr.bf16.mxu0 0
      %506 = vmatpush2.bf16.msra.mxu0 0
      %507 = vmatprep.subr.bf16.mxu0 0
      %508 = vmatpush2.bf16.msra.mxu0 0
      %509 = vmatprep.subr.bf16.mxu0 0
      %510 = vmatpush2.bf16.msra.mxu0 0
      %511 = vmatprep.subr.bf16.mxu0 0
      %512 = vmatpush2.bf16.msra.mxu0 0
      %513 = vmatprep.subr.bf16.mxu0 0
      %514 = vmatpush2.bf16.msra.mxu0 0
      %515 = vmatprep.subr.bf16.mxu0 0
      %516 = vmatpush2.bf16.msra.mxu0 0
      %517 = vmatprep.subr.bf16.mxu0 0
      %518 = vmatpush2.bf16.msra.mxu0 0
      %519 = vmatprep.mubr.bf16.mxu0 0
      %520 = vmatmul.mubr.bf16.gmra.mxu0 %v446
      %v521 = vpop.f32.mrf.mxu0
      %v522 = vadd.f32 0.0, %v521
      %v523 = vpop.f32.mrf.mxu0
      %v524 = vpop.f32.mrf.mxu0
      %v525 = vadd.f32 0.0, %v524
      %v526 = vpop.f32.mrf.mxu0
      %527 = vmatprep.mubr.bf16.mxu0 0
      %528 = vmatmul.mubr.bf16.gmra.mxu0 %v449
      %v529 = vpop.f32.mrf.mxu0
      %v530 = vadd.f32 0.0, %v529
      %v531 = vpop.f32.mrf.mxu0
      %v532 = vpop.f32.mrf.mxu0
      %v533 = vadd.f32 0.0, %v532
      %v534 = vpop.f32.mrf.mxu0
      %535 = vmatprep.mubr.bf16.mxu0 0
      %536 = vmatmul.mubr.bf16.gmra.mxu0 %v452
      %v537 = vpop.f32.mrf.mxu0
      %v538 = vadd.f32 0.0, %v537
      %v539 = vpop.f32.mrf.mxu0
      %v540 = vpop.f32.mrf.mxu0
      %v541 = vadd.f32 0.0, %v540
      %v542 = vpop.f32.mrf.mxu0
      %543 = vmatprep.mubr.bf16.mxu0 0
      %544 = vmatmul.mubr.bf16.gmra.mxu0 %v455
      %v545 = vpop.f32.mrf.mxu0
      %v546 = vadd.f32 0.0, %v545
      %v547 = vpop.f32.mrf.mxu0
      %v548 = vpop.f32.mrf.mxu0
      %v549 = vadd.f32 0.0, %v548
      %v550 = vpop.f32.mrf.mxu0
      %551 = vmatprep.mubr.bf16.mxu0 0
      %552 = vmatmul.mubr.bf16.gmra.mxu0 %v458
      %v553 = vpop.f32.mrf.mxu0
      %v554 = vadd.f32 0.0, %v553
      %v555 = vpop.f32.mrf.mxu0
      %v556 = vpop.f32.mrf.mxu0
      %v557 = vadd.f32 0.0, %v556
      %v558 = vpop.f32.mrf.mxu0
      %559 = vmatprep.mubr.bf16.mxu0 0
      %560 = vmatmul.mubr.bf16.gmra.mxu0 %v461
      %v561 = vpop.f32.mrf.mxu0
      %v562 = vadd.f32 0.0, %v561
      %v563 = vpop.f32.mrf.mxu0
      %v564 = vpop.f32.mrf.mxu0
      %v565 = vadd.f32 0.0, %v564
      %v566 = vpop.f32.mrf.mxu0
      %567 = vmatprep.mubr.bf16.mxu0 0
      %568 = vmatmul.mubr.bf16.gmra.mxu0 %v464
      %v569 = vpop.f32.mrf.mxu0
      %v570 = vadd.f32 0.0, %v569
      %v571 = vpop.f32.mrf.mxu0
      %v572 = vpop.f32.mrf.mxu0
      %v573 = vadd.f32 0.0, %v572
      %v574 = vpop.f32.mrf.mxu0
      %575 = vmatprep.mubr.bf16.mxu0 0
      %576 = vmatmul.mubr.bf16.gmra.mxu0 %v467
      %v577 = vpop.f32.mrf.mxu0
      %v578 = vadd.f32 0.0, %v577
      %v579 = vpop.f32.mrf.mxu0
      %v580 = vpop.f32.mrf.mxu0
      %v581 = vadd.f32 0.0, %v580
      %v582 = vpop.f32.mrf.mxu0
      %583 = vmatprep.mubr.bf16.mxu0 0
      %584 = vmatmul.mubr.bf16.gmra.mxu0 %v470
      %v585 = vpop.f32.mrf.mxu0
      %v586 = vadd.f32 0.0, %v585
      %v587 = vpop.f32.mrf.mxu0
      %v588 = vpop.f32.mrf.mxu0
      %v589 = vadd.f32 0.0, %v588
      %v590 = vpop.f32.mrf.mxu0
      %591 = vmatprep.mubr.bf16.mxu0 0
      %592 = vmatmul.mubr.bf16.gmra.mxu0 %v473
      %v593 = vpop.f32.mrf.mxu0
      %v594 = vadd.f32 0.0, %v593
      %v595 = vpop.f32.mrf.mxu0
      %v596 = vpop.f32.mrf.mxu0
      %v597 = vadd.f32 0.0, %v596
      %v598 = vpop.f32.mrf.mxu0
      %599 = vmatprep.mubr.bf16.mxu0 0
      %600 = vmatmul.mubr.bf16.gmra.mxu0 %v476
      %v601 = vpop.f32.mrf.mxu0
      %v602 = vadd.f32 0.0, %v601
      %v603 = vpop.f32.mrf.mxu0
      %v604 = vpop.f32.mrf.mxu0
      %v605 = vadd.f32 0.0, %v604
      %v606 = vpop.f32.mrf.mxu0
      %607 = vmatprep.mubr.bf16.mxu0 0
      %608 = vmatmul.mubr.bf16.gmra.mxu0 %v479
      %v609 = vpop.f32.mrf.mxu0
      %v610 = vadd.f32 0.0, %v609
      %v611 = vpop.f32.mrf.mxu0
      %v612 = vpop.f32.mrf.mxu0
      %v613 = vadd.f32 0.0, %v612
      %v614 = vpop.f32.mrf.mxu0
      %615 = vmatprep.mubr.bf16.mxu0 0
      %616 = vmatmul.mubr.bf16.gmra.mxu0 %v482
      %v617 = vpop.f32.mrf.mxu0
      %v618 = vadd.f32 0.0, %v617
      %v619 = vpop.f32.mrf.mxu0
      %v620 = vpop.f32.mrf.mxu0
      %v621 = vadd.f32 0.0, %v620
      %v622 = vpop.f32.mrf.mxu0
      %623 = vmatprep.mubr.bf16.mxu0 0
      %624 = vmatmul.mubr.bf16.gmra.mxu0 %v485
      %v625 = vpop.f32.mrf.mxu0
      %v626 = vadd.f32 0.0, %v625
      %v627 = vpop.f32.mrf.mxu0
      %v628 = vpop.f32.mrf.mxu0
      %v629 = vadd.f32 0.0, %v628
      %v630 = vpop.f32.mrf.mxu0
      %631 = vdwg.mxu0
      %v633 = vunpack.c.l.b16 %v250
      %v634 = vpack.c.b16 %v633, %v310
      %v637 = vunpack.c.l.b16 %v251
      %v638 = vunpack.c.l.b16 %v252
      %v639 = vpack.c.b16 %v638, %v637
      %v641 = vsel %vm444, %v312, 0
      %v643 = vsel %vm444, %v313, 0
      %v645 = vsel %vm444, %v314, 0
      %v647 = vsel %vm444, %v315, 0
      %v649 = vsel %vm444, %v316, 0
      %v651 = vsel %vm444, %v317, 0
      %v653 = vsel %vm444, %v318, 0
      %v655 = vsel %vm444, %v319, 0
      %v657 = vsel %vm444, %v320, 0
      %v659 = vsel %vm444, %v321, 0
      %v661 = vsel %vm444, %v322, 0
      %v663 = vsel %vm444, %v323, 0
      %v665 = vsel %vm444, %v324, 0
      %v668 = vsel %vm444, %v634, 0
      %670 = vmatprep.subr.bf16.mxu0 0
      %671 = vmatpush1.bf16.msra.mxu0 0
      %672 = vmatprep.subr.bf16.mxu0 0
      %673 = vmatpush1.bf16.msra.mxu0 0
      %674 = vmatprep.subr.bf16.mxu0 0
      %675 = vmatpush1.bf16.msra.mxu0 0
      %676 = vmatprep.subr.bf16.mxu0 0
      %677 = vmatpush1.bf16.msra.mxu0 0
      %678 = vmatprep.subr.bf16.mxu0 0
      %679 = vmatpush1.bf16.msra.mxu0 0
      %680 = vmatprep.subr.bf16.mxu0 0
      %681 = vmatpush1.bf16.msra.mxu0 0
      %682 = vmatprep.subr.bf16.mxu0 0
      %683 = vmatpush1.bf16.msra.mxu0 0
      %684 = vmatprep.subr.bf16.mxu0 0
      %685 = vmatpush1.bf16.msra.mxu0 %v639
      %686 = vmatprep.subr.bf16.mxu0 0
      %687 = vmatpush2.bf16.msra.mxu0 0
      %688 = vmatprep.subr.bf16.mxu0 0
      %689 = vmatpush2.bf16.msra.mxu0 0
      %690 = vmatprep.subr.bf16.mxu0 0
      %691 = vmatpush2.bf16.msra.mxu0 0
      %692 = vmatprep.subr.bf16.mxu0 0
      %693 = vmatpush2.bf16.msra.mxu0 0
      %694 = vmatprep.subr.bf16.mxu0 0
      %695 = vmatpush2.bf16.msra.mxu0 0
      %696 = vmatprep.subr.bf16.mxu0 0
      %697 = vmatpush2.bf16.msra.mxu0 0
      %698 = vmatprep.subr.bf16.mxu0 0
      %699 = vmatpush2.bf16.msra.mxu0 0
      %700 = vmatprep.subr.bf16.mxu0 0
      %701 = vmatpush2.bf16.msra.mxu0 0
      %702 = vmatprep.mubr.bf16.mxu0 0
      %703 = vmatmul.mubr.bf16.gmra.mxu0 %v641
      %v704 = vpop.f32.mrf.mxu0
      %v705 = vadd.f32 %v522, %v704
      %v706 = vpop.f32.mrf.mxu0
      %v707 = vpop.f32.mrf.mxu0
      %v708 = vadd.f32 %v525, %v707
      %v709 = vpop.f32.mrf.mxu0
      %710 = vmatprep.mubr.bf16.mxu0 0
      %711 = vmatmul.mubr.bf16.gmra.mxu0 %v643
      %v712 = vpop.f32.mrf.mxu0
      %v713 = vadd.f32 %v530, %v712
      %v714 = vpop.f32.mrf.mxu0
      %v715 = vpop.f32.mrf.mxu0
      %v716 = vadd.f32 %v533, %v715
      %v717 = vpop.f32.mrf.mxu0
      %718 = vmatprep.mubr.bf16.mxu0 0
      %719 = vmatmul.mubr.bf16.gmra.mxu0 %v645
      %v720 = vpop.f32.mrf.mxu0
      %v721 = vadd.f32 %v538, %v720
      %v722 = vpop.f32.mrf.mxu0
      %v723 = vpop.f32.mrf.mxu0
      %v724 = vadd.f32 %v541, %v723
      %v725 = vpop.f32.mrf.mxu0
      %726 = vmatprep.mubr.bf16.mxu0 0
      %727 = vmatmul.mubr.bf16.gmra.mxu0 %v647
      %v728 = vpop.f32.mrf.mxu0
      %v729 = vadd.f32 %v546, %v728
      %v730 = vpop.f32.mrf.mxu0
      %v731 = vpop.f32.mrf.mxu0
      %v732 = vadd.f32 %v549, %v731
      %v733 = vpop.f32.mrf.mxu0
      %734 = vmatprep.mubr.bf16.mxu0 0
      %735 = vmatmul.mubr.bf16.gmra.mxu0 %v649
      %v736 = vpop.f32.mrf.mxu0
      %v737 = vadd.f32 %v554, %v736
      %v738 = vpop.f32.mrf.mxu0
      %v739 = vpop.f32.mrf.mxu0
      %v740 = vadd.f32 %v557, %v739
      %v741 = vpop.f32.mrf.mxu0
      %742 = vmatprep.mubr.bf16.mxu0 0
      %743 = vmatmul.mubr.bf16.gmra.mxu0 %v651
      %v744 = vpop.f32.mrf.mxu0
      %v745 = vadd.f32 %v562, %v744
      %v746 = vpop.f32.mrf.mxu0
      %v747 = vpop.f32.mrf.mxu0
      %v748 = vadd.f32 %v565, %v747
      %v749 = vpop.f32.mrf.mxu0
      %750 = vmatprep.mubr.bf16.mxu0 0
      %751 = vmatmul.mubr.bf16.gmra.mxu0 %v653
      %v752 = vpop.f32.mrf.mxu0
      %v753 = vadd.f32 %v570, %v752
      %v754 = vpop.f32.mrf.mxu0
      %v755 = vpop.f32.mrf.mxu0
      %v756 = vadd.f32 %v573, %v755
      %v757 = vpop.f32.mrf.mxu0
      %758 = vmatprep.mubr.bf16.mxu0 0
      %759 = vmatmul.mubr.bf16.gmra.mxu0 %v655
      %v760 = vpop.f32.mrf.mxu0
      %v761 = vadd.f32 %v578, %v760
      %v762 = vpop.f32.mrf.mxu0
      %v763 = vpop.f32.mrf.mxu0
      %v764 = vadd.f32 %v581, %v763
      %v765 = vpop.f32.mrf.mxu0
      %766 = vmatprep.mubr.bf16.mxu0 0
      %767 = vmatmul.mubr.bf16.gmra.mxu0 %v657
      %v768 = vpop.f32.mrf.mxu0
      %v769 = vadd.f32 %v586, %v768
      %v770 = vpop.f32.mrf.mxu0
      %v771 = vpop.f32.mrf.mxu0
      %v772 = vadd.f32 %v589, %v771
      %v773 = vpop.f32.mrf.mxu0
      %774 = vmatprep.mubr.bf16.mxu0 0
      %775 = vmatmul.mubr.bf16.gmra.mxu0 %v659
      %v776 = vpop.f32.mrf.mxu0
      %v777 = vadd.f32 %v594, %v776
      %v778 = vpop.f32.mrf.mxu0
      %v779 = vpop.f32.mrf.mxu0
      %v780 = vadd.f32 %v597, %v779
      %v781 = vpop.f32.mrf.mxu0
      %782 = vmatprep.mubr.bf16.mxu0 0
      %783 = vmatmul.mubr.bf16.gmra.mxu0 %v661
      %v784 = vpop.f32.mrf.mxu0
      %v785 = vadd.f32 %v602, %v784
      %v786 = vpop.f32.mrf.mxu0
      %v787 = vpop.f32.mrf.mxu0
      %v788 = vadd.f32 %v605, %v787
      %v789 = vpop.f32.mrf.mxu0
      %790 = vmatprep.mubr.bf16.mxu0 0
      %791 = vmatmul.mubr.bf16.gmra.mxu0 %v663
      %v792 = vpop.f32.mrf.mxu0
      %v793 = vadd.f32 %v610, %v792
      %v794 = vpop.f32.mrf.mxu0
      %v795 = vpop.f32.mrf.mxu0
      %v796 = vadd.f32 %v613, %v795
      %v797 = vpop.f32.mrf.mxu0
      %798 = vmatprep.mubr.bf16.mxu0 0
      %799 = vmatmul.mubr.bf16.gmra.mxu0 %v665
      %v800 = vpop.f32.mrf.mxu0
      %v801 = vadd.f32 %v618, %v800
      %v802 = vpop.f32.mrf.mxu0
      %v803 = vpop.f32.mrf.mxu0
      %v804 = vadd.f32 %v621, %v803
      %v805 = vpop.f32.mrf.mxu0
      %806 = vmatprep.mubr.bf16.mxu0 0
      %807 = vmatmul.mubr.bf16.gmra.mxu0 %v668
      %v808 = vpop.f32.mrf.mxu0
      %v809 = vadd.f32 %v626, %v808
      %v810 = vpop.f32.mrf.mxu0
      %v811 = vpop.f32.mrf.mxu0
      %v812 = vadd.f32 %v629, %v811
      %v813 = vpop.f32.mrf.mxu0
      %814 = vdwg.mxu0
      %v815 = vld [vmem:[%s206] sm:$0xe]
      %v816 = vld [vmem:[%s210 + $0x10] sm:$0xf]
      %v817 = vld [vmem:[%s210 + $0x14] sm:$0xf]
      %v819 = vunpack.c.l.b16 %v815
      %v820 = vpack.c.b16 %v285, %v819
      %vm821 = vcmask 1046528
      %v822 = vrot.slane %v820, 1
      %v823 = vrot.slane %v313, 1
      %v824 = vsel %vm821, %v822, %v823
      %v825 = vrot.slane %v314, 1
      %v826 = vsel %vm821, %v823, %v825
      %v827 = vrot.slane %v315, 1
      %v828 = vsel %vm821, %v825, %v827
      %v829 = vrot.slane %v316, 1
      %v830 = vsel %vm821, %v827, %v829
      %v831 = vrot.slane %v317, 1
      %v832 = vsel %vm821, %v829, %v831
      %v833 = vrot.slane %v318, 1
      %v834 = vsel %vm821, %v831, %v833
      %v835 = vrot.slane %v319, 1
      %v836 = vsel %vm821, %v833, %v835
      %v837 = vrot.slane %v320, 1
      %v838 = vsel %vm821, %v835, %v837
      %v839 = vrot.slane %v321, 1
      %v840 = vsel %vm821, %v837, %v839
      %v841 = vrot.slane %v322, 1
      %v842 = vsel %vm821, %v839, %v841
      %v843 = vrot.slane %v323, 1
      %v844 = vsel %vm821, %v841, %v843
      %v845 = vrot.slane %v324, 1
      %v846 = vsel %vm821, %v843, %v845
      %v847 = vrot.slane %v325, 1
      %v848 = vsel %vm821, %v845, %v847
      %v851 = vunpack.c.l.b16 %v816
      %v852 = vunpack.c.l.b16 %v817
      %v853 = vpack.c.b16 %v852, %v851
      %v856 = vsel %vm444, %v824, 0
      %v859 = vsel %vm444, %v826, 0
      %v862 = vsel %vm444, %v828, 0
      %v865 = vsel %vm444, %v830, 0
      %v868 = vsel %vm444, %v832, 0
      %v871 = vsel %vm444, %v834, 0
      %v874 = vsel %vm444, %v836, 0
      %v877 = vsel %vm444, %v838, 0
      %v880 = vsel %vm444, %v840, 0
      %v883 = vsel %vm444, %v842, 0
      %v886 = vsel %vm444, %v844, 0
      %v889 = vsel %vm444, %v846, 0
      %v892 = vsel %vm444, %v848, 0
      %v895 = vsel %vm444, %v847, 0
      %897 = vmatprep.subr.bf16.mxu0 0
      %898 = vmatpush1.bf16.msra.mxu0 0
      %899 = vmatprep.subr.bf16.mxu0 0
      %900 = vmatpush1.bf16.msra.mxu0 0
      %901 = vmatprep.subr.bf16.mxu0 0
      %902 = vmatpush1.bf16.msra.mxu0 0
      %903 = vmatprep.subr.bf16.mxu0 0
      %904 = vmatpush1.bf16.msra.mxu0 0
      %905 = vmatprep.subr.bf16.mxu0 0
      %906 = vmatpush1.bf16.msra.mxu0 0
      %907 = vmatprep.subr.bf16.mxu0 0
      %908 = vmatpush1.bf16.msra.mxu0 0
      %909 = vmatprep.subr.bf16.mxu0 0
      %910 = vmatpush1.bf16.msra.mxu0 0
      %911 = vmatprep.subr.bf16.mxu0 0
      %912 = vmatpush1.bf16.msra.mxu0 %v853
      %913 = vmatprep.subr.bf16.mxu0 0
      %914 = vmatpush2.bf16.msra.mxu0 0
      %915 = vmatprep.subr.bf16.mxu0 0
      %916 = vmatpush2.bf16.msra.mxu0 0
      %917 = vmatprep.subr.bf16.mxu0 0
      %918 = vmatpush2.bf16.msra.mxu0 0
      %919 = vmatprep.subr.bf16.mxu0 0
      %920 = vmatpush2.bf16.msra.mxu0 0
      %921 = vmatprep.subr.bf16.mxu0 0
      %922 = vmatpush2.bf16.msra.mxu0 0
      %923 = vmatprep.subr.bf16.mxu0 0
      %924 = vmatpush2.bf16.msra.mxu0 0
      %925 = vmatprep.subr.bf16.mxu0 0
      %926 = vmatpush2.bf16.msra.mxu0 0
      %927 = vmatprep.subr.bf16.mxu0 0
      %928 = vmatpush2.bf16.msra.mxu0 0
      %929 = vmatprep.mubr.bf16.mxu0 0
      %930 = vmatmul.mubr.bf16.gmra.mxu0 %v856
      %v931 = vpop.f32.mrf.mxu0
      %v932 = vadd.f32 0.0, %v931
      %v933 = vpop.f32.mrf.mxu0
      %v934 = vpop.f32.mrf.mxu0
      %v935 = vadd.f32 0.0, %v934
      %v936 = vpop.f32.mrf.mxu0
      %937 = vmatprep.mubr.bf16.mxu0 0
      %938 = vmatmul.mubr.bf16.gmra.mxu0 %v859
      %v939 = vpop.f32.mrf.mxu0
      %v940 = vadd.f32 0.0, %v939
      %v941 = vpop.f32.mrf.mxu0
      %v942 = vpop.f32.mrf.mxu0
      %v943 = vadd.f32 0.0, %v942
      %v944 = vpop.f32.mrf.mxu0
      %945 = vmatprep.mubr.bf16.mxu0 0
      %946 = vmatmul.mubr.bf16.gmra.mxu0 %v862
      %v947 = vpop.f32.mrf.mxu0
      %v948 = vadd.f32 0.0, %v947
      %v949 = vpop.f32.mrf.mxu0
      %v950 = vpop.f32.mrf.mxu0
      %v951 = vadd.f32 0.0, %v950
      %v952 = vpop.f32.mrf.mxu0
      %953 = vmatprep.mubr.bf16.mxu0 0
      %954 = vmatmul.mubr.bf16.gmra.mxu0 %v865
      %v955 = vpop.f32.mrf.mxu0
      %v956 = vadd.f32 0.0, %v955
      %v957 = vpop.f32.mrf.mxu0
      %v958 = vpop.f32.mrf.mxu0
      %v959 = vadd.f32 0.0, %v958
      %v960 = vpop.f32.mrf.mxu0
      %961 = vmatprep.mubr.bf16.mxu0 0
      %962 = vmatmul.mubr.bf16.gmra.mxu0 %v868
      %v963 = vpop.f32.mrf.mxu0
      %v964 = vadd.f32 0.0, %v963
      %v965 = vpop.f32.mrf.mxu0
      %v966 = vpop.f32.mrf.mxu0
      %v967 = vadd.f32 0.0, %v966
      %v968 = vpop.f32.mrf.mxu0
      %969 = vmatprep.mubr.bf16.mxu0 0
      %970 = vmatmul.mubr.bf16.gmra.mxu0 %v871
      %v971 = vpop.f32.mrf.mxu0
      %v972 = vadd.f32 0.0, %v971
      %v973 = vpop.f32.mrf.mxu0
      %v974 = vpop.f32.mrf.mxu0
      %v975 = vadd.f32 0.0, %v974
      %v976 = vpop.f32.mrf.mxu0
      %977 = vmatprep.mubr.bf16.mxu0 0
      %978 = vmatmul.mubr.bf16.gmra.mxu0 %v874
      %v979 = vpop.f32.mrf.mxu0
      %v980 = vadd.f32 0.0, %v979
      %v981 = vpop.f32.mrf.mxu0
      %v982 = vpop.f32.mrf.mxu0
      %v983 = vadd.f32 0.0, %v982
      %v984 = vpop.f32.mrf.mxu0
      %985 = vmatprep.mubr.bf16.mxu0 0
      %986 = vmatmul.mubr.bf16.gmra.mxu0 %v877
      %v987 = vpop.f32.mrf.mxu0
      %v988 = vadd.f32 0.0, %v987
      %v989 = vpop.f32.mrf.mxu0
      %v990 = vpop.f32.mrf.mxu0
      %v991 = vadd.f32 0.0, %v990
      %v992 = vpop.f32.mrf.mxu0
      %993 = vmatprep.mubr.bf16.mxu0 0
      %994 = vmatmul.mubr.bf16.gmra.mxu0 %v880
      %v995 = vpop.f32.mrf.mxu0
      %v996 = vadd.f32 0.0, %v995
      %v997 = vpop.f32.mrf.mxu0
      %v998 = vpop.f32.mrf.mxu0
      %v999 = vadd.f32 0.0, %v998
      %v1000 = vpop.f32.mrf.mxu0
      %1001 = vmatprep.mubr.bf16.mxu0 0
      %1002 = vmatmul.mubr.bf16.gmra.mxu0 %v883
      %v1003 = vpop.f32.mrf.mxu0
      %v1004 = vadd.f32 0.0, %v1003
      %v1005 = vpop.f32.mrf.mxu0
      %v1006 = vpop.f32.mrf.mxu0
      %v1007 = vadd.f32 0.0, %v1006
      %v1008 = vpop.f32.mrf.mxu0
      %1009 = vmatprep.mubr.bf16.mxu0 0
      %1010 = vmatmul.mubr.bf16.gmra.mxu0 %v886
      %v1011 = vpop.f32.mrf.mxu0
      %v1012 = vadd.f32 0.0, %v1011
      %v1013 = vpop.f32.mrf.mxu0
      %v1014 = vpop.f32.mrf.mxu0
      %v1015 = vadd.f32 0.0, %v1014
      %v1016 = vpop.f32.mrf.mxu0
      %1017 = vmatprep.mubr.bf16.mxu0 0
      %1018 = vmatmul.mubr.bf16.gmra.mxu0 %v889
      %v1019 = vpop.f32.mrf.mxu0
      %v1020 = vadd.f32 0.0, %v1019
      %v1021 = vpop.f32.mrf.mxu0
      %v1022 = vpop.f32.mrf.mxu0
      %v1023 = vadd.f32 0.0, %v1022
      %v1024 = vpop.f32.mrf.mxu0
      %1025 = vmatprep.mubr.bf16.mxu0 0
      %1026 = vmatmul.mubr.bf16.gmra.mxu0 %v892
      %v1027 = vpop.f32.mrf.mxu0
      %v1028 = vadd.f32 0.0, %v1027
      %v1029 = vpop.f32.mrf.mxu0
      %v1030 = vpop.f32.mrf.mxu0
      %v1031 = vadd.f32 0.0, %v1030
      %v1032 = vpop.f32.mrf.mxu0
      %1033 = vmatprep.mubr.bf16.mxu0 0
      %1034 = vmatmul.mubr.bf16.gmra.mxu0 %v895
      %v1035 = vpop.f32.mrf.mxu0
      %v1036 = vadd.f32 0.0, %v1035
      %v1037 = vpop.f32.mrf.mxu0
      %v1038 = vpop.f32.mrf.mxu0
      %v1039 = vadd.f32 0.0, %v1038
      %v1040 = vpop.f32.mrf.mxu0
      %1041 = vdwg.mxu0
      %v1042 = vadd.f32 %v705, %v932
      %v1043 = vadd.f32 %v708, %v935
      %v1044 = vadd.f32 %v713, %v940
      %v1045 = vadd.f32 %v716, %v943
      %v1046 = vadd.f32 %v721, %v948
      %v1047 = vadd.f32 %v724, %v951
      %v1048 = vadd.f32 %v729, %v956
      %v1049 = vadd.f32 %v732, %v959
      %v1050 = vadd.f32 %v737, %v964
      %v1051 = vadd.f32 %v740, %v967
      %v1052 = vadd.f32 %v745, %v972
      %v1053 = vadd.f32 %v748, %v975
      %v1054 = vadd.f32 %v753, %v980
      %v1055 = vadd.f32 %v756, %v983
      %v1056 = vadd.f32 %v761, %v988
      %v1057 = vadd.f32 %v764, %v991
      %v1058 = vadd.f32 %v769, %v996
      %v1059 = vadd.f32 %v772, %v999
      %v1060 = vadd.f32 %v777, %v1004
      %v1061 = vadd.f32 %v780, %v1007
      %v1062 = vadd.f32 %v785, %v1012
      %v1063 = vadd.f32 %v788, %v1015
      %v1064 = vadd.f32 %v793, %v1020
      %v1065 = vadd.f32 %v796, %v1023
      %v1066 = vadd.f32 %v801, %v1028
      %v1067 = vadd.f32 %v804, %v1031
      %v1068 = vadd.f32 %v809, %v1036
      %v1069 = vadd.f32 %v812, %v1039
      %v1070 = vld [vmem:[%s206 + $0x8] sm:$0xf]
      %v1071 = vld [vmem:[%s206 + $0xc] sm:$0xf]
      %v1072 = vld [vmem:[%s206 + $0x10] sm:$0xf]
      %v1073 = vld [vmem:[%s206 + $0x14] sm:$0xf]
      %v1074 = vld [vmem:[%s206 + $0x18] sm:$0xf]
      %v1075 = vld [vmem:[%s206 + $0x1c] sm:$0xf]
      %v1076 = vld [vmem:[%s206 + $0x20] sm:$0xf]
      %v1077 = vld [vmem:[%s206 + $0x24] sm:$0xf]
      %v1078 = vld [vmem:[%s206 + $0x28] sm:$0xf]
      %v1079 = vld [vmem:[%s206 + $0x2c] sm:$0xf]
      %v1080 = vld [vmem:[%s206 + $0x30] sm:$0xf]
      %v1081 = vld [vmem:[%s206 + $0x34] sm:$0xf]
      %v1082 = vld [vmem:[%s206 + $0x38] sm:$0xf]
      %v1083 = vld [vmem:[%s206 + $0x3c] sm:$0xf]
      %v1084 = vld [vmem:[%s206 + $0x40] sm:$0xf]
      %v1085 = vld [vmem:[%s206 + $0x44] sm:$0xf]
      %v1086 = vld [vmem:[%s206 + $0x48] sm:$0xf]
      %v1087 = vld [vmem:[%s206 + $0x4c] sm:$0xf]
      %v1088 = vld [vmem:[%s206 + $0x50] sm:$0xf]
      %v1089 = vld [vmem:[%s206 + $0x54] sm:$0xf]
      %v1090 = vld [vmem:[%s206 + $0x58] sm:$0xf]
      %v1091 = vld [vmem:[%s206 + $0x5c] sm:$0xf]
      %v1092 = vld [vmem:[%s206 + $0x60] sm:$0xf]
      %v1093 = vld [vmem:[%s206 + $0x64] sm:$0xf]
      %v1094 = vld [vmem:[%s206 + $0x68] sm:$0xf]
      %v1095 = vld [vmem:[%s206 + $0x6c] sm:$0xf]
      %v1096 = vld [vmem:[%s206 + $0x70] sm:$0xf]
      %v1097 = vld [vmem:[%s206 + $0x74] sm:$0x7]
      %v1098 = vld [vmem:[%s210 + $0x18] sm:$0xf]
      %v1099 = vld [vmem:[%s210 + $0x1c] sm:$0xf]
      %v1128 = vunpack.c.l.b16 %v1070
      %v1129 = vunpack.c.l.b16 %v1071
      %v1130 = vunpack.c.l.b16 %v1072
      %v1131 = vunpack.c.l.b16 %v1073
      %v1132 = vunpack.c.l.b16 %v1074
      %v1133 = vunpack.c.l.b16 %v1075
      %v1134 = vunpack.c.l.b16 %v1076
      %v1135 = vunpack.c.l.b16 %v1077
      %v1136 = vunpack.c.l.b16 %v1078
      %v1137 = vunpack.c.l.b16 %v1079
      %v1138 = vunpack.c.l.b16 %v1080
      %v1139 = vunpack.c.l.b16 %v1081
      %v1140 = vunpack.c.l.b16 %v1082
      %v1141 = vunpack.c.l.b16 %v1083
      %v1142 = vunpack.c.l.b16 %v1084
      %v1143 = vunpack.c.l.b16 %v1085
      %v1144 = vunpack.c.l.b16 %v1086
      %v1145 = vunpack.c.l.b16 %v1087
      %v1146 = vunpack.c.l.b16 %v1088
      %v1147 = vunpack.c.l.b16 %v1089
      %v1148 = vunpack.c.l.b16 %v1090
      %v1149 = vunpack.c.l.b16 %v1091
      %v1150 = vunpack.c.l.b16 %v1092
      %v1151 = vunpack.c.l.b16 %v1093
      %v1152 = vunpack.c.l.b16 %v1094
      %v1153 = vunpack.c.l.b16 %v1095
      %v1154 = vunpack.c.l.b16 %v1096
      %v1155 = vunpack.c.l.b16 %v1097
      %v1156 = vpack.c.b16 %v1129, %v1128
      %v1157 = vpack.c.b16 %v1131, %v1130
      %v1158 = vpack.c.b16 %v1133, %v1132
      %v1159 = vpack.c.b16 %v1135, %v1134
      %v1160 = vpack.c.b16 %v1137, %v1136
      %v1161 = vpack.c.b16 %v1139, %v1138
      %v1162 = vpack.c.b16 %v1141, %v1140
      %v1163 = vpack.c.b16 %v1143, %v1142
      %v1164 = vpack.c.b16 %v1145, %v1144
      %v1165 = vpack.c.b16 %v1147, %v1146
      %v1166 = vpack.c.b16 %v1149, %v1148
      %v1167 = vpack.c.b16 %v1151, %v1150
      %v1168 = vpack.c.b16 %v1153, %v1152
      %v1169 = vpack.c.b16 %v1155, %v1154
      %v1172 = vunpack.c.l.b16 %v1098
      %v1173 = vunpack.c.l.b16 %v1099
      %v1174 = vpack.c.b16 %v1173, %v1172
      %v1177 = vsel %vm444, %v1156, 0
      %v1180 = vsel %vm444, %v1157, 0
      %v1183 = vsel %vm444, %v1158, 0
      %v1186 = vsel %vm444, %v1159, 0
      %v1189 = vsel %vm444, %v1160, 0
      %v1192 = vsel %vm444, %v1161, 0
      %v1195 = vsel %vm444, %v1162, 0
      %v1198 = vsel %vm444, %v1163, 0
      %v1201 = vsel %vm444, %v1164, 0
      %v1204 = vsel %vm444, %v1165, 0
      %v1207 = vsel %vm444, %v1166, 0
      %v1210 = vsel %vm444, %v1167, 0
      %v1213 = vsel %vm444, %v1168, 0
      %v1216 = vsel %vm444, %v1169, 0
      %1218 = vmatprep.subr.bf16.mxu0 0
      %1219 = vmatpush1.bf16.msra.mxu0 0
      %1220 = vmatprep.subr.bf16.mxu0 0
      %1221 = vmatpush1.bf16.msra.mxu0 0
      %1222 = vmatprep.subr.bf16.mxu0 0
      %1223 = vmatpush1.bf16.msra.mxu0 0
      %1224 = vmatprep.subr.bf16.mxu0 0
      %1225 = vmatpush1.bf16.msra.mxu0 0
      %1226 = vmatprep.subr.bf16.mxu0 0
      %1227 = vmatpush1.bf16.msra.mxu0 0
      %1228 = vmatprep.subr.bf16.mxu0 0
      %1229 = vmatpush1.bf16.msra.mxu0 0
      %1230 = vmatprep.subr.bf16.mxu0 0
      %1231 = vmatpush1.bf16.msra.mxu0 0
      %1232 = vmatprep.subr.bf16.mxu0 0
      %1233 = vmatpush1.bf16.msra.mxu0 %v1174
      %1234 = vmatprep.subr.bf16.mxu0 0
      %1235 = vmatpush2.bf16.msra.mxu0 0
      %1236 = vmatprep.subr.bf16.mxu0 0
      %1237 = vmatpush2.bf16.msra.mxu0 0
      %1238 = vmatprep.subr.bf16.mxu0 0
      %1239 = vmatpush2.bf16.msra.mxu0 0
      %1240 = vmatprep.subr.bf16.mxu0 0
      %1241 = vmatpush2.bf16.msra.mxu0 0
      %1242 = vmatprep.subr.bf16.mxu0 0
      %1243 = vmatpush2.bf16.msra.mxu0 0
      %1244 = vmatprep.subr.bf16.mxu0 0
      %1245 = vmatpush2.bf16.msra.mxu0 0
      %1246 = vmatprep.subr.bf16.mxu0 0
      %1247 = vmatpush2.bf16.msra.mxu0 0
      %1248 = vmatprep.subr.bf16.mxu0 0
      %1249 = vmatpush2.bf16.msra.mxu0 0
      %1250 = vmatprep.mubr.bf16.mxu0 0
      %1251 = vmatmul.mubr.bf16.gmra.mxu0 %v1177
      %v1252 = vpop.f32.mrf.mxu0
      %v1253 = vadd.f32 0.0, %v1252
      %v1254 = vpop.f32.mrf.mxu0
      %v1255 = vpop.f32.mrf.mxu0
      %v1256 = vadd.f32 0.0, %v1255
      %v1257 = vpop.f32.mrf.mxu0
      %1258 = vmatprep.mubr.bf16.mxu0 0
      %1259 = vmatmul.mubr.bf16.gmra.mxu0 %v1180
      %v1260 = vpop.f32.mrf.mxu0
      %v1261 = vadd.f32 0.0, %v1260
      %v1262 = vpop.f32.mrf.mxu0
      %v1263 = vpop.f32.mrf.mxu0
      %v1264 = vadd.f32 0.0, %v1263
      %v1265 = vpop.f32.mrf.mxu0
      %1266 = vmatprep.mubr.bf16.mxu0 0
      %1267 = vmatmul.mubr.bf16.gmra.mxu0 %v1183
      %v1268 = vpop.f32.mrf.mxu0
      %v1269 = vadd.f32 0.0, %v1268
      %v1270 = vpop.f32.mrf.mxu0
      %v1271 = vpop.f32.mrf.mxu0
      %v1272 = vadd.f32 0.0, %v1271
      %v1273 = vpop.f32.mrf.mxu0
      %1274 = vmatprep.mubr.bf16.mxu0 0
      %1275 = vmatmul.mubr.bf16.gmra.mxu0 %v1186
      %v1276 = vpop.f32.mrf.mxu0
      %v1277 = vadd.f32 0.0, %v1276
      %v1278 = vpop.f32.mrf.mxu0
      %v1279 = vpop.f32.mrf.mxu0
      %v1280 = vadd.f32 0.0, %v1279
      %v1281 = vpop.f32.mrf.mxu0
      %1282 = vmatprep.mubr.bf16.mxu0 0
      %1283 = vmatmul.mubr.bf16.gmra.mxu0 %v1189
      %v1284 = vpop.f32.mrf.mxu0
      %v1285 = vadd.f32 0.0, %v1284
      %v1286 = vpop.f32.mrf.mxu0
      %v1287 = vpop.f32.mrf.mxu0
      %v1288 = vadd.f32 0.0, %v1287
      %v1289 = vpop.f32.mrf.mxu0
      %1290 = vmatprep.mubr.bf16.mxu0 0
      %1291 = vmatmul.mubr.bf16.gmra.mxu0 %v1192
      %v1292 = vpop.f32.mrf.mxu0
      %v1293 = vadd.f32 0.0, %v1292
      %v1294 = vpop.f32.mrf.mxu0
      %v1295 = vpop.f32.mrf.mxu0
      %v1296 = vadd.f32 0.0, %v1295
      %v1297 = vpop.f32.mrf.mxu0
      %1298 = vmatprep.mubr.bf16.mxu0 0
      %1299 = vmatmul.mubr.bf16.gmra.mxu0 %v1195
      %v1300 = vpop.f32.mrf.mxu0
      %v1301 = vadd.f32 0.0, %v1300
      %v1302 = vpop.f32.mrf.mxu0
      %v1303 = vpop.f32.mrf.mxu0
      %v1304 = vadd.f32 0.0, %v1303
      %v1305 = vpop.f32.mrf.mxu0
      %1306 = vmatprep.mubr.bf16.mxu0 0
      %1307 = vmatmul.mubr.bf16.gmra.mxu0 %v1198
      %v1308 = vpop.f32.mrf.mxu0
      %v1309 = vadd.f32 0.0, %v1308
      %v1310 = vpop.f32.mrf.mxu0
      %v1311 = vpop.f32.mrf.mxu0
      %v1312 = vadd.f32 0.0, %v1311
      %v1313 = vpop.f32.mrf.mxu0
      %1314 = vmatprep.mubr.bf16.mxu0 0
      %1315 = vmatmul.mubr.bf16.gmra.mxu0 %v1201
      %v1316 = vpop.f32.mrf.mxu0
      %v1317 = vadd.f32 0.0, %v1316
      %v1318 = vpop.f32.mrf.mxu0
      %v1319 = vpop.f32.mrf.mxu0
      %v1320 = vadd.f32 0.0, %v1319
      %v1321 = vpop.f32.mrf.mxu0
      %1322 = vmatprep.mubr.bf16.mxu0 0
      %1323 = vmatmul.mubr.bf16.gmra.mxu0 %v1204
      %v1324 = vpop.f32.mrf.mxu0
      %v1325 = vadd.f32 0.0, %v1324
      %v1326 = vpop.f32.mrf.mxu0
      %v1327 = vpop.f32.mrf.mxu0
      %v1328 = vadd.f32 0.0, %v1327
      %v1329 = vpop.f32.mrf.mxu0
      %1330 = vmatprep.mubr.bf16.mxu0 0
      %1331 = vmatmul.mubr.bf16.gmra.mxu0 %v1207
      %v1332 = vpop.f32.mrf.mxu0
      %v1333 = vadd.f32 0.0, %v1332
      %v1334 = vpop.f32.mrf.mxu0
      %v1335 = vpop.f32.mrf.mxu0
      %v1336 = vadd.f32 0.0, %v1335
      %v1337 = vpop.f32.mrf.mxu0
      %1338 = vmatprep.mubr.bf16.mxu0 0
      %1339 = vmatmul.mubr.bf16.gmra.mxu0 %v1210
      %v1340 = vpop.f32.mrf.mxu0
      %v1341 = vadd.f32 0.0, %v1340
      %v1342 = vpop.f32.mrf.mxu0
      %v1343 = vpop.f32.mrf.mxu0
      %v1344 = vadd.f32 0.0, %v1343
      %v1345 = vpop.f32.mrf.mxu0
      %1346 = vmatprep.mubr.bf16.mxu0 0
      %1347 = vmatmul.mubr.bf16.gmra.mxu0 %v1213
      %v1348 = vpop.f32.mrf.mxu0
      %v1349 = vadd.f32 0.0, %v1348
      %v1350 = vpop.f32.mrf.mxu0
      %v1351 = vpop.f32.mrf.mxu0
      %v1352 = vadd.f32 0.0, %v1351
      %v1353 = vpop.f32.mrf.mxu0
      %1354 = vmatprep.mubr.bf16.mxu0 0
      %1355 = vmatmul.mubr.bf16.gmra.mxu0 %v1216
      %v1356 = vpop.f32.mrf.mxu0
      %v1357 = vadd.f32 0.0, %v1356
      %v1358 = vpop.f32.mrf.mxu0
      %v1359 = vpop.f32.mrf.mxu0
      %v1360 = vadd.f32 0.0, %v1359
      %v1361 = vpop.f32.mrf.mxu0
      %1362 = vdwg.mxu0
      %v1363 = vadd.f32 %v1042, %v1253
      %v1364 = vadd.f32 %v1043, %v1256
      %v1365 = vadd.f32 %v1044, %v1261
      %v1366 = vadd.f32 %v1045, %v1264
      %v1367 = vadd.f32 %v1046, %v1269
      %v1368 = vadd.f32 %v1047, %v1272
      %v1369 = vadd.f32 %v1048, %v1277
      %v1370 = vadd.f32 %v1049, %v1280
      %v1371 = vadd.f32 %v1050, %v1285
      %v1372 = vadd.f32 %v1051, %v1288
      %v1373 = vadd.f32 %v1052, %v1293
      %v1374 = vadd.f32 %v1053, %v1296
      %v1375 = vadd.f32 %v1054, %v1301
      %v1376 = vadd.f32 %v1055, %v1304
      %v1377 = vadd.f32 %v1056, %v1309
      %v1378 = vadd.f32 %v1057, %v1312
      %v1379 = vadd.f32 %v1058, %v1317
      %v1380 = vadd.f32 %v1059, %v1320
      %v1381 = vadd.f32 %v1060, %v1325
      %v1382 = vadd.f32 %v1061, %v1328
      %v1383 = vadd.f32 %v1062, %v1333
      %v1384 = vadd.f32 %v1063, %v1336
      %v1385 = vadd.f32 %v1064, %v1341
      %v1386 = vadd.f32 %v1065, %v1344
      %v1387 = vadd.f32 %v1066, %v1349
      %v1388 = vadd.f32 %v1067, %v1352
      %v1389 = vadd.f32 %v1068, %v1357
      %v1390 = vadd.f32 %v1069, %v1360
      %v1391 = vld [vmem:[%s206 + $0x74] sm:$0xf]
      %v1392 = vld [vmem:[%s210 + $0x20] sm:$0xf]
      %v1393 = vld [vmem:[%s210 + $0x24] sm:$0xf]
      %v1395 = vunpack.c.l.b16 %v1391
      %v1396 = vpack.c.b16 %v1395, %v1154
      %v1397 = vshrl.u32 %v1156, 16
      %v1399 = vshll.u32 %v1156, 16
      %v1401 = vrot.slane %v1399, 1
      %v1402 = vor.u32 %v1397, %v1401
      %v1403 = vshll.u32 %v1157, 16
      %v1405 = vrot.slane %v1403, 1
      %v1406 = vsel %vm326, %v1402, %v1405
      %v1407 = vshrl.u32 %v1157, 16
      %v1409 = vor.u32 %v1407, %v1405
      %v1410 = vshll.u32 %v1158, 16
      %v1412 = vrot.slane %v1410, 1
      %v1413 = vsel %vm326, %v1409, %v1412
      %v1414 = vshrl.u32 %v1158, 16
      %v1416 = vor.u32 %v1414, %v1412
      %v1417 = vshll.u32 %v1159, 16
      %v1419 = vrot.slane %v1417, 1
      %v1420 = vsel %vm326, %v1416, %v1419
      %v1421 = vshrl.u32 %v1159, 16
      %v1423 = vor.u32 %v1421, %v1419
      %v1424 = vshll.u32 %v1160, 16
      %v1426 = vrot.slane %v1424, 1
      %v1427 = vsel %vm326, %v1423, %v1426
      %v1428 = vshrl.u32 %v1160, 16
      %v1430 = vor.u32 %v1428, %v1426
      %v1431 = vshll.u32 %v1161, 16
      %v1433 = vrot.slane %v1431, 1
      %v1434 = vsel %vm326, %v1430, %v1433
      %v1435 = vshrl.u32 %v1161, 16
      %v1437 = vor.u32 %v1435, %v1433
      %v1438 = vshll.u32 %v1162, 16
      %v1440 = vrot.slane %v1438, 1
      %v1441 = vsel %vm326, %v1437, %v1440
      %v1442 = vshrl.u32 %v1162, 16
      %v1444 = vor.u32 %v1442, %v1440
      %v1445 = vshll.u32 %v1163, 16
      %v1447 = vrot.slane %v1445, 1
      %v1448 = vsel %vm326, %v1444, %v1447
      %v1449 = vshrl.u32 %v1163, 16
      %v1451 = vor.u32 %v1449, %v1447
      %v1452 = vshll.u32 %v1164, 16
      %v1454 = vrot.slane %v1452, 1
      %v1455 = vsel %vm326, %v1451, %v1454
      %v1456 = vshrl.u32 %v1164, 16
      %v1458 = vor.u32 %v1456, %v1454
      %v1459 = vshll.u32 %v1165, 16
      %v1461 = vrot.slane %v1459, 1
      %v1462 = vsel %vm326, %v1458, %v1461
      %v1463 = vshrl.u32 %v1165, 16
      %v1465 = vor.u32 %v1463, %v1461
      %v1466 = vshll.u32 %v1166, 16
      %v1468 = vrot.slane %v1466, 1
      %v1469 = vsel %vm326, %v1465, %v1468
      %v1470 = vshrl.u32 %v1166, 16
      %v1472 = vor.u32 %v1470, %v1468
      %v1473 = vshll.u32 %v1167, 16
      %v1475 = vrot.slane %v1473, 1
      %v1476 = vsel %vm326, %v1472, %v1475
      %v1477 = vshrl.u32 %v1167, 16
      %v1479 = vor.u32 %v1477, %v1475
      %v1480 = vshll.u32 %v1168, 16
      %v1482 = vrot.slane %v1480, 1
      %v1483 = vsel %vm326, %v1479, %v1482
      %v1484 = vshrl.u32 %v1168, 16
      %v1486 = vor.u32 %v1484, %v1482
      %v1488 = vshll.u32 %v1396, 16
      %v1490 = vrot.slane %v1488, 1
      %v1491 = vsel %vm326, %v1486, %v1490
      %v1492 = vshrl.u32 %v1396, 16
      %v1494 = vor.u32 %v1492, %v1490
      %v1497 = vunpack.c.l.b16 %v1392
      %v1498 = vunpack.c.l.b16 %v1393
      %v1499 = vpack.c.b16 %v1498, %v1497
      %v1502 = vsel %vm444, %v1406, 0
      %v1505 = vsel %vm444, %v1413, 0
      %v1508 = vsel %vm444, %v1420, 0
      %v1511 = vsel %vm444, %v1427, 0
      %v1514 = vsel %vm444, %v1434, 0
      %v1517 = vsel %vm444, %v1441, 0
      %v1520 = vsel %vm444, %v1448, 0
      %v1523 = vsel %vm444, %v1455, 0
      %v1526 = vsel %vm444, %v1462, 0
      %v1529 = vsel %vm444, %v1469, 0
      %v1532 = vsel %vm444, %v1476, 0
      %v1535 = vsel %vm444, %v1483, 0
      %v1538 = vsel %vm444, %v1491, 0
      %v1541 = vsel %vm444, %v1494, 0
      %1543 = vmatprep.subr.bf16.mxu0 0
      %1544 = vmatpush1.bf16.msra.mxu0 0
      %1545 = vmatprep.subr.bf16.mxu0 0
      %1546 = vmatpush1.bf16.msra.mxu0 0
      %1547 = vmatprep.subr.bf16.mxu0 0
      %1548 = vmatpush1.bf16.msra.mxu0 0
      %1549 = vmatprep.subr.bf16.mxu0 0
      %1550 = vmatpush1.bf16.msra.mxu0 0
      %1551 = vmatprep.subr.bf16.mxu0 0
      %1552 = vmatpush1.bf16.msra.mxu0 0
      %1553 = vmatprep.subr.bf16.mxu0 0
      %1554 = vmatpush1.bf16.msra.mxu0 0
      %1555 = vmatprep.subr.bf16.mxu0 0
      %1556 = vmatpush1.bf16.msra.mxu0 0
      %1557 = vmatprep.subr.bf16.mxu0 0
      %1558 = vmatpush1.bf16.msra.mxu0 %v1499
      %1559 = vmatprep.subr.bf16.mxu0 0
      %1560 = vmatpush2.bf16.msra.mxu0 0
      %1561 = vmatprep.subr.bf16.mxu0 0
      %1562 = vmatpush2.bf16.msra.mxu0 0
      %1563 = vmatprep.subr.bf16.mxu0 0
      %1564 = vmatpush2.bf16.msra.mxu0 0
      %1565 = vmatprep.subr.bf16.mxu0 0
      %1566 = vmatpush2.bf16.msra.mxu0 0
      %1567 = vmatprep.subr.bf16.mxu0 0
      %1568 = vmatpush2.bf16.msra.mxu0 0
      %1569 = vmatprep.subr.bf16.mxu0 0
      %1570 = vmatpush2.bf16.msra.mxu0 0
      %1571 = vmatprep.subr.bf16.mxu0 0
      %1572 = vmatpush2.bf16.msra.mxu0 0
      %1573 = vmatprep.subr.bf16.mxu0 0
      %1574 = vmatpush2.bf16.msra.mxu0 0
      %1575 = vmatprep.mubr.bf16.mxu0 0
      %1576 = vmatmul.mubr.bf16.gmra.mxu0 %v1502
      %v1577 = vpop.f32.mrf.mxu0
      %v1578 = vadd.f32 0.0, %v1577
      %v1579 = vpop.f32.mrf.mxu0
      %v1580 = vpop.f32.mrf.mxu0
      %v1581 = vadd.f32 0.0, %v1580
      %v1582 = vpop.f32.mrf.mxu0
      %1583 = vmatprep.mubr.bf16.mxu0 0
      %1584 = vmatmul.mubr.bf16.gmra.mxu0 %v1505
      %v1585 = vpop.f32.mrf.mxu0
      %v1586 = vadd.f32 0.0, %v1585
      %v1587 = vpop.f32.mrf.mxu0
      %v1588 = vpop.f32.mrf.mxu0
      %v1589 = vadd.f32 0.0, %v1588
      %v1590 = vpop.f32.mrf.mxu0
      %1591 = vmatprep.mubr.bf16.mxu0 0
      %1592 = vmatmul.mubr.bf16.gmra.mxu0 %v1508
      %v1593 = vpop.f32.mrf.mxu0
      %v1594 = vadd.f32 0.0, %v1593
      %v1595 = vpop.f32.mrf.mxu0
      %v1596 = vpop.f32.mrf.mxu0
      %v1597 = vadd.f32 0.0, %v1596
      %v1598 = vpop.f32.mrf.mxu0
      %1599 = vmatprep.mubr.bf16.mxu0 0
      %1600 = vmatmul.mubr.bf16.gmra.mxu0 %v1511
      %v1601 = vpop.f32.mrf.mxu0
      %v1602 = vadd.f32 0.0, %v1601
      %v1603 = vpop.f32.mrf.mxu0
      %v1604 = vpop.f32.mrf.mxu0
      %v1605 = vadd.f32 0.0, %v1604
      %v1606 = vpop.f32.mrf.mxu0
      %1607 = vmatprep.mubr.bf16.mxu0 0
      %1608 = vmatmul.mubr.bf16.gmra.mxu0 %v1514
      %v1609 = vpop.f32.mrf.mxu0
      %v1610 = vadd.f32 0.0, %v1609
      %v1611 = vpop.f32.mrf.mxu0
      %v1612 = vpop.f32.mrf.mxu0
      %v1613 = vadd.f32 0.0, %v1612
      %v1614 = vpop.f32.mrf.mxu0
      %1615 = vmatprep.mubr.bf16.mxu0 0
      %1616 = vmatmul.mubr.bf16.gmra.mxu0 %v1517
      %v1617 = vpop.f32.mrf.mxu0
      %v1618 = vadd.f32 0.0, %v1617
      %v1619 = vpop.f32.mrf.mxu0
      %v1620 = vpop.f32.mrf.mxu0
      %v1621 = vadd.f32 0.0, %v1620
      %v1622 = vpop.f32.mrf.mxu0
      %1623 = vmatprep.mubr.bf16.mxu0 0
      %1624 = vmatmul.mubr.bf16.gmra.mxu0 %v1520
      %v1625 = vpop.f32.mrf.mxu0
      %v1626 = vadd.f32 0.0, %v1625
      %v1627 = vpop.f32.mrf.mxu0
      %v1628 = vpop.f32.mrf.mxu0
      %v1629 = vadd.f32 0.0, %v1628
      %v1630 = vpop.f32.mrf.mxu0
      %1631 = vmatprep.mubr.bf16.mxu0 0
      %1632 = vmatmul.mubr.bf16.gmra.mxu0 %v1523
      %v1633 = vpop.f32.mrf.mxu0
      %v1634 = vadd.f32 0.0, %v1633
      %v1635 = vpop.f32.mrf.mxu0
      %v1636 = vpop.f32.mrf.mxu0
      %v1637 = vadd.f32 0.0, %v1636
      %v1638 = vpop.f32.mrf.mxu0
      %1639 = vmatprep.mubr.bf16.mxu0 0
      %1640 = vmatmul.mubr.bf16.gmra.mxu0 %v1526
      %v1641 = vpop.f32.mrf.mxu0
      %v1642 = vadd.f32 0.0, %v1641
      %v1643 = vpop.f32.mrf.mxu0
      %v1644 = vpop.f32.mrf.mxu0
      %v1645 = vadd.f32 0.0, %v1644
      %v1646 = vpop.f32.mrf.mxu0
      %1647 = vmatprep.mubr.bf16.mxu0 0
      %1648 = vmatmul.mubr.bf16.gmra.mxu0 %v1529
      %v1649 = vpop.f32.mrf.mxu0
      %v1650 = vadd.f32 0.0, %v1649
      %v1651 = vpop.f32.mrf.mxu0
      %v1652 = vpop.f32.mrf.mxu0
      %v1653 = vadd.f32 0.0, %v1652
      %v1654 = vpop.f32.mrf.mxu0
      %1655 = vmatprep.mubr.bf16.mxu0 0
      %1656 = vmatmul.mubr.bf16.gmra.mxu0 %v1532
      %v1657 = vpop.f32.mrf.mxu0
      %v1658 = vadd.f32 0.0, %v1657
      %v1659 = vpop.f32.mrf.mxu0
      %v1660 = vpop.f32.mrf.mxu0
      %v1661 = vadd.f32 0.0, %v1660
      %v1662 = vpop.f32.mrf.mxu0
      %1663 = vmatprep.mubr.bf16.mxu0 0
      %1664 = vmatmul.mubr.bf16.gmra.mxu0 %v1535
      %v1665 = vpop.f32.mrf.mxu0
      %v1666 = vadd.f32 0.0, %v1665
      %v1667 = vpop.f32.mrf.mxu0
      %v1668 = vpop.f32.mrf.mxu0
      %v1669 = vadd.f32 0.0, %v1668
      %v1670 = vpop.f32.mrf.mxu0
      %1671 = vmatprep.mubr.bf16.mxu0 0
      %1672 = vmatmul.mubr.bf16.gmra.mxu0 %v1538
      %v1673 = vpop.f32.mrf.mxu0
      %v1674 = vadd.f32 0.0, %v1673
      %v1675 = vpop.f32.mrf.mxu0
      %v1676 = vpop.f32.mrf.mxu0
      %v1677 = vadd.f32 0.0, %v1676
      %v1678 = vpop.f32.mrf.mxu0
      %1679 = vmatprep.mubr.bf16.mxu0 0
      %1680 = vmatmul.mubr.bf16.gmra.mxu0 %v1541
      %v1681 = vpop.f32.mrf.mxu0
      %v1682 = vadd.f32 0.0, %v1681
      %v1683 = vpop.f32.mrf.mxu0
      %v1684 = vpop.f32.mrf.mxu0
      %v1685 = vadd.f32 0.0, %v1684
      %v1686 = vpop.f32.mrf.mxu0
      %1687 = vdwg.mxu0
      %v1688 = vadd.f32 %v1363, %v1578
      %v1689 = vadd.f32 %v1364, %v1581
      %v1690 = vadd.f32 %v1365, %v1586
      %v1691 = vadd.f32 %v1366, %v1589
      %v1692 = vadd.f32 %v1367, %v1594
      %v1693 = vadd.f32 %v1368, %v1597
      %v1694 = vadd.f32 %v1369, %v1602
      %v1695 = vadd.f32 %v1370, %v1605
      %v1696 = vadd.f32 %v1371, %v1610
      %v1697 = vadd.f32 %v1372, %v1613
      %v1698 = vadd.f32 %v1373, %v1618
      %v1699 = vadd.f32 %v1374, %v1621
      %v1700 = vadd.f32 %v1375, %v1626
      %v1701 = vadd.f32 %v1376, %v1629
      %v1702 = vadd.f32 %v1377, %v1634
      %v1703 = vadd.f32 %v1378, %v1637
      %v1704 = vadd.f32 %v1379, %v1642
      %v1705 = vadd.f32 %v1380, %v1645
      %v1706 = vadd.f32 %v1381, %v1650
      %v1707 = vadd.f32 %v1382, %v1653
      %v1708 = vadd.f32 %v1383, %v1658
      %v1709 = vadd.f32 %v1384, %v1661
      %v1710 = vadd.f32 %v1385, %v1666
      %v1711 = vadd.f32 %v1386, %v1669
      %v1712 = vadd.f32 %v1387, %v1674
      %v1713 = vadd.f32 %v1388, %v1677
      %v1714 = vadd.f32 %v1389, %v1682
      %v1715 = vadd.f32 %v1390, %v1685
      %v1716 = vld [vmem:[%s206 + $0x8] sm:$0xe]
      %v1717 = vld [vmem:[%s210 + $0x28] sm:$0xf]
      %v1718 = vld [vmem:[%s210 + $0x2c] sm:$0xf]
      %v1720 = vunpack.c.l.b16 %v1716
      %v1721 = vpack.c.b16 %v1129, %v1720
      %v1722 = vrot.slane %v1721, 1
      %v1723 = vrot.slane %v1157, 1
      %v1724 = vsel %vm821, %v1722, %v1723
      %v1725 = vrot.slane %v1158, 1
      %v1726 = vsel %vm821, %v1723, %v1725
      %v1727 = vrot.slane %v1159, 1
      %v1728 = vsel %vm821, %v1725, %v1727
      %v1729 = vrot.slane %v1160, 1
      %v1730 = vsel %vm821, %v1727, %v1729
      %v1731 = vrot.slane %v1161, 1
      %v1732 = vsel %vm821, %v1729, %v1731
      %v1733 = vrot.slane %v1162, 1
      %v1734 = vsel %vm821, %v1731, %v1733
      %v1735 = vrot.slane %v1163, 1
      %v1736 = vsel %vm821, %v1733, %v1735
      %v1737 = vrot.slane %v1164, 1
      %v1738 = vsel %vm821, %v1735, %v1737
      %v1739 = vrot.slane %v1165, 1
      %v1740 = vsel %vm821, %v1737, %v1739
      %v1741 = vrot.slane %v1166, 1
      %v1742 = vsel %vm821, %v1739, %v1741
      %v1743 = vrot.slane %v1167, 1
      %v1744 = vsel %vm821, %v1741, %v1743
      %v1745 = vrot.slane %v1168, 1
      %v1746 = vsel %vm821, %v1743, %v1745
      %v1747 = vrot.slane %v1396, 1
      %v1748 = vsel %vm821, %v1745, %v1747
      %v1751 = vunpack.c.l.b16 %v1717
      %v1752 = vunpack.c.l.b16 %v1718
      %v1753 = vpack.c.b16 %v1752, %v1751
      %v1756 = vsel %vm444, %v1724, 0
      %v1759 = vsel %vm444, %v1726, 0
      %v1762 = vsel %vm444, %v1728, 0
      %v1765 = vsel %vm444, %v1730, 0
      %v1768 = vsel %vm444, %v1732, 0
      %v1771 = vsel %vm444, %v1734, 0
      %v1774 = vsel %vm444, %v1736, 0
      %v1777 = vsel %vm444, %v1738, 0
      %v1780 = vsel %vm444, %v1740, 0
      %v1783 = vsel %vm444, %v1742, 0
      %v1786 = vsel %vm444, %v1744, 0
      %v1789 = vsel %vm444, %v1746, 0
      %v1792 = vsel %vm444, %v1748, 0
      %v1795 = vsel %vm444, %v1747, 0
      %1797 = vmatprep.subr.bf16.mxu0 0
      %1798 = vmatpush1.bf16.msra.mxu0 0
      %1799 = vmatprep.subr.bf16.mxu0 0
      %1800 = vmatpush1.bf16.msra.mxu0 0
      %1801 = vmatprep.subr.bf16.mxu0 0
      %1802 = vmatpush1.bf16.msra.mxu0 0
      %1803 = vmatprep.subr.bf16.mxu0 0
      %1804 = vmatpush1.bf16.msra.mxu0 0
      %1805 = vmatprep.subr.bf16.mxu0 0
      %1806 = vmatpush1.bf16.msra.mxu0 0
      %1807 = vmatprep.subr.bf16.mxu0 0
      %1808 = vmatpush1.bf16.msra.mxu0 0
      %1809 = vmatprep.subr.bf16.mxu0 0
      %1810 = vmatpush1.bf16.msra.mxu0 0
      %1811 = vmatprep.subr.bf16.mxu0 0
      %1812 = vmatpush1.bf16.msra.mxu0 %v1753
      %1813 = vmatprep.subr.bf16.mxu0 0
      %1814 = vmatpush2.bf16.msra.mxu0 0
      %1815 = vmatprep.subr.bf16.mxu0 0
      %1816 = vmatpush2.bf16.msra.mxu0 0
      %1817 = vmatprep.subr.bf16.mxu0 0
      %1818 = vmatpush2.bf16.msra.mxu0 0
      %1819 = vmatprep.subr.bf16.mxu0 0
      %1820 = vmatpush2.bf16.msra.mxu0 0
      %1821 = vmatprep.subr.bf16.mxu0 0
      %1822 = vmatpush2.bf16.msra.mxu0 0
      %1823 = vmatprep.subr.bf16.mxu0 0
      %1824 = vmatpush2.bf16.msra.mxu0 0
      %1825 = vmatprep.subr.bf16.mxu0 0
      %1826 = vmatpush2.bf16.msra.mxu0 0
      %1827 = vmatprep.subr.bf16.mxu0 0
      %1828 = vmatpush2.bf16.msra.mxu0 0
      %1829 = vmatprep.mubr.bf16.mxu0 0
      %1830 = vmatmul.mubr.bf16.gmra.mxu0 %v1756
      %v1831 = vpop.f32.mrf.mxu0
      %v1832 = vadd.f32 0.0, %v1831
      %v1833 = vpop.f32.mrf.mxu0
      %v1834 = vpop.f32.mrf.mxu0
      %v1835 = vadd.f32 0.0, %v1834
      %v1836 = vpop.f32.mrf.mxu0
      %1837 = vmatprep.mubr.bf16.mxu0 0
      %1838 = vmatmul.mubr.bf16.gmra.mxu0 %v1759
      %v1839 = vpop.f32.mrf.mxu0
      %v1840 = vadd.f32 0.0, %v1839
      %v1841 = vpop.f32.mrf.mxu0
      %v1842 = vpop.f32.mrf.mxu0
      %v1843 = vadd.f32 0.0, %v1842
      %v1844 = vpop.f32.mrf.mxu0
      %1845 = vmatprep.mubr.bf16.mxu0 0
      %1846 = vmatmul.mubr.bf16.gmra.mxu0 %v1762
      %v1847 = vpop.f32.mrf.mxu0
      %v1848 = vadd.f32 0.0, %v1847
      %v1849 = vpop.f32.mrf.mxu0
      %v1850 = vpop.f32.mrf.mxu0
      %v1851 = vadd.f32 0.0, %v1850
      %v1852 = vpop.f32.mrf.mxu0
      %1853 = vmatprep.mubr.bf16.mxu0 0
      %1854 = vmatmul.mubr.bf16.gmra.mxu0 %v1765
      %v1855 = vpop.f32.mrf.mxu0
      %v1856 = vadd.f32 0.0, %v1855
      %v1857 = vpop.f32.mrf.mxu0
      %v1858 = vpop.f32.mrf.mxu0
      %v1859 = vadd.f32 0.0, %v1858
      %v1860 = vpop.f32.mrf.mxu0
      %1861 = vmatprep.mubr.bf16.mxu0 0
      %1862 = vmatmul.mubr.bf16.gmra.mxu0 %v1768
      %v1863 = vpop.f32.mrf.mxu0
      %v1864 = vadd.f32 0.0, %v1863
      %v1865 = vpop.f32.mrf.mxu0
      %v1866 = vpop.f32.mrf.mxu0
      %v1867 = vadd.f32 0.0, %v1866
      %v1868 = vpop.f32.mrf.mxu0
      %1869 = vmatprep.mubr.bf16.mxu0 0
      %1870 = vmatmul.mubr.bf16.gmra.mxu0 %v1771
      %v1871 = vpop.f32.mrf.mxu0
      %v1872 = vadd.f32 0.0, %v1871
      %v1873 = vpop.f32.mrf.mxu0
      %v1874 = vpop.f32.mrf.mxu0
      %v1875 = vadd.f32 0.0, %v1874
      %v1876 = vpop.f32.mrf.mxu0
      %1877 = vmatprep.mubr.bf16.mxu0 0
      %1878 = vmatmul.mubr.bf16.gmra.mxu0 %v1774
      %v1879 = vpop.f32.mrf.mxu0
      %v1880 = vadd.f32 0.0, %v1879
      %v1881 = vpop.f32.mrf.mxu0
      %v1882 = vpop.f32.mrf.mxu0
      %v1883 = vadd.f32 0.0, %v1882
      %v1884 = vpop.f32.mrf.mxu0
      %1885 = vmatprep.mubr.bf16.mxu0 0
      %1886 = vmatmul.mubr.bf16.gmra.mxu0 %v1777
      %v1887 = vpop.f32.mrf.mxu0
      %v1888 = vadd.f32 0.0, %v1887
      %v1889 = vpop.f32.mrf.mxu0
      %v1890 = vpop.f32.mrf.mxu0
      %v1891 = vadd.f32 0.0, %v1890
      %v1892 = vpop.f32.mrf.mxu0
      %1893 = vmatprep.mubr.bf16.mxu0 0
      %1894 = vmatmul.mubr.bf16.gmra.mxu0 %v1780
      %v1895 = vpop.f32.mrf.mxu0
      %v1896 = vadd.f32 0.0, %v1895
      %v1897 = vpop.f32.mrf.mxu0
      %v1898 = vpop.f32.mrf.mxu0
      %v1899 = vadd.f32 0.0, %v1898
      %v1900 = vpop.f32.mrf.mxu0
      %1901 = vmatprep.mubr.bf16.mxu0 0
      %1902 = vmatmul.mubr.bf16.gmra.mxu0 %v1783
      %v1903 = vpop.f32.mrf.mxu0
      %v1904 = vadd.f32 0.0, %v1903
      %v1905 = vpop.f32.mrf.mxu0
      %v1906 = vpop.f32.mrf.mxu0
      %v1907 = vadd.f32 0.0, %v1906
      %v1908 = vpop.f32.mrf.mxu0
      %1909 = vmatprep.mubr.bf16.mxu0 0
      %1910 = vmatmul.mubr.bf16.gmra.mxu0 %v1786
      %v1911 = vpop.f32.mrf.mxu0
      %v1912 = vadd.f32 0.0, %v1911
      %v1913 = vpop.f32.mrf.mxu0
      %v1914 = vpop.f32.mrf.mxu0
      %v1915 = vadd.f32 0.0, %v1914
      %v1916 = vpop.f32.mrf.mxu0
      %1917 = vmatprep.mubr.bf16.mxu0 0
      %1918 = vmatmul.mubr.bf16.gmra.mxu0 %v1789
      %v1919 = vpop.f32.mrf.mxu0
      %v1920 = vadd.f32 0.0, %v1919
      %v1921 = vpop.f32.mrf.mxu0
      %v1922 = vpop.f32.mrf.mxu0
      %v1923 = vadd.f32 0.0, %v1922
      %v1924 = vpop.f32.mrf.mxu0
      %1925 = vmatprep.mubr.bf16.mxu0 0
      %1926 = vmatmul.mubr.bf16.gmra.mxu0 %v1792
      %v1927 = vpop.f32.mrf.mxu0
      %v1928 = vadd.f32 0.0, %v1927
      %v1929 = vpop.f32.mrf.mxu0
      %v1930 = vpop.f32.mrf.mxu0
      %v1931 = vadd.f32 0.0, %v1930
      %v1932 = vpop.f32.mrf.mxu0
      %1933 = vmatprep.mubr.bf16.mxu0 0
      %1934 = vmatmul.mubr.bf16.gmra.mxu0 %v1795
      %v1935 = vpop.f32.mrf.mxu0
      %v1936 = vadd.f32 0.0, %v1935
      %v1937 = vpop.f32.mrf.mxu0
      %v1938 = vpop.f32.mrf.mxu0
      %v1939 = vadd.f32 0.0, %v1938
      %v1940 = vpop.f32.mrf.mxu0
      %1941 = vdwg.mxu0
      %v1942 = vadd.f32 %v1688, %v1832
      %v1943 = vadd.f32 %v1689, %v1835
      %v1944 = vadd.f32 %v1690, %v1840
      %v1945 = vadd.f32 %v1691, %v1843
      %v1946 = vadd.f32 %v1692, %v1848
      %v1947 = vadd.f32 %v1693, %v1851
      %v1948 = vadd.f32 %v1694, %v1856
      %v1949 = vadd.f32 %v1695, %v1859
      %v1950 = vadd.f32 %v1696, %v1864
      %v1951 = vadd.f32 %v1697, %v1867
      %v1952 = vadd.f32 %v1698, %v1872
      %v1953 = vadd.f32 %v1699, %v1875
      %v1954 = vadd.f32 %v1700, %v1880
      %v1955 = vadd.f32 %v1701, %v1883
      %v1956 = vadd.f32 %v1702, %v1888
      %v1957 = vadd.f32 %v1703, %v1891
      %v1958 = vadd.f32 %v1704, %v1896
      %v1959 = vadd.f32 %v1705, %v1899
      %v1960 = vadd.f32 %v1706, %v1904
      %v1961 = vadd.f32 %v1707, %v1907
      %v1962 = vadd.f32 %v1708, %v1912
      %v1963 = vadd.f32 %v1709, %v1915
      %v1964 = vadd.f32 %v1710, %v1920
      %v1965 = vadd.f32 %v1711, %v1923
      %v1966 = vadd.f32 %v1712, %v1928
      %v1967 = vadd.f32 %v1713, %v1931
      %v1968 = vadd.f32 %v1714, %v1936
      %v1969 = vadd.f32 %v1715, %v1939
      %v1970 = vld [vmem:[%s206 + $0x10] sm:$0xf]
      %v1971 = vld [vmem:[%s206 + $0x14] sm:$0xf]
      %v1972 = vld [vmem:[%s206 + $0x18] sm:$0xf]
      %v1973 = vld [vmem:[%s206 + $0x1c] sm:$0xf]
      %v1974 = vld [vmem:[%s206 + $0x20] sm:$0xf]
      %v1975 = vld [vmem:[%s206 + $0x24] sm:$0xf]
      %v1976 = vld [vmem:[%s206 + $0x28] sm:$0xf]
      %v1977 = vld [vmem:[%s206 + $0x2c] sm:$0xf]
      %v1978 = vld [vmem:[%s206 + $0x30] sm:$0xf]
      %v1979 = vld [vmem:[%s206 + $0x34] sm:$0xf]
      %v1980 = vld [vmem:[%s206 + $0x38] sm:$0xf]
      %v1981 = vld [vmem:[%s206 + $0x3c] sm:$0xf]
      %v1982 = vld [vmem:[%s206 + $0x40] sm:$0xf]
      %v1983 = vld [vmem:[%s206 + $0x44] sm:$0xf]
      %v1984 = vld [vmem:[%s206 + $0x48] sm:$0xf]
      %v1985 = vld [vmem:[%s206 + $0x4c] sm:$0xf]
      %v1986 = vld [vmem:[%s206 + $0x50] sm:$0xf]
      %v1987 = vld [vmem:[%s206 + $0x54] sm:$0xf]
      %v1988 = vld [vmem:[%s206 + $0x58] sm:$0xf]
      %v1989 = vld [vmem:[%s206 + $0x5c] sm:$0xf]
      %v1990 = vld [vmem:[%s206 + $0x60] sm:$0xf]
      %v1991 = vld [vmem:[%s206 + $0x64] sm:$0xf]
      %v1992 = vld [vmem:[%s206 + $0x68] sm:$0xf]
      %v1993 = vld [vmem:[%s206 + $0x6c] sm:$0xf]
      %v1994 = vld [vmem:[%s206 + $0x70] sm:$0xf]
      %v1995 = vld [vmem:[%s206 + $0x74] sm:$0xf]
      %v1996 = vld [vmem:[%s206 + $0x78] sm:$0xf]
      %v1997 = vld [vmem:[%s206 + $0x7c] sm:$0x7]
      %v1998 = vld [vmem:[%s210 + $0x30] sm:$0xf]
      %v1999 = vld [vmem:[%s210 + $0x34] sm:$0xf]
      %v2028 = vunpack.c.l.b16 %v1970
      %v2029 = vunpack.c.l.b16 %v1971
      %v2030 = vunpack.c.l.b16 %v1972
      %v2031 = vunpack.c.l.b16 %v1973
      %v2032 = vunpack.c.l.b16 %v1974
      %v2033 = vunpack.c.l.b16 %v1975
      %v2034 = vunpack.c.l.b16 %v1976
      %v2035 = vunpack.c.l.b16 %v1977
      %v2036 = vunpack.c.l.b16 %v1978
      %v2037 = vunpack.c.l.b16 %v1979
      %v2038 = vunpack.c.l.b16 %v1980
      %v2039 = vunpack.c.l.b16 %v1981
      %v2040 = vunpack.c.l.b16 %v1982
      %v2041 = vunpack.c.l.b16 %v1983
      %v2042 = vunpack.c.l.b16 %v1984
      %v2043 = vunpack.c.l.b16 %v1985
      %v2044 = vunpack.c.l.b16 %v1986
      %v2045 = vunpack.c.l.b16 %v1987
      %v2046 = vunpack.c.l.b16 %v1988
      %v2047 = vunpack.c.l.b16 %v1989
      %v2048 = vunpack.c.l.b16 %v1990
      %v2049 = vunpack.c.l.b16 %v1991
      %v2050 = vunpack.c.l.b16 %v1992
      %v2051 = vunpack.c.l.b16 %v1993
      %v2052 = vunpack.c.l.b16 %v1994
      %v2053 = vunpack.c.l.b16 %v1995
      %v2054 = vunpack.c.l.b16 %v1996
      %v2055 = vunpack.c.l.b16 %v1997
      %v2056 = vpack.c.b16 %v2029, %v2028
      %v2057 = vpack.c.b16 %v2031, %v2030
      %v2058 = vpack.c.b16 %v2033, %v2032
      %v2059 = vpack.c.b16 %v2035, %v2034
      %v2060 = vpack.c.b16 %v2037, %v2036
      %v2061 = vpack.c.b16 %v2039, %v2038
      %v2062 = vpack.c.b16 %v2041, %v2040
      %v2063 = vpack.c.b16 %v2043, %v2042
      %v2064 = vpack.c.b16 %v2045, %v2044
      %v2065 = vpack.c.b16 %v2047, %v2046
      %v2066 = vpack.c.b16 %v2049, %v2048
      %v2067 = vpack.c.b16 %v2051, %v2050
      %v2068 = vpack.c.b16 %v2053, %v2052
      %v2069 = vpack.c.b16 %v2055, %v2054
      %v2072 = vunpack.c.l.b16 %v1998
      %v2073 = vunpack.c.l.b16 %v1999
      %v2074 = vpack.c.b16 %v2073, %v2072
      %v2077 = vsel %vm444, %v2056, 0
      %v2080 = vsel %vm444, %v2057, 0
      %v2083 = vsel %vm444, %v2058, 0
      %v2086 = vsel %vm444, %v2059, 0
      %v2089 = vsel %vm444, %v2060, 0
      %v2092 = vsel %vm444, %v2061, 0
      %v2095 = vsel %vm444, %v2062, 0
      %v2098 = vsel %vm444, %v2063, 0
      %v2101 = vsel %vm444, %v2064, 0
      %v2104 = vsel %vm444, %v2065, 0
      %v2107 = vsel %vm444, %v2066, 0
      %v2110 = vsel %vm444, %v2067, 0
      %v2113 = vsel %vm444, %v2068, 0
      %v2116 = vsel %vm444, %v2069, 0
      %2118 = vmatprep.subr.bf16.mxu0 0
      %2119 = vmatpush1.bf16.msra.mxu0 0
      %2120 = vmatprep.subr.bf16.mxu0 0
      %2121 = vmatpush1.bf16.msra.mxu0 0
      %2122 = vmatprep.subr.bf16.mxu0 0
      %2123 = vmatpush1.bf16.msra.mxu0 0
      %2124 = vmatprep.subr.bf16.mxu0 0
      %2125 = vmatpush1.bf16.msra.mxu0 0
      %2126 = vmatprep.subr.bf16.mxu0 0
      %2127 = vmatpush1.bf16.msra.mxu0 0
      %2128 = vmatprep.subr.bf16.mxu0 0
      %2129 = vmatpush1.bf16.msra.mxu0 0
      %2130 = vmatprep.subr.bf16.mxu0 0
      %2131 = vmatpush1.bf16.msra.mxu0 0
      %2132 = vmatprep.subr.bf16.mxu0 0
      %2133 = vmatpush1.bf16.msra.mxu0 %v2074
      %2134 = vmatprep.subr.bf16.mxu0 0
      %2135 = vmatpush2.bf16.msra.mxu0 0
      %2136 = vmatprep.subr.bf16.mxu0 0
      %2137 = vmatpush2.bf16.msra.mxu0 0
      %2138 = vmatprep.subr.bf16.mxu0 0
      %2139 = vmatpush2.bf16.msra.mxu0 0
      %2140 = vmatprep.subr.bf16.mxu0 0
      %2141 = vmatpush2.bf16.msra.mxu0 0
      %2142 = vmatprep.subr.bf16.mxu0 0
      %2143 = vmatpush2.bf16.msra.mxu0 0
      %2144 = vmatprep.subr.bf16.mxu0 0
      %2145 = vmatpush2.bf16.msra.mxu0 0
      %2146 = vmatprep.subr.bf16.mxu0 0
      %2147 = vmatpush2.bf16.msra.mxu0 0
      %2148 = vmatprep.subr.bf16.mxu0 0
      %2149 = vmatpush2.bf16.msra.mxu0 0
      %2150 = vmatprep.mubr.bf16.mxu0 0
      %2151 = vmatmul.mubr.bf16.gmra.mxu0 %v2077
      %v2152 = vpop.f32.mrf.mxu0
      %v2153 = vadd.f32 0.0, %v2152
      %v2154 = vpop.f32.mrf.mxu0
      %v2155 = vpop.f32.mrf.mxu0
      %v2156 = vadd.f32 0.0, %v2155
      %v2157 = vpop.f32.mrf.mxu0
      %2158 = vmatprep.mubr.bf16.mxu0 0
      %2159 = vmatmul.mubr.bf16.gmra.mxu0 %v2080
      %v2160 = vpop.f32.mrf.mxu0
      %v2161 = vadd.f32 0.0, %v2160
      %v2162 = vpop.f32.mrf.mxu0
      %v2163 = vpop.f32.mrf.mxu0
      %v2164 = vadd.f32 0.0, %v2163
      %v2165 = vpop.f32.mrf.mxu0
      %2166 = vmatprep.mubr.bf16.mxu0 0
      %2167 = vmatmul.mubr.bf16.gmra.mxu0 %v2083
      %v2168 = vpop.f32.mrf.mxu0
      %v2169 = vadd.f32 0.0, %v2168
      %v2170 = vpop.f32.mrf.mxu0
      %v2171 = vpop.f32.mrf.mxu0
      %v2172 = vadd.f32 0.0, %v2171
      %v2173 = vpop.f32.mrf.mxu0
      %2174 = vmatprep.mubr.bf16.mxu0 0
      %2175 = vmatmul.mubr.bf16.gmra.mxu0 %v2086
      %v2176 = vpop.f32.mrf.mxu0
      %v2177 = vadd.f32 0.0, %v2176
      %v2178 = vpop.f32.mrf.mxu0
      %v2179 = vpop.f32.mrf.mxu0
      %v2180 = vadd.f32 0.0, %v2179
      %v2181 = vpop.f32.mrf.mxu0
      %2182 = vmatprep.mubr.bf16.mxu0 0
      %2183 = vmatmul.mubr.bf16.gmra.mxu0 %v2089
      %v2184 = vpop.f32.mrf.mxu0
      %v2185 = vadd.f32 0.0, %v2184
      %v2186 = vpop.f32.mrf.mxu0
      %v2187 = vpop.f32.mrf.mxu0
      %v2188 = vadd.f32 0.0, %v2187
      %v2189 = vpop.f32.mrf.mxu0
      %2190 = vmatprep.mubr.bf16.mxu0 0
      %2191 = vmatmul.mubr.bf16.gmra.mxu0 %v2092
      %v2192 = vpop.f32.mrf.mxu0
      %v2193 = vadd.f32 0.0, %v2192
      %v2194 = vpop.f32.mrf.mxu0
      %v2195 = vpop.f32.mrf.mxu0
      %v2196 = vadd.f32 0.0, %v2195
      %v2197 = vpop.f32.mrf.mxu0
      %2198 = vmatprep.mubr.bf16.mxu0 0
      %2199 = vmatmul.mubr.bf16.gmra.mxu0 %v2095
      %v2200 = vpop.f32.mrf.mxu0
      %v2201 = vadd.f32 0.0, %v2200
      %v2202 = vpop.f32.mrf.mxu0
      %v2203 = vpop.f32.mrf.mxu0
      %v2204 = vadd.f32 0.0, %v2203
      %v2205 = vpop.f32.mrf.mxu0
      %2206 = vmatprep.mubr.bf16.mxu0 0
      %2207 = vmatmul.mubr.bf16.gmra.mxu0 %v2098
      %v2208 = vpop.f32.mrf.mxu0
      %v2209 = vadd.f32 0.0, %v2208
      %v2210 = vpop.f32.mrf.mxu0
      %v2211 = vpop.f32.mrf.mxu0
      %v2212 = vadd.f32 0.0, %v2211
      %v2213 = vpop.f32.mrf.mxu0
      %2214 = vmatprep.mubr.bf16.mxu0 0
      %2215 = vmatmul.mubr.bf16.gmra.mxu0 %v2101
      %v2216 = vpop.f32.mrf.mxu0
      %v2217 = vadd.f32 0.0, %v2216
      %v2218 = vpop.f32.mrf.mxu0
      %v2219 = vpop.f32.mrf.mxu0
      %v2220 = vadd.f32 0.0, %v2219
      %v2221 = vpop.f32.mrf.mxu0
      %2222 = vmatprep.mubr.bf16.mxu0 0
      %2223 = vmatmul.mubr.bf16.gmra.mxu0 %v2104
      %v2224 = vpop.f32.mrf.mxu0
      %v2225 = vadd.f32 0.0, %v2224
      %v2226 = vpop.f32.mrf.mxu0
      %v2227 = vpop.f32.mrf.mxu0
      %v2228 = vadd.f32 0.0, %v2227
      %v2229 = vpop.f32.mrf.mxu0
      %2230 = vmatprep.mubr.bf16.mxu0 0
      %2231 = vmatmul.mubr.bf16.gmra.mxu0 %v2107
      %v2232 = vpop.f32.mrf.mxu0
      %v2233 = vadd.f32 0.0, %v2232
      %v2234 = vpop.f32.mrf.mxu0
      %v2235 = vpop.f32.mrf.mxu0
      %v2236 = vadd.f32 0.0, %v2235
      %v2237 = vpop.f32.mrf.mxu0
      %2238 = vmatprep.mubr.bf16.mxu0 0
      %2239 = vmatmul.mubr.bf16.gmra.mxu0 %v2110
      %v2240 = vpop.f32.mrf.mxu0
      %v2241 = vadd.f32 0.0, %v2240
      %v2242 = vpop.f32.mrf.mxu0
      %v2243 = vpop.f32.mrf.mxu0
      %v2244 = vadd.f32 0.0, %v2243
      %v2245 = vpop.f32.mrf.mxu0
      %2246 = vmatprep.mubr.bf16.mxu0 0
      %2247 = vmatmul.mubr.bf16.gmra.mxu0 %v2113
      %v2248 = vpop.f32.mrf.mxu0
      %v2249 = vadd.f32 0.0, %v2248
      %v2250 = vpop.f32.mrf.mxu0
      %v2251 = vpop.f32.mrf.mxu0
      %v2252 = vadd.f32 0.0, %v2251
      %v2253 = vpop.f32.mrf.mxu0
      %2254 = vmatprep.mubr.bf16.mxu0 0
      %2255 = vmatmul.mubr.bf16.gmra.mxu0 %v2116
      %v2256 = vpop.f32.mrf.mxu0
      %v2257 = vadd.f32 0.0, %v2256
      %v2258 = vpop.f32.mrf.mxu0
      %v2259 = vpop.f32.mrf.mxu0
      %v2260 = vadd.f32 0.0, %v2259
      %v2261 = vpop.f32.mrf.mxu0
      %2262 = vdwg.mxu0
      %v2263 = vadd.f32 %v1942, %v2153
      %v2264 = vadd.f32 %v1943, %v2156
      %v2265 = vadd.f32 %v1944, %v2161
      %v2266 = vadd.f32 %v1945, %v2164
      %v2267 = vadd.f32 %v1946, %v2169
      %v2268 = vadd.f32 %v1947, %v2172
      %v2269 = vadd.f32 %v1948, %v2177
      %v2270 = vadd.f32 %v1949, %v2180
      %v2271 = vadd.f32 %v1950, %v2185
      %v2272 = vadd.f32 %v1951, %v2188
      %v2273 = vadd.f32 %v1952, %v2193
      %v2274 = vadd.f32 %v1953, %v2196
      %v2275 = vadd.f32 %v1954, %v2201
      %v2276 = vadd.f32 %v1955, %v2204
      %v2277 = vadd.f32 %v1956, %v2209
      %v2278 = vadd.f32 %v1957, %v2212
      %v2279 = vadd.f32 %v1958, %v2217
      %v2280 = vadd.f32 %v1959, %v2220
      %v2281 = vadd.f32 %v1960, %v2225
      %v2282 = vadd.f32 %v1961, %v2228
      %v2283 = vadd.f32 %v1962, %v2233
      %v2284 = vadd.f32 %v1963, %v2236
      %v2285 = vadd.f32 %v1964, %v2241
      %v2286 = vadd.f32 %v1965, %v2244
      %v2287 = vadd.f32 %v1966, %v2249
      %v2288 = vadd.f32 %v1967, %v2252
      %v2289 = vadd.f32 %v1968, %v2257
      %v2290 = vadd.f32 %v1969, %v2260
      %v2291 = vld [vmem:[%s206 + $0x7c] sm:$0xf]
      %v2292 = vld [vmem:[%s210 + $0x38] sm:$0xf]
      %v2293 = vld [vmem:[%s210 + $0x3c] sm:$0xf]
      %v2295 = vunpack.c.l.b16 %v2291
      %v2296 = vpack.c.b16 %v2295, %v2054
      %v2297 = vshrl.u32 %v2056, 16
      %v2299 = vshll.u32 %v2056, 16
      %v2301 = vrot.slane %v2299, 1
      %v2302 = vor.u32 %v2297, %v2301
      %v2303 = vshll.u32 %v2057, 16
      %v2305 = vrot.slane %v2303, 1
      %v2306 = vsel %vm326, %v2302, %v2305
      %v2307 = vshrl.u32 %v2057, 16
      %v2309 = vor.u32 %v2307, %v2305
      %v2310 = vshll.u32 %v2058, 16
      %v2312 = vrot.slane %v2310, 1
      %v2313 = vsel %vm326, %v2309, %v2312
      %v2314 = vshrl.u32 %v2058, 16
      %v2316 = vor.u32 %v2314, %v2312
      %v2317 = vshll.u32 %v2059, 16
      %v2319 = vrot.slane %v2317, 1
      %v2320 = vsel %vm326, %v2316, %v2319
      %v2321 = vshrl.u32 %v2059, 16
      %v2323 = vor.u32 %v2321, %v2319
      %v2324 = vshll.u32 %v2060, 16
      %v2326 = vrot.slane %v2324, 1
      %v2327 = vsel %vm326, %v2323, %v2326
      %v2328 = vshrl.u32 %v2060, 16
      %v2330 = vor.u32 %v2328, %v2326
      %v2331 = vshll.u32 %v2061, 16
      %v2333 = vrot.slane %v2331, 1
      %v2334 = vsel %vm326, %v2330, %v2333
      %v2335 = vshrl.u32 %v2061, 16
      %v2337 = vor.u32 %v2335, %v2333
      %v2338 = vshll.u32 %v2062, 16
      %v2340 = vrot.slane %v2338, 1
      %v2341 = vsel %vm326, %v2337, %v2340
      %v2342 = vshrl.u32 %v2062, 16
      %v2344 = vor.u32 %v2342, %v2340
      %v2345 = vshll.u32 %v2063, 16
      %v2347 = vrot.slane %v2345, 1
      %v2348 = vsel %vm326, %v2344, %v2347
      %v2349 = vshrl.u32 %v2063, 16
      %v2351 = vor.u32 %v2349, %v2347
      %v2352 = vshll.u32 %v2064, 16
      %v2354 = vrot.slane %v2352, 1
      %v2355 = vsel %vm326, %v2351, %v2354
      %v2356 = vshrl.u32 %v2064, 16
      %v2358 = vor.u32 %v2356, %v2354
      %v2359 = vshll.u32 %v2065, 16
      %v2361 = vrot.slane %v2359, 1
      %v2362 = vsel %vm326, %v2358, %v2361
      %v2363 = vshrl.u32 %v2065, 16
      %v2365 = vor.u32 %v2363, %v2361
      %v2366 = vshll.u32 %v2066, 16
      %v2368 = vrot.slane %v2366, 1
      %v2369 = vsel %vm326, %v2365, %v2368
      %v2370 = vshrl.u32 %v2066, 16
      %v2372 = vor.u32 %v2370, %v2368
      %v2373 = vshll.u32 %v2067, 16
      %v2375 = vrot.slane %v2373, 1
      %v2376 = vsel %vm326, %v2372, %v2375
      %v2377 = vshrl.u32 %v2067, 16
      %v2379 = vor.u32 %v2377, %v2375
      %v2380 = vshll.u32 %v2068, 16
      %v2382 = vrot.slane %v2380, 1
      %v2383 = vsel %vm326, %v2379, %v2382
      %v2384 = vshrl.u32 %v2068, 16
      %v2386 = vor.u32 %v2384, %v2382
      %v2388 = vshll.u32 %v2296, 16
      %v2390 = vrot.slane %v2388, 1
      %v2391 = vsel %vm326, %v2386, %v2390
      %v2392 = vshrl.u32 %v2296, 16
      %v2394 = vor.u32 %v2392, %v2390
      %v2397 = vunpack.c.l.b16 %v2292
      %v2398 = vunpack.c.l.b16 %v2293
      %v2399 = vpack.c.b16 %v2398, %v2397
      %v2402 = vsel %vm444, %v2306, 0
      %v2405 = vsel %vm444, %v2313, 0
      %v2408 = vsel %vm444, %v2320, 0
      %v2411 = vsel %vm444, %v2327, 0
      %v2414 = vsel %vm444, %v2334, 0
      %v2417 = vsel %vm444, %v2341, 0
      %v2420 = vsel %vm444, %v2348, 0
      %v2423 = vsel %vm444, %v2355, 0
      %v2426 = vsel %vm444, %v2362, 0
      %v2429 = vsel %vm444, %v2369, 0
      %v2432 = vsel %vm444, %v2376, 0
      %v2435 = vsel %vm444, %v2383, 0
      %v2438 = vsel %vm444, %v2391, 0
      %v2441 = vsel %vm444, %v2394, 0
      %2443 = vmatprep.subr.bf16.mxu0 0
      %2444 = vmatpush1.bf16.msra.mxu0 0
      %2445 = vmatprep.subr.bf16.mxu0 0
      %2446 = vmatpush1.bf16.msra.mxu0 0
      %2447 = vmatprep.subr.bf16.mxu0 0
      %2448 = vmatpush1.bf16.msra.mxu0 0
      %2449 = vmatprep.subr.bf16.mxu0 0
      %2450 = vmatpush1.bf16.msra.mxu0 0
      %2451 = vmatprep.subr.bf16.mxu0 0
      %2452 = vmatpush1.bf16.msra.mxu0 0
      %2453 = vmatprep.subr.bf16.mxu0 0
      %2454 = vmatpush1.bf16.msra.mxu0 0
      %2455 = vmatprep.subr.bf16.mxu0 0
      %2456 = vmatpush1.bf16.msra.mxu0 0
      %2457 = vmatprep.subr.bf16.mxu0 0
      %2458 = vmatpush1.bf16.msra.mxu0 %v2399
      %2459 = vmatprep.subr.bf16.mxu0 0
      %2460 = vmatpush2.bf16.msra.mxu0 0
      %2461 = vmatprep.subr.bf16.mxu0 0
      %2462 = vmatpush2.bf16.msra.mxu0 0
      %2463 = vmatprep.subr.bf16.mxu0 0
      %2464 = vmatpush2.bf16.msra.mxu0 0
      %2465 = vmatprep.subr.bf16.mxu0 0
      %2466 = vmatpush2.bf16.msra.mxu0 0
      %2467 = vmatprep.subr.bf16.mxu0 0
      %2468 = vmatpush2.bf16.msra.mxu0 0
      %2469 = vmatprep.subr.bf16.mxu0 0
      %2470 = vmatpush2.bf16.msra.mxu0 0
      %2471 = vmatprep.subr.bf16.mxu0 0
      %2472 = vmatpush2.bf16.msra.mxu0 0
      %2473 = vmatprep.subr.bf16.mxu0 0
      %2474 = vmatpush2.bf16.msra.mxu0 0
      %2475 = vmatprep.mubr.bf16.mxu0 0
      %2476 = vmatmul.mubr.bf16.gmra.mxu0 %v2402
      %v2477 = vpop.f32.mrf.mxu0
      %v2478 = vadd.f32 0.0, %v2477
      %v2479 = vpop.f32.mrf.mxu0
      %v2480 = vpop.f32.mrf.mxu0
      %v2481 = vadd.f32 0.0, %v2480
      %v2482 = vpop.f32.mrf.mxu0
      %2483 = vmatprep.mubr.bf16.mxu0 0
      %2484 = vmatmul.mubr.bf16.gmra.mxu0 %v2405
      %v2485 = vpop.f32.mrf.mxu0
      %v2486 = vadd.f32 0.0, %v2485
      %v2487 = vpop.f32.mrf.mxu0
      %v2488 = vpop.f32.mrf.mxu0
      %v2489 = vadd.f32 0.0, %v2488
      %v2490 = vpop.f32.mrf.mxu0
      %2491 = vmatprep.mubr.bf16.mxu0 0
      %2492 = vmatmul.mubr.bf16.gmra.mxu0 %v2408
      %v2493 = vpop.f32.mrf.mxu0
      %v2494 = vadd.f32 0.0, %v2493
      %v2495 = vpop.f32.mrf.mxu0
      %v2496 = vpop.f32.mrf.mxu0
      %v2497 = vadd.f32 0.0, %v2496
      %v2498 = vpop.f32.mrf.mxu0
      %2499 = vmatprep.mubr.bf16.mxu0 0
      %2500 = vmatmul.mubr.bf16.gmra.mxu0 %v2411
      %v2501 = vpop.f32.mrf.mxu0
      %v2502 = vadd.f32 0.0, %v2501
      %v2503 = vpop.f32.mrf.mxu0
      %v2504 = vpop.f32.mrf.mxu0
      %v2505 = vadd.f32 0.0, %v2504
      %v2506 = vpop.f32.mrf.mxu0
      %2507 = vmatprep.mubr.bf16.mxu0 0
      %2508 = vmatmul.mubr.bf16.gmra.mxu0 %v2414
      %v2509 = vpop.f32.mrf.mxu0
      %v2510 = vadd.f32 0.0, %v2509
      %v2511 = vpop.f32.mrf.mxu0
      %v2512 = vpop.f32.mrf.mxu0
      %v2513 = vadd.f32 0.0, %v2512
      %v2514 = vpop.f32.mrf.mxu0
      %2515 = vmatprep.mubr.bf16.mxu0 0
      %2516 = vmatmul.mubr.bf16.gmra.mxu0 %v2417
      %v2517 = vpop.f32.mrf.mxu0
      %v2518 = vadd.f32 0.0, %v2517
      %v2519 = vpop.f32.mrf.mxu0
      %v2520 = vpop.f32.mrf.mxu0
      %v2521 = vadd.f32 0.0, %v2520
      %v2522 = vpop.f32.mrf.mxu0
      %2523 = vmatprep.mubr.bf16.mxu0 0
      %2524 = vmatmul.mubr.bf16.gmra.mxu0 %v2420
      %v2525 = vpop.f32.mrf.mxu0
      %v2526 = vadd.f32 0.0, %v2525
      %v2527 = vpop.f32.mrf.mxu0
      %v2528 = vpop.f32.mrf.mxu0
      %v2529 = vadd.f32 0.0, %v2528
      %v2530 = vpop.f32.mrf.mxu0
      %2531 = vmatprep.mubr.bf16.mxu0 0
      %2532 = vmatmul.mubr.bf16.gmra.mxu0 %v2423
      %v2533 = vpop.f32.mrf.mxu0
      %v2534 = vadd.f32 0.0, %v2533
      %v2535 = vpop.f32.mrf.mxu0
      %v2536 = vpop.f32.mrf.mxu0
      %v2537 = vadd.f32 0.0, %v2536
      %v2538 = vpop.f32.mrf.mxu0
      %2539 = vmatprep.mubr.bf16.mxu0 0
      %2540 = vmatmul.mubr.bf16.gmra.mxu0 %v2426
      %v2541 = vpop.f32.mrf.mxu0
      %v2542 = vadd.f32 0.0, %v2541
      %v2543 = vpop.f32.mrf.mxu0
      %v2544 = vpop.f32.mrf.mxu0
      %v2545 = vadd.f32 0.0, %v2544
      %v2546 = vpop.f32.mrf.mxu0
      %2547 = vmatprep.mubr.bf16.mxu0 0
      %2548 = vmatmul.mubr.bf16.gmra.mxu0 %v2429
      %v2549 = vpop.f32.mrf.mxu0
      %v2550 = vadd.f32 0.0, %v2549
      %v2551 = vpop.f32.mrf.mxu0
      %v2552 = vpop.f32.mrf.mxu0
      %v2553 = vadd.f32 0.0, %v2552
      %v2554 = vpop.f32.mrf.mxu0
      %2555 = vmatprep.mubr.bf16.mxu0 0
      %2556 = vmatmul.mubr.bf16.gmra.mxu0 %v2432
      %v2557 = vpop.f32.mrf.mxu0
      %v2558 = vadd.f32 0.0, %v2557
      %v2559 = vpop.f32.mrf.mxu0
      %v2560 = vpop.f32.mrf.mxu0
      %v2561 = vadd.f32 0.0, %v2560
      %v2562 = vpop.f32.mrf.mxu0
      %2563 = vmatprep.mubr.bf16.mxu0 0
      %2564 = vmatmul.mubr.bf16.gmra.mxu0 %v2435
      %v2565 = vpop.f32.mrf.mxu0
      %v2566 = vadd.f32 0.0, %v2565
      %v2567 = vpop.f32.mrf.mxu0
      %v2568 = vpop.f32.mrf.mxu0
      %v2569 = vadd.f32 0.0, %v2568
      %v2570 = vpop.f32.mrf.mxu0
      %2571 = vmatprep.mubr.bf16.mxu0 0
      %2572 = vmatmul.mubr.bf16.gmra.mxu0 %v2438
      %v2573 = vpop.f32.mrf.mxu0
      %v2574 = vadd.f32 0.0, %v2573
      %v2575 = vpop.f32.mrf.mxu0
      %v2576 = vpop.f32.mrf.mxu0
      %v2577 = vadd.f32 0.0, %v2576
      %v2578 = vpop.f32.mrf.mxu0
      %2579 = vmatprep.mubr.bf16.mxu0 0
      %2580 = vmatmul.mubr.bf16.gmra.mxu0 %v2441
      %v2581 = vpop.f32.mrf.mxu0
      %v2582 = vadd.f32 0.0, %v2581
      %v2583 = vpop.f32.mrf.mxu0
      %v2584 = vpop.f32.mrf.mxu0
      %v2585 = vadd.f32 0.0, %v2584
      %v2586 = vpop.f32.mrf.mxu0
      %2587 = vdwg.mxu0
      %v2588 = vadd.f32 %v2263, %v2478
      %v2589 = vadd.f32 %v2264, %v2481
      %v2590 = vadd.f32 %v2265, %v2486
      %v2591 = vadd.f32 %v2266, %v2489
      %v2592 = vadd.f32 %v2267, %v2494
      %v2593 = vadd.f32 %v2268, %v2497
      %v2594 = vadd.f32 %v2269, %v2502
      %v2595 = vadd.f32 %v2270, %v2505
      %v2596 = vadd.f32 %v2271, %v2510
      %v2597 = vadd.f32 %v2272, %v2513
      %v2598 = vadd.f32 %v2273, %v2518
      %v2599 = vadd.f32 %v2274, %v2521
      %v2600 = vadd.f32 %v2275, %v2526
      %v2601 = vadd.f32 %v2276, %v2529
      %v2602 = vadd.f32 %v2277, %v2534
      %v2603 = vadd.f32 %v2278, %v2537
      %v2604 = vadd.f32 %v2279, %v2542
      %v2605 = vadd.f32 %v2280, %v2545
      %v2606 = vadd.f32 %v2281, %v2550
      %v2607 = vadd.f32 %v2282, %v2553
      %v2608 = vadd.f32 %v2283, %v2558
      %v2609 = vadd.f32 %v2284, %v2561
      %v2610 = vadd.f32 %v2285, %v2566
      %v2611 = vadd.f32 %v2286, %v2569
      %v2612 = vadd.f32 %v2287, %v2574
      %v2613 = vadd.f32 %v2288, %v2577
      %v2614 = vadd.f32 %v2289, %v2582
      %v2615 = vadd.f32 %v2290, %v2585
      %v2616 = vld [vmem:[%s206 + $0x10] sm:$0xe]
      %v2617 = vld [vmem:[%s210 + $0x40] sm:$0xf]
      %v2618 = vld [vmem:[%s210 + $0x44] sm:$0xf]
      %v2620 = vunpack.c.l.b16 %v2616
      %v2621 = vpack.c.b16 %v2029, %v2620
      %v2622 = vrot.slane %v2621, 1
      %v2623 = vrot.slane %v2057, 1
      %v2624 = vsel %vm821, %v2622, %v2623
      %v2625 = vrot.slane %v2058, 1
      %v2626 = vsel %vm821, %v2623, %v2625
      %v2627 = vrot.slane %v2059, 1
      %v2628 = vsel %vm821, %v2625, %v2627
      %v2629 = vrot.slane %v2060, 1
      %v2630 = vsel %vm821, %v2627, %v2629
      %v2631 = vrot.slane %v2061, 1
      %v2632 = vsel %vm821, %v2629, %v2631
      %v2633 = vrot.slane %v2062, 1
      %v2634 = vsel %vm821, %v2631, %v2633
      %v2635 = vrot.slane %v2063, 1
      %v2636 = vsel %vm821, %v2633, %v2635
      %v2637 = vrot.slane %v2064, 1
      %v2638 = vsel %vm821, %v2635, %v2637
      %v2639 = vrot.slane %v2065, 1
      %v2640 = vsel %vm821, %v2637, %v2639
      %v2641 = vrot.slane %v2066, 1
      %v2642 = vsel %vm821, %v2639, %v2641
      %v2643 = vrot.slane %v2067, 1
      %v2644 = vsel %vm821, %v2641, %v2643
      %v2645 = vrot.slane %v2068, 1
      %v2646 = vsel %vm821, %v2643, %v2645
      %v2647 = vrot.slane %v2296, 1
      %v2648 = vsel %vm821, %v2645, %v2647
      %v2651 = vunpack.c.l.b16 %v2617
      %v2652 = vunpack.c.l.b16 %v2618
      %v2653 = vpack.c.b16 %v2652, %v2651
      %v2656 = vsel %vm444, %v2624, 0
      %v2659 = vsel %vm444, %v2626, 0
      %v2662 = vsel %vm444, %v2628, 0
      %v2665 = vsel %vm444, %v2630, 0
      %v2668 = vsel %vm444, %v2632, 0
      %v2671 = vsel %vm444, %v2634, 0
      %v2674 = vsel %vm444, %v2636, 0
      %v2677 = vsel %vm444, %v2638, 0
      %v2680 = vsel %vm444, %v2640, 0
      %v2683 = vsel %vm444, %v2642, 0
      %v2686 = vsel %vm444, %v2644, 0
      %v2689 = vsel %vm444, %v2646, 0
      %v2692 = vsel %vm444, %v2648, 0
      %v2695 = vsel %vm444, %v2647, 0
      %2697 = vmatprep.subr.bf16.mxu0 0
      %2698 = vmatpush1.bf16.msra.mxu0 0
      %2699 = vmatprep.subr.bf16.mxu0 0
      %2700 = vmatpush1.bf16.msra.mxu0 0
      %2701 = vmatprep.subr.bf16.mxu0 0
      %2702 = vmatpush1.bf16.msra.mxu0 0
      %2703 = vmatprep.subr.bf16.mxu0 0
      %2704 = vmatpush1.bf16.msra.mxu0 0
      %2705 = vmatprep.subr.bf16.mxu0 0
      %2706 = vmatpush1.bf16.msra.mxu0 0
      %2707 = vmatprep.subr.bf16.mxu0 0
      %2708 = vmatpush1.bf16.msra.mxu0 0
      %2709 = vmatprep.subr.bf16.mxu0 0
      %2710 = vmatpush1.bf16.msra.mxu0 0
      %2711 = vmatprep.subr.bf16.mxu0 0
      %2712 = vmatpush1.bf16.msra.mxu0 %v2653
      %2713 = vmatprep.subr.bf16.mxu0 0
      %2714 = vmatpush2.bf16.msra.mxu0 0
      %2715 = vmatprep.subr.bf16.mxu0 0
      %2716 = vmatpush2.bf16.msra.mxu0 0
      %2717 = vmatprep.subr.bf16.mxu0 0
      %2718 = vmatpush2.bf16.msra.mxu0 0
      %2719 = vmatprep.subr.bf16.mxu0 0
      %2720 = vmatpush2.bf16.msra.mxu0 0
      %2721 = vmatprep.subr.bf16.mxu0 0
      %2722 = vmatpush2.bf16.msra.mxu0 0
      %2723 = vmatprep.subr.bf16.mxu0 0
      %2724 = vmatpush2.bf16.msra.mxu0 0
      %2725 = vmatprep.subr.bf16.mxu0 0
      %2726 = vmatpush2.bf16.msra.mxu0 0
      %2727 = vmatprep.subr.bf16.mxu0 0
      %2728 = vmatpush2.bf16.msra.mxu0 0
      %2729 = vmatprep.mubr.bf16.mxu0 0
      %2730 = vmatmul.mubr.bf16.gmra.mxu0 %v2656
      %v2731 = vpop.f32.mrf.mxu0
      %v2732 = vadd.f32 0.0, %v2731
      %v2733 = vpop.f32.mrf.mxu0
      %v2734 = vpop.f32.mrf.mxu0
      %v2735 = vadd.f32 0.0, %v2734
      %v2736 = vpop.f32.mrf.mxu0
      %2737 = vmatprep.mubr.bf16.mxu0 0
      %2738 = vmatmul.mubr.bf16.gmra.mxu0 %v2659
      %v2739 = vpop.f32.mrf.mxu0
      %v2740 = vadd.f32 0.0, %v2739
      %v2741 = vpop.f32.mrf.mxu0
      %v2742 = vpop.f32.mrf.mxu0
      %v2743 = vadd.f32 0.0, %v2742
      %v2744 = vpop.f32.mrf.mxu0
      %2745 = vmatprep.mubr.bf16.mxu0 0
      %2746 = vmatmul.mubr.bf16.gmra.mxu0 %v2662
      %v2747 = vpop.f32.mrf.mxu0
      %v2748 = vadd.f32 0.0, %v2747
      %v2749 = vpop.f32.mrf.mxu0
      %v2750 = vpop.f32.mrf.mxu0
      %v2751 = vadd.f32 0.0, %v2750
      %v2752 = vpop.f32.mrf.mxu0
      %2753 = vmatprep.mubr.bf16.mxu0 0
      %2754 = vmatmul.mubr.bf16.gmra.mxu0 %v2665
      %v2755 = vpop.f32.mrf.mxu0
      %v2756 = vadd.f32 0.0, %v2755
      %v2757 = vpop.f32.mrf.mxu0
      %v2758 = vpop.f32.mrf.mxu0
      %v2759 = vadd.f32 0.0, %v2758
      %v2760 = vpop.f32.mrf.mxu0
      %2761 = vmatprep.mubr.bf16.mxu0 0
      %2762 = vmatmul.mubr.bf16.gmra.mxu0 %v2668
      %v2763 = vpop.f32.mrf.mxu0
      %v2764 = vadd.f32 0.0, %v2763
      %v2765 = vpop.f32.mrf.mxu0
      %v2766 = vpop.f32.mrf.mxu0
      %v2767 = vadd.f32 0.0, %v2766
      %v2768 = vpop.f32.mrf.mxu0
      %2769 = vmatprep.mubr.bf16.mxu0 0
      %2770 = vmatmul.mubr.bf16.gmra.mxu0 %v2671
      %v2771 = vpop.f32.mrf.mxu0
      %v2772 = vadd.f32 0.0, %v2771
      %v2773 = vpop.f32.mrf.mxu0
      %v2774 = vpop.f32.mrf.mxu0
      %v2775 = vadd.f32 0.0, %v2774
      %v2776 = vpop.f32.mrf.mxu0
      %2777 = vmatprep.mubr.bf16.mxu0 0
      %2778 = vmatmul.mubr.bf16.gmra.mxu0 %v2674
      %v2779 = vpop.f32.mrf.mxu0
      %v2780 = vadd.f32 0.0, %v2779
      %v2781 = vpop.f32.mrf.mxu0
      %v2782 = vpop.f32.mrf.mxu0
      %v2783 = vadd.f32 0.0, %v2782
      %v2784 = vpop.f32.mrf.mxu0
      %2785 = vmatprep.mubr.bf16.mxu0 0
      %2786 = vmatmul.mubr.bf16.gmra.mxu0 %v2677
      %v2787 = vpop.f32.mrf.mxu0
      %v2788 = vadd.f32 0.0, %v2787
      %v2789 = vpop.f32.mrf.mxu0
      %v2790 = vpop.f32.mrf.mxu0
      %v2791 = vadd.f32 0.0, %v2790
      %v2792 = vpop.f32.mrf.mxu0
      %2793 = vmatprep.mubr.bf16.mxu0 0
      %2794 = vmatmul.mubr.bf16.gmra.mxu0 %v2680
      %v2795 = vpop.f32.mrf.mxu0
      %v2796 = vadd.f32 0.0, %v2795
      %v2797 = vpop.f32.mrf.mxu0
      %v2798 = vpop.f32.mrf.mxu0
      %v2799 = vadd.f32 0.0, %v2798
      %v2800 = vpop.f32.mrf.mxu0
      %2801 = vmatprep.mubr.bf16.mxu0 0
      %2802 = vmatmul.mubr.bf16.gmra.mxu0 %v2683
      %v2803 = vpop.f32.mrf.mxu0
      %v2804 = vadd.f32 0.0, %v2803
      %v2805 = vpop.f32.mrf.mxu0
      %v2806 = vpop.f32.mrf.mxu0
      %v2807 = vadd.f32 0.0, %v2806
      %v2808 = vpop.f32.mrf.mxu0
      %2809 = vmatprep.mubr.bf16.mxu0 0
      %2810 = vmatmul.mubr.bf16.gmra.mxu0 %v2686
      %v2811 = vpop.f32.mrf.mxu0
      %v2812 = vadd.f32 0.0, %v2811
      %v2813 = vpop.f32.mrf.mxu0
      %v2814 = vpop.f32.mrf.mxu0
      %v2815 = vadd.f32 0.0, %v2814
      %v2816 = vpop.f32.mrf.mxu0
      %2817 = vmatprep.mubr.bf16.mxu0 0
      %2818 = vmatmul.mubr.bf16.gmra.mxu0 %v2689
      %v2819 = vpop.f32.mrf.mxu0
      %v2820 = vadd.f32 0.0, %v2819
      %v2821 = vpop.f32.mrf.mxu0
      %v2822 = vpop.f32.mrf.mxu0
      %v2823 = vadd.f32 0.0, %v2822
      %v2824 = vpop.f32.mrf.mxu0
      %2825 = vmatprep.mubr.bf16.mxu0 0
      %2826 = vmatmul.mubr.bf16.gmra.mxu0 %v2692
      %v2827 = vpop.f32.mrf.mxu0
      %v2828 = vadd.f32 0.0, %v2827
      %v2829 = vpop.f32.mrf.mxu0
      %v2830 = vpop.f32.mrf.mxu0
      %v2831 = vadd.f32 0.0, %v2830
      %v2832 = vpop.f32.mrf.mxu0
      %2833 = vmatprep.mubr.bf16.mxu0 0
      %2834 = vmatmul.mubr.bf16.gmra.mxu0 %v2695
      %v2835 = vpop.f32.mrf.mxu0
      %v2836 = vadd.f32 0.0, %v2835
      %v2837 = vpop.f32.mrf.mxu0
      %v2838 = vpop.f32.mrf.mxu0
      %v2839 = vadd.f32 0.0, %v2838
      %v2840 = vpop.f32.mrf.mxu0
      %2841 = vdwg.mxu0
      %v2842 = vadd.f32 %v2588, %v2732
      %v2843 = vadd.f32 %v2589, %v2735
      %v2844 = vadd.f32 %v2590, %v2740
      %v2845 = vadd.f32 %v2591, %v2743
      %v2846 = vadd.f32 %v2592, %v2748
      %v2847 = vadd.f32 %v2593, %v2751
      %v2848 = vadd.f32 %v2594, %v2756
      %v2849 = vadd.f32 %v2595, %v2759
      %v2850 = vadd.f32 %v2596, %v2764
      %v2851 = vadd.f32 %v2597, %v2767
      %v2852 = vadd.f32 %v2598, %v2772
      %v2853 = vadd.f32 %v2599, %v2775
      %v2854 = vadd.f32 %v2600, %v2780
      %v2855 = vadd.f32 %v2601, %v2783
      %v2856 = vadd.f32 %v2602, %v2788
      %v2857 = vadd.f32 %v2603, %v2791
      %v2858 = vadd.f32 %v2604, %v2796
      %v2859 = vadd.f32 %v2605, %v2799
      %v2860 = vadd.f32 %v2606, %v2804
      %v2861 = vadd.f32 %v2607, %v2807
      %v2862 = vadd.f32 %v2608, %v2812
      %v2863 = vadd.f32 %v2609, %v2815
      %v2864 = vadd.f32 %v2610, %v2820
      %v2865 = vadd.f32 %v2611, %v2823
      %v2866 = vadd.f32 %v2612, %v2828
      %v2867 = vadd.f32 %v2613, %v2831
      %v2868 = vadd.f32 %v2614, %v2836
      %v2869 = vadd.f32 %v2615, %v2839
      %v2870 = vld [vmem:[%s213] sm:$0x1]
      %v2872 = vlaneseq
      %v2873 = vshrl.u32 %v2872, 7
      %v2874 = vsub.s32 0, %v2873
      %v2875 = vrot.slane %v2870, %v2874
      %v2877 = vadd.f32 %v2842, %v2875
      %v2878 = vadd.f32 %v2843, %v2875
      %v2879 = vadd.f32 %v2844, %v2875
      %v2880 = vadd.f32 %v2845, %v2875
      %v2881 = vadd.f32 %v2846, %v2875
      %v2882 = vadd.f32 %v2847, %v2875
      %v2883 = vadd.f32 %v2848, %v2875
      %v2884 = vadd.f32 %v2849, %v2875
      %v2885 = vadd.f32 %v2850, %v2875
      %v2886 = vadd.f32 %v2851, %v2875
      %v2887 = vadd.f32 %v2852, %v2875
      %v2888 = vadd.f32 %v2853, %v2875
      %v2889 = vadd.f32 %v2854, %v2875
      %v2890 = vadd.f32 %v2855, %v2875
      %v2891 = vadd.f32 %v2856, %v2875
      %v2892 = vadd.f32 %v2857, %v2875
      %v2893 = vadd.f32 %v2858, %v2875
      %v2894 = vadd.f32 %v2859, %v2875
      %v2895 = vadd.f32 %v2860, %v2875
      %v2896 = vadd.f32 %v2861, %v2875
      %v2897 = vadd.f32 %v2862, %v2875
      %v2898 = vadd.f32 %v2863, %v2875
      %v2899 = vadd.f32 %v2864, %v2875
      %v2900 = vadd.f32 %v2865, %v2875
      %v2901 = vadd.f32 %v2866, %v2875
      %v2902 = vadd.f32 %v2867, %v2875
      %v2903 = vadd.f32 %v2868, %v2875
      %v2904 = vadd.f32 %v2869, %v2875
      %v2905 = vmax.f32 %v2877, 0.0
      %v2906 = vmax.f32 %v2878, 0.0
      %v2907 = vmax.f32 %v2879, 0.0
      %v2908 = vmax.f32 %v2880, 0.0
      %v2909 = vmax.f32 %v2881, 0.0
      %v2910 = vmax.f32 %v2882, 0.0
      %v2911 = vmax.f32 %v2883, 0.0
      %v2912 = vmax.f32 %v2884, 0.0
      %v2913 = vmax.f32 %v2885, 0.0
      %v2914 = vmax.f32 %v2886, 0.0
      %v2915 = vmax.f32 %v2887, 0.0
      %v2916 = vmax.f32 %v2888, 0.0
      %v2917 = vmax.f32 %v2889, 0.0
      %v2918 = vmax.f32 %v2890, 0.0
      %v2919 = vmax.f32 %v2891, 0.0
      %v2920 = vmax.f32 %v2892, 0.0
      %v2921 = vmax.f32 %v2893, 0.0
      %v2922 = vmax.f32 %v2894, 0.0
      %v2923 = vmax.f32 %v2895, 0.0
      %v2924 = vmax.f32 %v2896, 0.0
      %v2925 = vmax.f32 %v2897, 0.0
      %v2926 = vmax.f32 %v2898, 0.0
      %v2927 = vmax.f32 %v2899, 0.0
      %v2928 = vmax.f32 %v2900, 0.0
      %v2929 = vmax.f32 %v2901, 0.0
      %v2930 = vmax.f32 %v2902, 0.0
      %v2931 = vmax.f32 %v2903, 0.0
      %v2932 = vmax.f32 %v2904, 0.0
      %v2933 = vpack.c.bf16 %v2906, %v2905
      %v2934 = vpack.c.bf16 %v2908, %v2907
      %v2935 = vpack.c.bf16 %v2910, %v2909
      %v2936 = vpack.c.bf16 %v2912, %v2911
      %v2937 = vpack.c.bf16 %v2914, %v2913
      %v2938 = vpack.c.bf16 %v2916, %v2915
      %v2939 = vpack.c.bf16 %v2918, %v2917
      %v2940 = vpack.c.bf16 %v2920, %v2919
      %v2941 = vpack.c.bf16 %v2922, %v2921
      %v2942 = vpack.c.bf16 %v2924, %v2923
      %v2943 = vpack.c.bf16 %v2926, %v2925
      %v2944 = vpack.c.bf16 %v2928, %v2927
      %v2945 = vpack.c.bf16 %v2930, %v2929
      %v2946 = vpack.c.bf16 %v2932, %v2931
      %v2961 = vunpack.c.l.b16 %v2933
      %v2962 = vunpack.c.h.b16 %v2933
      %v2963 = vunpack.c.l.b16 %v2934
      %v2964 = vunpack.c.h.b16 %v2934
      %v2965 = vunpack.c.l.b16 %v2935
      %v2966 = vunpack.c.h.b16 %v2935
      %v2967 = vunpack.c.l.b16 %v2936
      %v2968 = vunpack.c.h.b16 %v2936
      %v2969 = vunpack.c.l.b16 %v2937
      %v2970 = vunpack.c.h.b16 %v2937
      %v2971 = vunpack.c.l.b16 %v2938
      %v2972 = vunpack.c.h.b16 %v2938
      %v2973 = vunpack.c.l.b16 %v2939
      %v2974 = vunpack.c.h.b16 %v2939
      %v2975 = vunpack.c.l.b16 %v2940
      %v2976 = vunpack.c.h.b16 %v2940
      %v2977 = vunpack.c.l.b16 %v2941
      %v2978 = vunpack.c.h.b16 %v2941
      %v2979 = vunpack.c.l.b16 %v2942
      %v2980 = vunpack.c.h.b16 %v2942
      %v2981 = vunpack.c.l.b16 %v2943
      %v2982 = vunpack.c.h.b16 %v2943
      %v2983 = vunpack.c.l.b16 %v2944
      %v2984 = vunpack.c.h.b16 %v2944
      %v2985 = vunpack.c.l.b16 %v2945
      %v2986 = vunpack.c.h.b16 %v2945
      %v2987 = vunpack.c.l.b16 %v2946
      %v2988 = vunpack.c.h.b16 %v2946
      %v2989 = vpack.c.b16 %v2961, %v2961
      %v2990 = vpack.c.b16 %v2962, %v2962
      %v2991 = vpack.c.b16 %v2963, %v2963
      %v2992 = vpack.c.b16 %v2964, %v2964
      %v2993 = vpack.c.b16 %v2965, %v2965
      %v2994 = vpack.c.b16 %v2966, %v2966
      %v2995 = vpack.c.b16 %v2967, %v2967
      %v2996 = vpack.c.b16 %v2968, %v2968
      %v2997 = vpack.c.b16 %v2969, %v2969
      %v2998 = vpack.c.b16 %v2970, %v2970
      %v2999 = vpack.c.b16 %v2971, %v2971
      %v3000 = vpack.c.b16 %v2972, %v2972
      %v3001 = vpack.c.b16 %v2973, %v2973
      %v3002 = vpack.c.b16 %v2974, %v2974
      %v3003 = vpack.c.b16 %v2975, %v2975
      %v3004 = vpack.c.b16 %v2976, %v2976
      %v3005 = vpack.c.b16 %v2977, %v2977
      %v3006 = vpack.c.b16 %v2978, %v2978
      %v3007 = vpack.c.b16 %v2979, %v2979
      %v3008 = vpack.c.b16 %v2980, %v2980
      %v3009 = vpack.c.b16 %v2981, %v2981
      %v3010 = vpack.c.b16 %v2982, %v2982
      %v3011 = vpack.c.b16 %v2983, %v2983
      %v3012 = vpack.c.b16 %v2984, %v2984
      %v3013 = vpack.c.b16 %v2985, %v2985
      %v3014 = vpack.c.b16 %v2986, %v2986
      %v3015 = vpack.c.b16 %v2987, %v2987
      %v3016 = vpack.c.b16 %v2988, %v2988
      %vm3045 = vcmask 125952
      %3046 = vst.msk [vmem:[%s221] sm:$0xf] %vm3045, %v2989
      %3047 = vst.msk [vmem:[%s221 + $0x4] sm:$0xf] %vm3045, %v2990
      %3048 = vst.msk [vmem:[%s221 + $0x8] sm:$0xf] %vm3045, %v2991
      %3049 = vst.msk [vmem:[%s221 + $0xc] sm:$0xf] %vm3045, %v2992
      %3050 = vst.msk [vmem:[%s221 + $0x10] sm:$0xf] %vm3045, %v2993
      %3051 = vst.msk [vmem:[%s221 + $0x14] sm:$0xf] %vm3045, %v2994
      %3052 = vst.msk [vmem:[%s221 + $0x18] sm:$0xf] %vm3045, %v2995
      %3053 = vst.msk [vmem:[%s221 + $0x1c] sm:$0xf] %vm3045, %v2996
      %3054 = vst.msk [vmem:[%s221 + $0x20] sm:$0xf] %vm3045, %v2997
      %3055 = vst.msk [vmem:[%s221 + $0x24] sm:$0xf] %vm3045, %v2998
      %3056 = vst.msk [vmem:[%s221 + $0x28] sm:$0xf] %vm3045, %v2999
      %3057 = vst.msk [vmem:[%s221 + $0x2c] sm:$0xf] %vm3045, %v3000
      %3058 = vst.msk [vmem:[%s221 + $0x30] sm:$0xf] %vm3045, %v3001
      %3059 = vst.msk [vmem:[%s221 + $0x34] sm:$0xf] %vm3045, %v3002
      %3060 = vst.msk [vmem:[%s221 + $0x38] sm:$0xf] %vm3045, %v3003
      %3061 = vst.msk [vmem:[%s221 + $0x3c] sm:$0xf] %vm3045, %v3004
      %3062 = vst.msk [vmem:[%s221 + $0x40] sm:$0xf] %vm3045, %v3005
      %3063 = vst.msk [vmem:[%s221 + $0x44] sm:$0xf] %vm3045, %v3006
      %3064 = vst.msk [vmem:[%s221 + $0x48] sm:$0xf] %vm3045, %v3007
      %3065 = vst.msk [vmem:[%s221 + $0x4c] sm:$0xf] %vm3045, %v3008
      %3066 = vst.msk [vmem:[%s221 + $0x50] sm:$0xf] %vm3045, %v3009
      %3067 = vst.msk [vmem:[%s221 + $0x54] sm:$0xf] %vm3045, %v3010
      %3068 = vst.msk [vmem:[%s221 + $0x58] sm:$0xf] %vm3045, %v3011
      %3069 = vst.msk [vmem:[%s221 + $0x5c] sm:$0xf] %vm3045, %v3012
      %3070 = vst.msk [vmem:[%s221 + $0x60] sm:$0xf] %vm3045, %v3013
      %3071 = vst.msk [vmem:[%s221 + $0x64] sm:$0xf] %vm3045, %v3014
      %3072 = vst.msk [vmem:[%s221 + $0x68] sm:$0xf] %vm3045, %v3015
      %vm3073 = vcmask 124928
      %3074 = vst.msk [vmem:[%s221 + $0x6c] sm:$0x7] %vm3073, %v3016
      %vm3075 = vcmask 125955
      %3076 = vst.msk [vmem:[%s221 + $0x6c] sm:$0x8] %vm3075, 0
      %3077 = vst.msk [vmem:[%s221 + $0x70] sm:$0xf] %vm3045, 0
      %3078 = vst.msk [vmem:[%s221 + $0x74] sm:$0xf] %vm3045, 0
      %3079 = vst.msk [vmem:[%s221 + $0x78] sm:$0xf] %vm3045, 0
      %3080 = vst.msk [vmem:[%s221 + $0x7c] sm:$0xf] %vm3045, 0
      %p3081 = scmp.lt.s32.totalorder %s18, 1
      %s3082 = scalar_select %p3081, %s18, 1
      %p3083 = scmp.lt.s32.totalorder %s19, 0
      %s3084 = scalar_select %p3083, %s19, 0
      %s3085 = smul.addr %s3082, 32
      %s3086 = sadd.s32 %s3084, %s3085
      %s3087 = smul.addr %s3086, 4
      %s3088 = scalar_lea.vmem %s3, %s3087
      // Predicated region
      $region33: #{encoder_block_fwd.3} parent=31 // pred_check
        %p3089 = pneg %p124
      $region34: #{encoder_block_fwd.3} parent=31 // pred_check_branch
        %3091 = sbr.rel (%p3089) target = $region36
      $region35: #{encoder_block_fwd.3} parent=31 // pred_region
        _
      $region36: #{encoder_block_fwd.3} parent=31 // pred_fallthru
        _
    $region32: #{encoder_block_fwd.3} parent=5 // pred_fallthru
      _
    %p3092 = scmp.le.s32.totalorder 2, %s9
    // Predicated region
    $region37: #{encoder_block_fwd.3} parent=5 // pred_check
      %p3093 = pneg %p3092
    $region38: #{encoder_block_fwd.3} parent=5 // pred_check_branch
      %3095 = sbr.rel (%p3093) target = $region40
    $region39: #{encoder_block_fwd.3} parent=5 // pred_region
      %s3096 = ssub.s32 %s9, 2
      // Predicated region
      $region41: #{encoder_block_fwd.3} parent=39 // pred_check
        %p3097 = pneg %p130
      $region42: #{encoder_block_fwd.3} parent=39 // pred_check_branch
        %3099 = sbr.rel (%p3097) target = $region44
      $region43: #{encoder_block_fwd.3} parent=39 // pred_region
        %p3100 = scmp.lt.s32.totalorder %s20, 1
        %s3101 = scalar_select %p3100, %s20, 1
        %p3102 = scmp.lt.s32.totalorder %s21, 0
        %s3103 = scalar_select %p3102, %s21, 0
        %s3104 = smul.addr %s3101, 32
        %s3105 = sadd.s32 %s3103, %s3104
        %s3106 = smul.addr %s3105, 4
        %s3107 = scalar_lea.vmem %s3, %s3106
      $region44: #{encoder_block_fwd.3} parent=39 // pred_fallthru
        _
    $region40: #{encoder_block_fwd.3} parent=5 // pred_fallthru
      _
  $region6: #{encoder_block_fwd.3} parent=0 // loop_footer
    %s13 = sadd.s32 1, %s9
  $region7: #{encoder_block_fwd.3} parent=0 // loop_footer_branch
    %8 = sbr.rel target = $region3
  $region8: #{encoder_block_fwd.3} parent=0 // loop_exit
    _

</llo_original>
